<compile_context>
chip_gen: v6e
topology: v6e:2x2x1
jax: 0.10.0
libtpu: 0.0.40
codegen_flags: <defaults>
</compile_context>

<pallas_src>
import functools
import numpy as np
import jax
import jax.numpy as jnp
from jax.experimental import pallas as pl
from jax.experimental.pallas import tpu as pltpu

POOL_K, POOL_S = 5, 3
NC_PAD = 128  # lane-dense padded class dimension


def build_pool_onehot(H, W, k, s):
    """P[hw, s] = 1.0 if pixel hw is inside pooling window s (VALID, stride s)."""
    OH = (H - k) // s + 1
    OW = (W - k) // s + 1
    P = np.zeros((H * W, OH * OW), dtype=np.float32)
    for oi in range(OH):
        for oj in range(OW):
            o = oi * OW + oj
            for di in range(k):
                for dj in range(k):
                    P[(oi * s + di) * W + (oj * s + dj), o] = 1.0
    return P, OH, OW


def prepare_params(params, num_classes, H, W):
    """One-time packing of weights into kernel-friendly layouts (NOT per call)."""
    assert num_classes <= NC_PAD
    pool_np, OH, OW = build_pool_onehot(H, W, POOL_K, POOL_S)
    S = OH * OW

    conv_w = jnp.asarray(params["conv_w"], jnp.float32)               # (128, C)
    OC, C = conv_w.shape
    conv_wT = jnp.transpose(conv_w)                                    # (C, 128)
    conv_b = jnp.asarray(params["conv_b"], jnp.float32).reshape(1, OC)

    fc1_w = jnp.asarray(params["fc1_w"], jnp.float32)                  # (1024, 2048)
    D_H, D_IN = fc1_w.shape
    assert D_IN == OC * S, "pooled spatial size must match fc1 input (2048)"
    # PyTorch flatten index is oc*S + s; the kernel produces the activation with
    # column index s*OC + oc, so permute the fc1 input dim once here (and transpose
    # so the kernel does a plain (N, 2048) @ (2048, tile) matmul).
    w1p = jnp.transpose(fc1_w.reshape(D_H, OC, S), (2, 1, 0)).reshape(S * OC, D_H)
    w1p = w1p.astype(jnp.bfloat16)                                     # (2048, 1024)
    b1 = jnp.asarray(params["fc1_b"], jnp.float32).reshape(1, D_H)

    fc2_w = jnp.asarray(params["fc2_w"], jnp.float32)                  # (ncls, 1024)
    w2p = jnp.zeros((D_H, NC_PAD), jnp.float32).at[:, :num_classes].set(jnp.transpose(fc2_w))
    w2p = w2p.astype(jnp.bfloat16)                                     # (1024, 128)
    b2 = jnp.zeros((1, NC_PAD), jnp.float32).at[:, :num_classes].set(
        jnp.asarray(params["fc2_b"], jnp.float32))

    return {
        "pool": jnp.asarray(pool_np),   # (H*W, S) 0/1 f32 (exact; 1/25 applied in f32 in-kernel)
        "conv_wT": conv_wT,             # (C, 128) f32
        "conv_b": conv_b,               # (1, 128) f32
        "w1p": w1p,                     # (2048, 1024) bf16, input dim permuted
        "b1": b1,                       # (1, 1024) f32
        "w2p": w2p,                     # (1024, 128) bf16, class dim padded
        "b2": b2,                       # (1, 128) f32, padded
    }


def _fused_kernel(N, C, S, OC, pool_inv,
                  x_ref, pool_ref, cwT_ref, cb_ref, w1_ref, b1_ref, w2_ref, b2_ref,
                  out_ref, act_ref):
    # x_ref:   (N*C, HW)      f32   input, resident
    # pool_ref:(HW, S)        f32   0/1 pooling matrix, resident
    # cwT_ref: (C, 128)       f32   1x1-conv weight (transposed), resident
    # cb_ref:  (1, 128)       f32   conv bias, resident
    # w1_ref:  (2048, TILE)   bf16  fc1 weight tile (permuted input dim), streamed
    # b1_ref:  (1, TILE)      f32   fc1 bias tile
    # w2_ref:  (TILE, 128)    bf16  fc2 weight tile (rows matching this fc1 tile)
    # b2_ref:  (1, 128)       f32   fc2 bias (padded), resident
    # out_ref: (N, 128)       f32   resident accumulator (written back once at end)
    # act_ref: (N, 2048)      bf16  VMEM scratch, persists across grid steps
    j = pl.program_id(0)

    @pl.when(j == 0)
    def _():
        # avg-pool as one exact 0/1 matmul + f32 scale: (N*C, HW) @ (HW, S)
        pooled = jnp.dot(x_ref[...], pool_ref[...],
                         preferred_element_type=jnp.float32) * pool_inv   # (N*C, S)
        pooledT = jnp.transpose(pooled)                                   # (S, N*C)
        for n in range(N):                      # static, N is tiny
            pcT = pooledT[:, n * C:(n + 1) * C]                           # (S, C)
            zn = jnp.dot(pcT, cwT_ref[...],
                         preferred_element_type=jnp.float32)              # (S, 128)
            zn = jnp.maximum(zn + cb_ref[...], 0.0).astype(act_ref.dtype)
            for s in range(S):                  # static, 128-lane-aligned stores
                act_ref[n:n + 1, s * OC:(s + 1) * OC] = zn[s:s + 1, :]
        # initialize the fc2 accumulator (output block stays resident) with the bias
        out_ref[...] = jnp.broadcast_to(b2_ref[...], out_ref.shape)

    # fc1 tile + ReLU, immediately reduced through fc2 into the resident output.
    h = jnp.dot(act_ref[...], w1_ref[...], preferred_element_type=jnp.float32)
    h = jnp.maximum(h + b1_ref[...], 0.0)
    out_ref[...] += jnp.dot(h.astype(w2_ref.dtype), w2_ref[...],
                            preferred_element_type=jnp.float32)


@functools.partial(jax.jit, static_argnames=("num_classes", "fc1_tile"))
def inception_aux_forward(x_nchw, prepped, *, num_classes, fc1_tile=512):
    N, C, H, W = x_nchw.shape
    HW = H * W
    pool = prepped["pool"]
    assert pool.shape[0] == HW
    S = pool.shape[1]
    OC = prepped["conv_wT"].shape[1]
    D_IN, D_H = prepped["w1p"].shape
    assert D_IN == OC * S
    assert D_H % fc1_tile == 0
    n_tiles = D_H // fc1_tile

    x2d = x_nchw.reshape(N * C, HW).astype(jnp.float32)   # contiguous reshape only

    kernel = functools.partial(_fused_kernel, N, C, S, OC, 1.0 / (POOL_K * POOL_K))

    out_pad = pl.pallas_call(
        kernel,
        out_shape=jax.ShapeDtypeStruct((N, NC_PAD), jnp.float32),
        grid=(n_tiles,),
        in_specs=[
            pl.BlockSpec((N * C, HW), lambda j: (0, 0)),          # x (resident)
            pl.BlockSpec((HW, S), lambda j: (0, 0)),              # pooling matrix (resident)
            pl.BlockSpec((C, OC), lambda j: (0, 0)),              # conv weight (resident)
            pl.BlockSpec((1, OC), lambda j: (0, 0)),              # conv bias (resident)
            pl.BlockSpec((D_IN, fc1_tile), lambda j: (0, j)),     # fc1 weight tile (streamed)
            pl.BlockSpec((1, fc1_tile), lambda j: (0, j)),        # fc1 bias tile
            pl.BlockSpec((fc1_tile, NC_PAD), lambda j: (j, 0)),   # fc2 weight tile (streamed)
            pl.BlockSpec((1, NC_PAD), lambda j: (0, 0)),          # fc2 bias (resident)
        ],
        out_specs=pl.BlockSpec((N, NC_PAD), lambda j: (0, 0)),    # resident accumulator
        scratch_shapes=[pltpu.VMEM((N, D_IN), jnp.bfloat16)],
        compiler_params=pltpu.CompilerParams(
            dimension_semantics=("arbitrary",)),
        cost_estimate=pl.CostEstimate(
            flops=2 * N * (C * HW * S + S * C * OC + D_IN * D_H + D_H * NC_PAD),
            transcendentals=0,
            bytes_accessed=(D_IN * D_H * 2 + D_H * NC_PAD * 2
                            + N * C * HW * 4 + N * NC_PAD * 4)),
    )(x2d, pool, prepped["conv_wT"], prepped["conv_b"],
      prepped["w1p"], prepped["b1"], prepped["w2p"], prepped["b2"])

    return out_pad[:, :num_classes]


def reference_forward(x_nchw, params):
    """Pure-JAX f32 reference mirroring the PyTorch module (eval mode)."""
    N = x_nchw.shape[0]
    pooled = jax.lax.reduce_window(
        x_nchw, 0.0, jax.lax.add,
        (1, 1, POOL_K, POOL_K), (1, 1, POOL_S, POOL_S), "VALID",
    ) / float(POOL_K * POOL_K)
    conv = jnp.einsum("nchw,oc->nohw", pooled, params["conv_w"]) \
        + params["conv_b"][None, :, None, None]
    conv = jnp.maximum(conv, 0.0)
    flat = conv.reshape(N, -1)
    h1 = jnp.maximum(flat @ params["fc1_w"].T + params["fc1_b"], 0.0)
    return h1 @ params["fc2_w"].T + params["fc2_b"]


if __name__ == "__main__":
    key = jax.random.PRNGKey(0)
    # H=W=14 is required so avg_pool(5,3) -> 4x4 and 128*4*4 == 2048 (fc1 input).
    N, C, H, W = 2, 4, 14, 14
    num_classes = 10
    ks = jax.random.split(key, 7)
    params = {
        "conv_w": jax.random.normal(ks[0], (128, C), jnp.float32) * 0.1,
        "conv_b": jax.random.normal(ks[1], (128,), jnp.float32) * 0.1,
        "fc1_w": jax.random.normal(ks[2], (1024, 2048), jnp.float32) * 0.02,
        "fc1_b": jax.random.normal(ks[3], (1024,), jnp.float32) * 0.1,
        "fc2_w": jax.random.normal(ks[4], (num_classes, 1024), jnp.float32) * 0.03,
        "fc2_b": jax.random.normal(ks[5], (num_classes,), jnp.float32) * 0.1,
    }
    x = jax.random.normal(ks[6], (N, C, H, W), jnp.float32)

    # One-time weight packing (outside the per-call path).
    prepped = jax.tree_util.tree_map(jax.block_until_ready,
                                     prepare_params(params, num_classes, H, W))

    out = jax.block_until_ready(
        inception_aux_forward(x, prepped, num_classes=num_classes))
    ref = reference_forward(x, params)

    assert out.shape == (N, num_classes)
    assert bool(jnp.all(jnp.isfinite(out)))
    if not jnp.allclose(out, ref, rtol=5e-2, atol=5e-2):
        err = float(jnp.max(jnp.abs(out - ref)))
        raise AssertionError(f"Pallas kernel output mismatch vs JAX reference (max abs err {err})")
    print("KERNEL_OK")
</pallas_src>

<mosaic_0001>
module attributes {stable_mosaic.version = 11 : i64} {
  func.func @_fused_kernel(%arg0: i32, %arg1: memref<8x196xf32, #tpu.memory_space<vmem>>, %arg2: memref<196x16xf32, #tpu.memory_space<vmem>>, %arg3: memref<4x128xf32, #tpu.memory_space<vmem>>, %arg4: memref<1x128xf32, #tpu.memory_space<vmem>>, %arg5: memref<2048x512xbf16, #tpu.memory_space<vmem>>, %arg6: memref<1x512xf32, #tpu.memory_space<vmem>>, %arg7: memref<512x128xbf16, #tpu.memory_space<vmem>>, %arg8: memref<1x128xf32, #tpu.memory_space<vmem>>, %arg9: memref<2x128xf32, #tpu.memory_space<vmem>>, %arg10: memref<2x2048xbf16, #tpu.memory_space<vmem>>) attributes {dimension_semantics = [#tpu.dimension_semantics<arbitrary>], iteration_bounds = array<i64: 2>, scalar_prefetch = 0 : i64, scratch_operands = 1 : i64, tpu.core_type = #tpu.core_type<tc>, window_params = [{pipeline_mode = #tpu.pipeline_mode<synchronous>, transform_indices = @transform_0, window_bounds = array<i64: 8, 196>}, {pipeline_mode = #tpu.pipeline_mode<synchronous>, transform_indices = @transform_1, window_bounds = array<i64: 196, 16>}, {pipeline_mode = #tpu.pipeline_mode<synchronous>, transform_indices = @transform_2, window_bounds = array<i64: 4, 128>}, {pipeline_mode = #tpu.pipeline_mode<synchronous>, transform_indices = @transform_3, window_bounds = array<i64: 1, 128>}, {transform_indices = @transform_4, window_bounds = array<i64: 2048, 512>}, {transform_indices = @transform_5, window_bounds = array<i64: 1, 512>}, {transform_indices = @transform_6, window_bounds = array<i64: 512, 128>}, {pipeline_mode = #tpu.pipeline_mode<synchronous>, transform_indices = @transform_7, window_bounds = array<i64: 1, 128>}, {pipeline_mode = #tpu.pipeline_mode<synchronous>, transform_indices = @transform_8, window_bounds = array<i64: 2, 128>}]} {
    %c0_i32 = arith.constant 0 : i32
    %0 = arith.cmpi eq, %arg0, %c0_i32 : i32
    %1 = arith.extui %0 : i1 to i32
    %c0_i32_0 = arith.constant 0 : i32
    %2 = arith.cmpi ne, %1, %c0_i32_0 : i32
    scf.if %2 {
      %c0_14 = arith.constant 0 : index
      %c0_15 = arith.constant 0 : index
      %17 = vector.load %arg1[%c0_14, %c0_15] : memref<8x196xf32, #tpu.memory_space<vmem>>, vector<8x196xf32>
      %c0_16 = arith.constant 0 : index
      %c0_17 = arith.constant 0 : index
      %18 = vector.load %arg2[%c0_16, %c0_17] : memref<196x16xf32, #tpu.memory_space<vmem>>, vector<196x16xf32>
      %cst_18 = arith.constant dense<0.000000e+00> : vector<8x16xf32>
      %19 = tpu.matmul %17, %18, %cst_18 {dimension_numbers = #tpu.dot_dimension_numbers<[1], [0], [0], [1], [0, 0, 1, 1], [], []>} : vector<8x196xf32>, vector<196x16xf32>, vector<8x16xf32> -> vector<8x16xf32>
      %cst_19 = arith.constant 4.000000e-02 : f32
      %20 = vector.broadcast %cst_19 : f32 to vector<8x16xf32>
      %21 = arith.mulf %19, %20 : vector<8x16xf32>
      %22 = tpu.transpose %21, [1, 0] : vector<8x16xf32> -> vector<16x8xf32>
      %23 = vector.extract_strided_slice %22 {offsets = [0, 0], sizes = [16, 4], strides = [1, 1]} : vector<16x8xf32> to vector<16x4xf32>
      %c0_20 = arith.constant 0 : index
      %c0_21 = arith.constant 0 : index
      %24 = vector.load %arg3[%c0_20, %c0_21] : memref<4x128xf32, #tpu.memory_space<vmem>>, vector<4x128xf32>
      %cst_22 = arith.constant dense<0.000000e+00> : vector<16x128xf32>
      %25 = tpu.matmul %23, %24, %cst_22 {dimension_numbers = #tpu.dot_dimension_numbers<[1], [0], [0], [1], [0, 0, 1, 1], [], []>} : vector<16x4xf32>, vector<4x128xf32>, vector<16x128xf32> -> vector<16x128xf32>
      %c0_23 = arith.constant 0 : index
      %c0_24 = arith.constant 0 : index
      %26 = vector.load %arg4[%c0_23, %c0_24] : memref<1x128xf32, #tpu.memory_space<vmem>>, vector<1x128xf32>
      %27 = vector.broadcast %26 : vector<1x128xf32> to vector<16x128xf32>
      %28 = arith.addf %25, %27 : vector<16x128xf32>
      %cst_25 = arith.constant 0.000000e+00 : f32
      %29 = vector.broadcast %cst_25 : f32 to vector<16x128xf32>
      %30 = arith.maximumf %28, %29 : vector<16x128xf32>
      %31 = arith.truncf %30 : vector<16x128xf32> to vector<16x128xbf16>
      %32 = vector.extract_strided_slice %31 {offsets = [0, 0], sizes = [1, 128], strides = [1, 1]} : vector<16x128xbf16> to vector<1x128xbf16>
      %c0_26 = arith.constant 0 : index
      %c0_27 = arith.constant 0 : index
      %33 = vector.load %arg10[%c0_26, %c0_27] : memref<2x2048xbf16, #tpu.memory_space<vmem>>, vector<1x128xbf16>
      tpu.vector_store %arg10[%c0_26, %c0_27], %32 {strides = array<i32>} : memref<2x2048xbf16, #tpu.memory_space<vmem>>, vector<1x128xbf16>,
      %34 = vector.extract_strided_slice %31 {offsets = [1, 0], sizes = [1, 128], strides = [1, 1]} : vector<16x128xbf16> to vector<1x128xbf16>
      %c0_28 = arith.constant 0 : index
      %c128 = arith.constant 128 : index
      %35 = vector.load %arg10[%c0_28, %c128] : memref<2x2048xbf16, #tpu.memory_space<vmem>>, vector<1x128xbf16>
      tpu.vector_store %arg10[%c0_28, %c128], %34 {strides = array<i32>} : memref<2x2048xbf16, #tpu.memory_space<vmem>>, vector<1x128xbf16>,
      %36 = vector.extract_strided_slice %31 {offsets = [2, 0], sizes = [1, 128], strides = [1, 1]} : vector<16x128xbf16> to vector<1x128xbf16>
      %c0_29 = arith.constant 0 : index
      %c256 = arith.constant 256 : index
      %37 = vector.load %arg10[%c0_29, %c256] : memref<2x2048xbf16, #tpu.memory_space<vmem>>, vector<1x128xbf16>
      tpu.vector_store %arg10[%c0_29, %c256], %36 {strides = array<i32>} : memref<2x2048xbf16, #tpu.memory_space<vmem>>, vector<1x128xbf16>,
      %38 = vector.extract_strided_slice %31 {offsets = [3, 0], sizes = [1, 128], strides = [1, 1]} : vector<16x128xbf16> to vector<1x128xbf16>
      %c0_30 = arith.constant 0 : index
      %c384 = arith.constant 384 : index
      %39 = vector.load %arg10[%c0_30, %c384] : memref<2x2048xbf16, #tpu.memory_space<vmem>>, vector<1x128xbf16>
      tpu.vector_store %arg10[%c0_30, %c384], %38 {strides = array<i32>} : memref<2x2048xbf16, #tpu.memory_space<vmem>>, vector<1x128xbf16>,
      %40 = vector.extract_strided_slice %31 {offsets = [4, 0], sizes = [1, 128], strides = [1, 1]} : vector<16x128xbf16> to vector<1x128xbf16>
      %c0_31 = arith.constant 0 : index
      %c512 = arith.constant 512 : index
      %41 = vector.load %arg10[%c0_31, %c512] : memref<2x2048xbf16, #tpu.memory_space<vmem>>, vector<1x128xbf16>
      tpu.vector_store %arg10[%c0_31, %c512], %40 {strides = array<i32>} : memref<2x2048xbf16, #tpu.memory_space<vmem>>, vector<1x128xbf16>,
      %42 = vector.extract_strided_slice %31 {offsets = [5, 0], sizes = [1, 128], strides = [1, 1]} : vector<16x128xbf16> to vector<1x128xbf16>
      %c0_32 = arith.constant 0 : index
      %c640 = arith.constant 640 : index
      %43 = vector.load %arg10[%c0_32, %c640] : memref<2x2048xbf16, #tpu.memory_space<vmem>>, vector<1x128xbf16>
      tpu.vector_store %arg10[%c0_32, %c640], %42 {strides = array<i32>} : memref<2x2048xbf16, #tpu.memory_space<vmem>>, vector<1x128xbf16>,
      %44 = vector.extract_strided_slice %31 {offsets = [6, 0], sizes = [1, 128], strides = [1, 1]} : vector<16x128xbf16> to vector<1x128xbf16>
      %c0_33 = arith.constant 0 : index
      %c768 = arith.constant 768 : index
      %45 = vector.load %arg10[%c0_33, %c768] : memref<2x2048xbf16, #tpu.memory_space<vmem>>, vector<1x128xbf16>
      tpu.vector_store %arg10[%c0_33, %c768], %44 {strides = array<i32>} : memref<2x2048xbf16, #tpu.memory_space<vmem>>, vector<1x128xbf16>,
      %46 = vector.extract_strided_slice %31 {offsets = [7, 0], sizes = [1, 128], strides = [1, 1]} : vector<16x128xbf16> to vector<1x128xbf16>
      %c0_34 = arith.constant 0 : index
      %c896 = arith.constant 896 : index
      %47 = vector.load %arg10[%c0_34, %c896] : memref<2x2048xbf16, #tpu.memory_space<vmem>>, vector<1x128xbf16>
      tpu.vector_store %arg10[%c0_34, %c896], %46 {strides = array<i32>} : memref<2x2048xbf16, #tpu.memory_space<vmem>>, vector<1x128xbf16>,
      %48 = vector.extract_strided_slice %31 {offsets = [8, 0], sizes = [1, 128], strides = [1, 1]} : vector<16x128xbf16> to vector<1x128xbf16>
      %c0_35 = arith.constant 0 : index
      %c1024 = arith.constant 1024 : index
      %49 = vector.load %arg10[%c0_35, %c1024] : memref<2x2048xbf16, #tpu.memory_space<vmem>>, vector<1x128xbf16>
      tpu.vector_store %arg10[%c0_35, %c1024], %48 {strides = array<i32>} : memref<2x2048xbf16, #tpu.memory_space<vmem>>, vector<1x128xbf16>,
      %50 = vector.extract_strided_slice %31 {offsets = [9, 0], sizes = [1, 128], strides = [1, 1]} : vector<16x128xbf16> to vector<1x128xbf16>
      %c0_36 = arith.constant 0 : index
      %c1152 = arith.constant 1152 : index
      %51 = vector.load %arg10[%c0_36, %c1152] : memref<2x2048xbf16, #tpu.memory_space<vmem>>, vector<1x128xbf16>
      tpu.vector_store %arg10[%c0_36, %c1152], %50 {strides = array<i32>} : memref<2x2048xbf16, #tpu.memory_space<vmem>>, vector<1x128xbf16>,
      %52 = vector.extract_strided_slice %31 {offsets = [10, 0], sizes = [1, 128], strides = [1, 1]} : vector<16x128xbf16> to vector<1x128xbf16>
      %c0_37 = arith.constant 0 : index
      %c1280 = arith.constant 1280 : index
      %53 = vector.load %arg10[%c0_37, %c1280] : memref<2x2048xbf16, #tpu.memory_space<vmem>>, vector<1x128xbf16>
      tpu.vector_store %arg10[%c0_37, %c1280], %52 {strides = array<i32>} : memref<2x2048xbf16, #tpu.memory_space<vmem>>, vector<1x128xbf16>,
      %54 = vector.extract_strided_slice %31 {offsets = [11, 0], sizes = [1, 128], strides = [1, 1]} : vector<16x128xbf16> to vector<1x128xbf16>
      %c0_38 = arith.constant 0 : index
      %c1408 = arith.constant 1408 : index
      %55 = vector.load %arg10[%c0_38, %c1408] : memref<2x2048xbf16, #tpu.memory_space<vmem>>, vector<1x128xbf16>
      tpu.vector_store %arg10[%c0_38, %c1408], %54 {strides = array<i32>} : memref<2x2048xbf16, #tpu.memory_space<vmem>>, vector<1x128xbf16>,
      %56 = vector.extract_strided_slice %31 {offsets = [12, 0], sizes = [1, 128], strides = [1, 1]} : vector<16x128xbf16> to vector<1x128xbf16>
      %c0_39 = arith.constant 0 : index
      %c1536 = arith.constant 1536 : index
      %57 = vector.load %arg10[%c0_39, %c1536] : memref<2x2048xbf16, #tpu.memory_space<vmem>>, vector<1x128xbf16>
      tpu.vector_store %arg10[%c0_39, %c1536], %56 {strides = array<i32>} : memref<2x2048xbf16, #tpu.memory_space<vmem>>, vector<1x128xbf16>,
      %58 = vector.extract_strided_slice %31 {offsets = [13, 0], sizes = [1, 128], strides = [1, 1]} : vector<16x128xbf16> to vector<1x128xbf16>
      %c0_40 = arith.constant 0 : index
      %c1664 = arith.constant 1664 : index
      %59 = vector.load %arg10[%c0_40, %c1664] : memref<2x2048xbf16, #tpu.memory_space<vmem>>, vector<1x128xbf16>
      tpu.vector_store %arg10[%c0_40, %c1664], %58 {strides = array<i32>} : memref<2x2048xbf16, #tpu.memory_space<vmem>>, vector<1x128xbf16>,
      %60 = vector.extract_strided_slice %31 {offsets = [14, 0], sizes = [1, 128], strides = [1, 1]} : vector<16x128xbf16> to vector<1x128xbf16>
      %c0_41 = arith.constant 0 : index
      %c1792 = arith.constant 1792 : index
      %61 = vector.load %arg10[%c0_41, %c1792] : memref<2x2048xbf16, #tpu.memory_space<vmem>>, vector<1x128xbf16>
      tpu.vector_store %arg10[%c0_41, %c1792], %60 {strides = array<i32>} : memref<2x2048xbf16, #tpu.memory_space<vmem>>, vector<1x128xbf16>,
      %62 = vector.extract_strided_slice %31 {offsets = [15, 0], sizes = [1, 128], strides = [1, 1]} : vector<16x128xbf16> to vector<1x128xbf16>
      %c0_42 = arith.constant 0 : index
      %c1920 = arith.constant 1920 : index
      %63 = vector.load %arg10[%c0_42, %c1920] : memref<2x2048xbf16, #tpu.memory_space<vmem>>, vector<1x128xbf16>
      tpu.vector_store %arg10[%c0_42, %c1920], %62 {strides = array<i32>} : memref<2x2048xbf16, #tpu.memory_space<vmem>>, vector<1x128xbf16>,
      %64 = vector.extract_strided_slice %22 {offsets = [0, 4], sizes = [16, 4], strides = [1, 1]} : vector<16x8xf32> to vector<16x4xf32>
      %c0_43 = arith.constant 0 : index
      %c0_44 = arith.constant 0 : index
      %65 = vector.load %arg3[%c0_43, %c0_44] : memref<4x128xf32, #tpu.memory_space<vmem>>, vector<4x128xf32>
      %cst_45 = arith.constant dense<0.000000e+00> : vector<16x128xf32>
      %66 = tpu.matmul %64, %65, %cst_45 {dimension_numbers = #tpu.dot_dimension_numbers<[1], [0], [0], [1], [0, 0, 1, 1], [], []>} : vector<16x4xf32>, vector<4x128xf32>, vector<16x128xf32> -> vector<16x128xf32>
      %c0_46 = arith.constant 0 : index
      %c0_47 = arith.constant 0 : index
      %67 = vector.load %arg4[%c0_46, %c0_47] : memref<1x128xf32, #tpu.memory_space<vmem>>, vector<1x128xf32>
      %68 = vector.broadcast %67 : vector<1x128xf32> to vector<16x128xf32>
      %69 = arith.addf %66, %68 : vector<16x128xf32>
      %cst_48 = arith.constant 0.000000e+00 : f32
      %70 = vector.broadcast %cst_48 : f32 to vector<16x128xf32>
      %71 = arith.maximumf %69, %70 : vector<16x128xf32>
      %72 = arith.truncf %71 : vector<16x128xf32> to vector<16x128xbf16>
      %73 = vector.extract_strided_slice %72 {offsets = [0, 0], sizes = [1, 128], strides = [1, 1]} : vector<16x128xbf16> to vector<1x128xbf16>
      %c1 = arith.constant 1 : index
      %c0_49 = arith.constant 0 : index
      %74 = vector.load %arg10[%c1, %c0_49] : memref<2x2048xbf16, #tpu.memory_space<vmem>>, vector<1x128xbf16>
      tpu.vector_store %arg10[%c1, %c0_49], %73 {strides = array<i32>} : memref<2x2048xbf16, #tpu.memory_space<vmem>>, vector<1x128xbf16>,
      %75 = vector.extract_strided_slice %72 {offsets = [1, 0], sizes = [1, 128], strides = [1, 1]} : vector<16x128xbf16> to vector<1x128xbf16>
      %c1_50 = arith.constant 1 : index
      %c128_51 = arith.constant 128 : index
      %76 = vector.load %arg10[%c1_50, %c128_51] : memref<2x2048xbf16, #tpu.memory_space<vmem>>, vector<1x128xbf16>
      tpu.vector_store %arg10[%c1_50, %c128_51], %75 {strides = array<i32>} : memref<2x2048xbf16, #tpu.memory_space<vmem>>, vector<1x128xbf16>,
      %77 = vector.extract_strided_slice %72 {offsets = [2, 0], sizes = [1, 128], strides = [1, 1]} : vector<16x128xbf16> to vector<1x128xbf16>
      %c1_52 = arith.constant 1 : index
      %c256_53 = arith.constant 256 : index
      %78 = vector.load %arg10[%c1_52, %c256_53] : memref<2x2048xbf16, #tpu.memory_space<vmem>>, vector<1x128xbf16>
      tpu.vector_store %arg10[%c1_52, %c256_53], %77 {strides = array<i32>} : memref<2x2048xbf16, #tpu.memory_space<vmem>>, vector<1x128xbf16>,
      %79 = vector.extract_strided_slice %72 {offsets = [3, 0], sizes = [1, 128], strides = [1, 1]} : vector<16x128xbf16> to vector<1x128xbf16>
      %c1_54 = arith.constant 1 : index
      %c384_55 = arith.constant 384 : index
      %80 = vector.load %arg10[%c1_54, %c384_55] : memref<2x2048xbf16, #tpu.memory_space<vmem>>, vector<1x128xbf16>
      tpu.vector_store %arg10[%c1_54, %c384_55], %79 {strides = array<i32>} : memref<2x2048xbf16, #tpu.memory_space<vmem>>, vector<1x128xbf16>,
      %81 = vector.extract_strided_slice %72 {offsets = [4, 0], sizes = [1, 128], strides = [1, 1]} : vector<16x128xbf16> to vector<1x128xbf16>
      %c1_56 = arith.constant 1 : index
      %c512_57 = arith.constant 512 : index
      %82 = vector.load %arg10[%c1_56, %c512_57] : memref<2x2048xbf16, #tpu.memory_space<vmem>>, vector<1x128xbf16>
      tpu.vector_store %arg10[%c1_56, %c512_57], %81 {strides = array<i32>} : memref<2x2048xbf16, #tpu.memory_space<vmem>>, vector<1x128xbf16>,
      %83 = vector.extract_strided_slice %72 {offsets = [5, 0], sizes = [1, 128], strides = [1, 1]} : vector<16x128xbf16> to vector<1x128xbf16>
      %c1_58 = arith.constant 1 : index
      %c640_59 = arith.constant 640 : index
      %84 = vector.load %arg10[%c1_58, %c640_59] : memref<2x2048xbf16, #tpu.memory_space<vmem>>, vector<1x128xbf16>
      tpu.vector_store %arg10[%c1_58, %c640_59], %83 {strides = array<i32>} : memref<2x2048xbf16, #tpu.memory_space<vmem>>, vector<1x128xbf16>,
      %85 = vector.extract_strided_slice %72 {offsets = [6, 0], sizes = [1, 128], strides = [1, 1]} : vector<16x128xbf16> to vector<1x128xbf16>
      %c1_60 = arith.constant 1 : index
      %c768_61 = arith.constant 768 : index
      %86 = vector.load %arg10[%c1_60, %c768_61] : memref<2x2048xbf16, #tpu.memory_space<vmem>>, vector<1x128xbf16>
      tpu.vector_store %arg10[%c1_60, %c768_61], %85 {strides = array<i32>} : memref<2x2048xbf16, #tpu.memory_space<vmem>>, vector<1x128xbf16>,
      %87 = vector.extract_strided_slice %72 {offsets = [7, 0], sizes = [1, 128], strides = [1, 1]} : vector<16x128xbf16> to vector<1x128xbf16>
      %c1_62 = arith.constant 1 : index
      %c896_63 = arith.constant 896 : index
      %88 = vector.load %arg10[%c1_62, %c896_63] : memref<2x2048xbf16, #tpu.memory_space<vmem>>, vector<1x128xbf16>
      tpu.vector_store %arg10[%c1_62, %c896_63], %87 {strides = array<i32>} : memref<2x2048xbf16, #tpu.memory_space<vmem>>, vector<1x128xbf16>,
      %89 = vector.extract_strided_slice %72 {offsets = [8, 0], sizes = [1, 128], strides = [1, 1]} : vector<16x128xbf16> to vector<1x128xbf16>
      %c1_64 = arith.constant 1 : index
      %c1024_65 = arith.constant 1024 : index
      %90 = vector.load %arg10[%c1_64, %c1024_65] : memref<2x2048xbf16, #tpu.memory_space<vmem>>, vector<1x128xbf16>
      tpu.vector_store %arg10[%c1_64, %c1024_65], %89 {strides = array<i32>} : memref<2x2048xbf16, #tpu.memory_space<vmem>>, vector<1x128xbf16>,
      %91 = vector.extract_strided_slice %72 {offsets = [9, 0], sizes = [1, 128], strides = [1, 1]} : vector<16x128xbf16> to vector<1x128xbf16>
      %c1_66 = arith.constant 1 : index
      %c1152_67 = arith.constant 1152 : index
      %92 = vector.load %arg10[%c1_66, %c1152_67] : memref<2x2048xbf16, #tpu.memory_space<vmem>>, vector<1x128xbf16>
      tpu.vector_store %arg10[%c1_66, %c1152_67], %91 {strides = array<i32>} : memref<2x2048xbf16, #tpu.memory_space<vmem>>, vector<1x128xbf16>,
      %93 = vector.extract_strided_slice %72 {offsets = [10, 0], sizes = [1, 128], strides = [1, 1]} : vector<16x128xbf16> to vector<1x128xbf16>
      %c1_68 = arith.constant 1 : index
      %c1280_69 = arith.constant 1280 : index
      %94 = vector.load %arg10[%c1_68, %c1280_69] : memref<2x2048xbf16, #tpu.memory_space<vmem>>, vector<1x128xbf16>
      tpu.vector_store %arg10[%c1_68, %c1280_69], %93 {strides = array<i32>} : memref<2x2048xbf16, #tpu.memory_space<vmem>>, vector<1x128xbf16>,
      %95 = vector.extract_strided_slice %72 {offsets = [11, 0], sizes = [1, 128], strides = [1, 1]} : vector<16x128xbf16> to vector<1x128xbf16>
      %c1_70 = arith.constant 1 : index
      %c1408_71 = arith.constant 1408 : index
      %96 = vector.load %arg10[%c1_70, %c1408_71] : memref<2x2048xbf16, #tpu.memory_space<vmem>>, vector<1x128xbf16>
      tpu.vector_store %arg10[%c1_70, %c1408_71], %95 {strides = array<i32>} : memref<2x2048xbf16, #tpu.memory_space<vmem>>, vector<1x128xbf16>,
      %97 = vector.extract_strided_slice %72 {offsets = [12, 0], sizes = [1, 128], strides = [1, 1]} : vector<16x128xbf16> to vector<1x128xbf16>
      %c1_72 = arith.constant 1 : index
      %c1536_73 = arith.constant 1536 : index
      %98 = vector.load %arg10[%c1_72, %c1536_73] : memref<2x2048xbf16, #tpu.memory_space<vmem>>, vector<1x128xbf16>
      tpu.vector_store %arg10[%c1_72, %c1536_73], %97 {strides = array<i32>} : memref<2x2048xbf16, #tpu.memory_space<vmem>>, vector<1x128xbf16>,
      %99 = vector.extract_strided_slice %72 {offsets = [13, 0], sizes = [1, 128], strides = [1, 1]} : vector<16x128xbf16> to vector<1x128xbf16>
      %c1_74 = arith.constant 1 : index
      %c1664_75 = arith.constant 1664 : index
      %100 = vector.load %arg10[%c1_74, %c1664_75] : memref<2x2048xbf16, #tpu.memory_space<vmem>>, vector<1x128xbf16>
      tpu.vector_store %arg10[%c1_74, %c1664_75], %99 {strides = array<i32>} : memref<2x2048xbf16, #tpu.memory_space<vmem>>, vector<1x128xbf16>,
      %101 = vector.extract_strided_slice %72 {offsets = [14, 0], sizes = [1, 128], strides = [1, 1]} : vector<16x128xbf16> to vector<1x128xbf16>
      %c1_76 = arith.constant 1 : index
      %c1792_77 = arith.constant 1792 : index
      %102 = vector.load %arg10[%c1_76, %c1792_77] : memref<2x2048xbf16, #tpu.memory_space<vmem>>, vector<1x128xbf16>
      tpu.vector_store %arg10[%c1_76, %c1792_77], %101 {strides = array<i32>} : memref<2x2048xbf16, #tpu.memory_space<vmem>>, vector<1x128xbf16>,
      %103 = vector.extract_strided_slice %72 {offsets = [15, 0], sizes = [1, 128], strides = [1, 1]} : vector<16x128xbf16> to vector<1x128xbf16>
      %c1_78 = arith.constant 1 : index
      %c1920_79 = arith.constant 1920 : index
      %104 = vector.load %arg10[%c1_78, %c1920_79] : memref<2x2048xbf16, #tpu.memory_space<vmem>>, vector<1x128xbf16>
      tpu.vector_store %arg10[%c1_78, %c1920_79], %103 {strides = array<i32>} : memref<2x2048xbf16, #tpu.memory_space<vmem>>, vector<1x128xbf16>,
      %c0_80 = arith.constant 0 : index
      %c0_81 = arith.constant 0 : index
      %105 = vector.load %arg8[%c0_80, %c0_81] : memref<1x128xf32, #tpu.memory_space<vmem>>, vector<1x128xf32>
      %106 = vector.shape_cast %105 : vector<1x128xf32> to vector<1x128xf32>
      %107 = vector.broadcast %106 : vector<1x128xf32> to vector<2x128xf32>
      %c0_82 = arith.constant 0 : index
      %c0_83 = arith.constant 0 : index
      %108 = vector.load %arg9[%c0_82, %c0_83] : memref<2x128xf32, #tpu.memory_space<vmem>>, vector<2x128xf32>
      tpu.vector_store %arg9[%c0_82, %c0_83], %107 {strides = array<i32>} : memref<2x128xf32, #tpu.memory_space<vmem>>, vector<2x128xf32>,
    } else {
    }
    %c0 = arith.constant 0 : index
    %c0_1 = arith.constant 0 : index
    %3 = vector.load %arg10[%c0, %c0_1] : memref<2x2048xbf16, #tpu.memory_space<vmem>>, vector<2x2048xbf16>
    %c0_2 = arith.constant 0 : index
    %c0_3 = arith.constant 0 : index
    %4 = vector.load %arg5[%c0_2, %c0_3] : memref<2048x512xbf16, #tpu.memory_space<vmem>>, vector<2048x512xbf16>
    %cst = arith.constant dense<0.000000e+00> : vector<2x512xf32>
    %5 = tpu.matmul %3, %4, %cst {dimension_numbers = #tpu.dot_dimension_numbers<[1], [0], [0], [1], [0, 0, 1, 1], [], []>} : vector<2x2048xbf16>, vector<2048x512xbf16>, vector<2x512xf32> -> vector<2x512xf32>
    %c0_4 = arith.constant 0 : index
    %c0_5 = arith.constant 0 : index
    %6 = vector.load %arg6[%c0_4, %c0_5] : memref<1x512xf32, #tpu.memory_space<vmem>>, vector<1x512xf32>
    %7 = vector.broadcast %6 : vector<1x512xf32> to vector<2x512xf32>
    %8 = arith.addf %5, %7 : vector<2x512xf32>
    %cst_6 = arith.constant 0.000000e+00 : f32
    %9 = vector.broadcast %cst_6 : f32 to vector<2x512xf32>
    %10 = arith.maximumf %8, %9 : vector<2x512xf32>
    %c0_7 = arith.constant 0 : index
    %c0_8 = arith.constant 0 : index
    %11 = vector.load %arg9[%c0_7, %c0_8] : memref<2x128xf32, #tpu.memory_space<vmem>>, vector<2x128xf32>
    %12 = arith.truncf %10 : vector<2x512xf32> to vector<2x512xbf16>
    %c0_9 = arith.constant 0 : index
    %c0_10 = arith.constant 0 : index
    %13 = vector.load %arg7[%c0_9, %c0_10] : memref<512x128xbf16, #tpu.memory_space<vmem>>, vector<512x128xbf16>
    %cst_11 = arith.constant dense<0.000000e+00> : vector<2x128xf32>
    %14 = tpu.matmul %12, %13, %cst_11 {dimension_numbers = #tpu.dot_dimension_numbers<[1], [0], [0], [1], [0, 0, 1, 1], [], []>} : vector<2x512xbf16>, vector<512x128xbf16>, vector<2x128xf32> -> vector<2x128xf32>
    %15 = arith.addf %11, %14 : vector<2x128xf32>
    %c0_12 = arith.constant 0 : index
    %c0_13 = arith.constant 0 : index
    %16 = vector.load %arg9[%c0_12, %c0_13] : memref<2x128xf32, #tpu.memory_space<vmem>>, vector<2x128xf32>
    tpu.vector_store %arg9[%c0_12, %c0_13], %15 {strides = array<i32>} : memref<2x128xf32, #tpu.memory_space<vmem>>, vector<2x128xf32>,
    return
  }
  func.func @transform_0(%arg0: i32) -> (i32, i32) {
    %c0_i32 = arith.constant 0 : i32
    %c0_i32_0 = arith.constant 0 : i32
    %c0_i32_1 = arith.constant 0 : i32
    return %c0_i32, %c0_i32_0 : i32, i32
  }
  func.func @transform_1(%arg0: i32) -> (i32, i32) {
    %c0_i32 = arith.constant 0 : i32
    %c0_i32_0 = arith.constant 0 : i32
    %c0_i32_1 = arith.constant 0 : i32
    return %c0_i32, %c0_i32_0 : i32, i32
  }
  func.func @transform_2(%arg0: i32) -> (i32, i32) {
    %c0_i32 = arith.constant 0 : i32
    %c0_i32_0 = arith.constant 0 : i32
    %c0_i32_1 = arith.constant 0 : i32
    return %c0_i32, %c0_i32_0 : i32, i32
  }
  func.func @transform_3(%arg0: i32) -> (i32, i32) {
    %c0_i32 = arith.constant 0 : i32
    %c0_i32_0 = arith.constant 0 : i32
    %c0_i32_1 = arith.constant 0 : i32
    return %c0_i32, %c0_i32_0 : i32, i32
  }
  func.func @transform_4(%arg0: i32) -> (i32, i32) {
    %c0_i32 = arith.constant 0 : i32
    %c0_i32_0 = arith.constant 0 : i32
    return %c0_i32, %arg0 : i32, i32
  }
  func.func @transform_5(%arg0: i32) -> (i32, i32) {
    %c0_i32 = arith.constant 0 : i32
    %c0_i32_0 = arith.constant 0 : i32
    return %c0_i32, %arg0 : i32, i32
  }
  func.func @transform_6(%arg0: i32) -> (i32, i32) {
    %c0_i32 = arith.constant 0 : i32
    %c0_i32_0 = arith.constant 0 : i32
    return %arg0, %c0_i32 : i32, i32
  }
  func.func @transform_7(%arg0: i32) -> (i32, i32) {
    %c0_i32 = arith.constant 0 : i32
    %c0_i32_0 = arith.constant 0 : i32
    %c0_i32_1 = arith.constant 0 : i32
    return %c0_i32, %c0_i32_0 : i32, i32
  }
  func.func @transform_8(%arg0: i32) -> (i32, i32) {
    %c0_i32 = arith.constant 0 : i32
    %c0_i32_0 = arith.constant 0 : i32
    %c0_i32_1 = arith.constant 0 : i32
    return %c0_i32, %c0_i32_0 : i32, i32
  }
}

</mosaic_0001>

<llo_original>
// kernel: inception_aux_forward.1
$region0: #{inception_aux_forward.1}
  #allocation0 [shape = 'u32[]', space=smem, size = 0x4, offset = 0x4, fixed_abs, tag = 'smem constant byte address 0x4 - core index']
  #allocation1 [shape = 'u32[144,128]{1,0:T(1,128)}', space=vmem, size = 0x12000, scoped, tag = 'internal scratch']
  #allocation2 [shape = 'bf16[2,2048]{1,0:T(2,128)(2,1)}', space=vmem, size = 0x2000, scoped, tag = 'scratch operand']
  %s0 = inlined_call_operand.vmem [shape: f32[8,196], index: 0, kind: input, shape index: {}]
  %s1 = inlined_call_operand.vmem [shape: f32[196,16], index: 1, kind: input, shape index: {}]
  %s2 = inlined_call_operand.hbm [shape: f32[4,128], index: 2, kind: input, shape index: {}]
  %s3 = inlined_call_operand.hbm [shape: f32[1,128], index: 3, kind: input, shape index: {}]
  %s4 = inlined_call_operand.hbm [shape: bf16[2048,1024], index: 4, kind: input, shape index: {}]
  %s5 = inlined_call_operand.hbm [shape: f32[1,1024], index: 5, kind: input, shape index: {}]
  %s6 = inlined_call_operand.hbm [shape: bf16[1024,128], index: 6, kind: input, shape index: {}]
  %s7 = inlined_call_operand.hbm [shape: f32[1,128], index: 7, kind: input, shape index: {}]
  %s8 = inlined_call_operand.hbm [shape: f32[2,128], index: 8, kind: output, shape index: {}]
  %s9 = sld [smem:[#allocation0]]
  $region93: #{inception_aux_forward.1} parent=0
    _
  %s11 = ssub.s32 1, %s9
  %s12 = scalar_select 0, %s11, %s9
  $region1: #{inception_aux_forward.1} parent=0
    #allocation3 [shape = 'u8[2048]{0}', space=vmem, size = 0x800, scoped, tag = 'input window, operand 2, single buffered']
    #allocation4 [shape = 's32[2]{0}', space=sflag, size = 0x8, scoped, tag = 'scoped memory for inception_aux_forward.1']
    #allocation5 [shape = 's32[2]{0}', space=sflag, size = 0x8, scoped, tag = 'scoped memory for inception_aux_forward.1']
    #allocation6 [shape = 'u8[512]{0}', space=vmem, size = 0x400, scoped, tag = 'input window, operand 3, single buffered']
    #allocation7 [shape = 's32[1]{0}', space=sflag, size = 0x4, scoped, tag = 'scoped memory for inception_aux_forward.1']
    #allocation8 [shape = 'u8[4194304]{0}', space=vmem, size = 0x400000, scoped, tag = 'input window, operand 4']
    #allocation9 [shape = 'u8[4096]{0}', space=vmem, size = 0x1000, scoped, tag = 'input window, operand 5']
    #allocation10 [shape = 'u8[262144]{0}', space=vmem, size = 0x40000, scoped, tag = 'input window, operand 6']
    #allocation11 [shape = 'u8[512]{0}', space=vmem, size = 0x400, scoped, tag = 'input window, operand 7, single buffered']
    #allocation12 [shape = 'u8[1024]{0}', space=vmem, size = 0x400, scoped, tag = 'output window, operand 0, single buffered']
    %13 = vsyncpa [#allocation4], 0
    %14 = vsyncpa [#allocation7], 0
    %15 = vsyncpa [#allocation5], 0
    loop: start=0, step=1, limit=4
    $region2: #{inception_aux_forward.1} parent=1 // loop_pre_header
      _
    $region3: #{inception_aux_forward.1} parent=1 // loop_header
      %s17 = sphi 0, %s21
      %p18 = scmp.ge.s32.totalorder %s17, 4
      %s25 = sphi 0, %s25
      %s27 = sphi 0, %s25
      %s28 = sphi 0, %s27
      %s42 = sphi 0, %s28
      %s46 = sphi 0, %s46
      %s48 = sphi 0, %s46
      %s49 = sphi 0, %s48
      %s63 = sphi 0, %s49
      %s67 = sphi 0, %s67
      %s69 = sphi 0, %s67
      %s70 = sphi 0, %s69
      %s84 = sphi 0, %s70
      %s88 = sphi 0, %s88
      %s90 = sphi 0, %s88
      %s91 = sphi 0, %s90
      %s105 = sphi 0, %s91
      %s111 = sphi 0, %s113
      %s114 = sphi 0, %s111
      %s115 = sphi 0, %s114
      %s131 = sphi 0, %s115
      %s137 = sphi 0, %s139
      %s140 = sphi 0, %s137
      %s141 = sphi 0, %s140
      %s157 = sphi 0, %s141
      %s163 = sphi 0, %s165
      %s166 = sphi 0, %s163
      %s167 = sphi 0, %s166
      %s183 = sphi 0, %s167
      %s187 = sphi 0, %s187
      %s189 = sphi 0, %s187
      %s190 = sphi 0, %s189
      %s204 = sphi 0, %s190
      %s208 = sphi 0, %s208
      %s210 = sphi 0, %s208
      %s211 = sphi 0, %s210
      %s225 = sphi 0, %s211
    $region4: #{inception_aux_forward.1} parent=1 // loop_header_branch
      %20 = sbr.rel (%p18) target = $region8
    $region5: #{inception_aux_forward.1} parent=1 // loop_body
      %s22 = ssub.s32 %s17, 1
      %s23 = ssub.s32 %s17, 2
      %s24 = sadd.s32 %s17, 1
      %s26 = sadd.s32 %s25, 1
      %p29 = scmp.eq.s32.totalorder %s17, 1
      %p30 = scmp.ne.s32.totalorder %s25, %s27
      %p31 = scmp.eq.s32.totalorder %s17, 0
      %p32 = por %p30, %p31
      %p33 = scmp.ne.s32.totalorder %s25, %s27
      %p34 = scmp.eq.s32.totalorder %s22, 1
      %p35 = por %p33, %p34
      %p36 = scmp.ne.s32.totalorder %s27, %s28
      %p37 = scmp.eq.s32.totalorder %s22, 0
      %p38 = por %p36, %p37
      %p39 = scmp.ne.s32.totalorder %s27, %s28
      %p40 = scmp.eq.s32.totalorder %s23, 1
      %p41 = por %p39, %p40
      %p43 = scmp.ne.s32.totalorder %s28, %s42
      %p44 = scmp.eq.s32.totalorder %s23, 0
      %p45 = por %p43, %p44
      %s47 = sadd.s32 %s46, 1
      %p50 = scmp.eq.s32.totalorder %s17, 1
      %p51 = scmp.ne.s32.totalorder %s46, %s48
      %p52 = scmp.eq.s32.totalorder %s17, 0
      %p53 = por %p51, %p52
      %p54 = scmp.ne.s32.totalorder %s46, %s48
      %p55 = scmp.eq.s32.totalorder %s22, 1
      %p56 = por %p54, %p55
      %p57 = scmp.ne.s32.totalorder %s48, %s49
      %p58 = scmp.eq.s32.totalorder %s22, 0
      %p59 = por %p57, %p58
      %p60 = scmp.ne.s32.totalorder %s48, %s49
      %p61 = scmp.eq.s32.totalorder %s23, 1
      %p62 = por %p60, %p61
      %p64 = scmp.ne.s32.totalorder %s49, %s63
      %p65 = scmp.eq.s32.totalorder %s23, 0
      %p66 = por %p64, %p65
      %s68 = sadd.s32 %s67, 1
      %p71 = scmp.eq.s32.totalorder %s17, 1
      %p72 = scmp.ne.s32.totalorder %s67, %s69
      %p73 = scmp.eq.s32.totalorder %s17, 0
      %p74 = por %p72, %p73
      %p75 = scmp.ne.s32.totalorder %s67, %s69
      %p76 = scmp.eq.s32.totalorder %s22, 1
      %p77 = por %p75, %p76
      %p78 = scmp.ne.s32.totalorder %s69, %s70
      %p79 = scmp.eq.s32.totalorder %s22, 0
      %p80 = por %p78, %p79
      %p81 = scmp.ne.s32.totalorder %s69, %s70
      %p82 = scmp.eq.s32.totalorder %s23, 1
      %p83 = por %p81, %p82
      %p85 = scmp.ne.s32.totalorder %s70, %s84
      %p86 = scmp.eq.s32.totalorder %s23, 0
      %p87 = por %p85, %p86
      %s89 = sadd.s32 %s88, 1
      %p92 = scmp.eq.s32.totalorder %s17, 1
      %p93 = scmp.ne.s32.totalorder %s88, %s90
      %p94 = scmp.eq.s32.totalorder %s17, 0
      %p95 = por %p93, %p94
      %p96 = scmp.ne.s32.totalorder %s88, %s90
      %p97 = scmp.eq.s32.totalorder %s22, 1
      %p98 = por %p96, %p97
      %p99 = scmp.ne.s32.totalorder %s90, %s91
      %p100 = scmp.eq.s32.totalorder %s22, 0
      %p101 = por %p99, %p100
      %p102 = scmp.ne.s32.totalorder %s90, %s91
      %p103 = scmp.eq.s32.totalorder %s23, 1
      %p104 = por %p102, %p103
      %p106 = scmp.ne.s32.totalorder %s91, %s105
      %p107 = scmp.eq.s32.totalorder %s23, 0
      %p108 = por %p106, %p107
      %s109 = ssub.s32 %s17, %s24
      %p110 = scmp.eq.s32.totalorder %s109, 0
      %s112 = sadd.s32 %s111, 1
      %s113 = scalar_select %p110, %s111, %s112
      %p116 = pneg %p110
      %p117 = scmp.eq.s32.totalorder %s17, 1
      %p118 = por %p116, %p117
      %p119 = scmp.ne.s32.totalorder %s111, %s114
      %p120 = scmp.eq.s32.totalorder %s17, 0
      %p121 = por %p119, %p120
      %p122 = scmp.ne.s32.totalorder %s111, %s114
      %p123 = scmp.eq.s32.totalorder %s22, 1
      %p124 = por %p122, %p123
      %p125 = scmp.ne.s32.totalorder %s114, %s115
      %p126 = scmp.eq.s32.totalorder %s22, 0
      %p127 = por %p125, %p126
      %p128 = scmp.ne.s32.totalorder %s114, %s115
      %p129 = scmp.eq.s32.totalorder %s23, 1
      %p130 = por %p128, %p129
      %p132 = scmp.ne.s32.totalorder %s115, %s131
      %p133 = scmp.eq.s32.totalorder %s23, 0
      %p134 = por %p132, %p133
      %s135 = ssub.s32 %s17, %s24
      %p136 = scmp.eq.s32.totalorder %s135, 0
      %s138 = sadd.s32 %s137, 1
      %s139 = scalar_select %p136, %s137, %s138
      %p142 = pneg %p136
      %p143 = scmp.eq.s32.totalorder %s17, 1
      %p144 = por %p142, %p143
      %p145 = scmp.ne.s32.totalorder %s137, %s140
      %p146 = scmp.eq.s32.totalorder %s17, 0
      %p147 = por %p145, %p146
      %p148 = scmp.ne.s32.totalorder %s137, %s140
      %p149 = scmp.eq.s32.totalorder %s22, 1
      %p150 = por %p148, %p149
      %p151 = scmp.ne.s32.totalorder %s140, %s141
      %p152 = scmp.eq.s32.totalorder %s22, 0
      %p153 = por %p151, %p152
      %p154 = scmp.ne.s32.totalorder %s140, %s141
      %p155 = scmp.eq.s32.totalorder %s23, 1
      %p156 = por %p154, %p155
      %p158 = scmp.ne.s32.totalorder %s141, %s157
      %p159 = scmp.eq.s32.totalorder %s23, 0
      %p160 = por %p158, %p159
      %s161 = ssub.s32 %s17, %s24
      %p162 = scmp.eq.s32.totalorder %s161, 0
      %s164 = sadd.s32 %s163, 1
      %s165 = scalar_select %p162, %s163, %s164
      %p168 = pneg %p162
      %p169 = scmp.eq.s32.totalorder %s17, 1
      %p170 = por %p168, %p169
      %p171 = scmp.ne.s32.totalorder %s163, %s166
      %p172 = scmp.eq.s32.totalorder %s17, 0
      %p173 = por %p171, %p172
      %p174 = scmp.ne.s32.totalorder %s163, %s166
      %p175 = scmp.eq.s32.totalorder %s22, 1
      %p176 = por %p174, %p175
      %p177 = scmp.ne.s32.totalorder %s166, %s167
      %p178 = scmp.eq.s32.totalorder %s22, 0
      %p179 = por %p177, %p178
      %p180 = scmp.ne.s32.totalorder %s166, %s167
      %p181 = scmp.eq.s32.totalorder %s23, 1
      %p182 = por %p180, %p181
      %p184 = scmp.ne.s32.totalorder %s167, %s183
      %p185 = scmp.eq.s32.totalorder %s23, 0
      %p186 = por %p184, %p185
      %s188 = sadd.s32 %s187, 1
      %p191 = scmp.eq.s32.totalorder %s17, 1
      %p192 = scmp.ne.s32.totalorder %s187, %s189
      %p193 = scmp.eq.s32.totalorder %s17, 0
      %p194 = por %p192, %p193
      %p195 = scmp.ne.s32.totalorder %s187, %s189
      %p196 = scmp.eq.s32.totalorder %s22, 1
      %p197 = por %p195, %p196
      %p198 = scmp.ne.s32.totalorder %s189, %s190
      %p199 = scmp.eq.s32.totalorder %s22, 0
      %p200 = por %p198, %p199
      %p201 = scmp.ne.s32.totalorder %s189, %s190
      %p202 = scmp.eq.s32.totalorder %s23, 1
      %p203 = por %p201, %p202
      %p205 = scmp.ne.s32.totalorder %s190, %s204
      %p206 = scmp.eq.s32.totalorder %s23, 0
      %p207 = por %p205, %p206
      %s209 = sadd.s32 %s208, 1
      %p212 = scmp.eq.s32.totalorder %s17, 1
      %p213 = scmp.ne.s32.totalorder %s208, %s210
      %p214 = scmp.eq.s32.totalorder %s17, 0
      %p215 = por %p213, %p214
      %p216 = scmp.ne.s32.totalorder %s208, %s210
      %p217 = scmp.eq.s32.totalorder %s22, 1
      %p218 = por %p216, %p217
      %p219 = scmp.ne.s32.totalorder %s210, %s211
      %p220 = scmp.eq.s32.totalorder %s22, 0
      %p221 = por %p219, %p220
      %p222 = scmp.ne.s32.totalorder %s210, %s211
      %p223 = scmp.eq.s32.totalorder %s23, 1
      %p224 = por %p222, %p223
      %p226 = scmp.ne.s32.totalorder %s211, %s225
      %p227 = scmp.eq.s32.totalorder %s23, 0
      %p228 = por %p226, %p227
      %p229 = scmp.le.s32.totalorder 1, %s17
      %p230 = scmp.lt.s32.totalorder %s17, 3
      %p231 = pnand %p229, %p230
      %p232 = pneg %p231
      // Predicated region
      $region9: #{inception_aux_forward.1} parent=5 // pred_check
        _
      $region10: #{inception_aux_forward.1} parent=5 // pred_check_branch
        %234 = sbr.rel (%p231) target = $region12
      $region11: #{inception_aux_forward.1} parent=5 // pred_region
        %s235 = ssub.s32 %s17, 1
        // Predicated region
        $region13: #{inception_aux_forward.1} parent=11 // pred_check
          %p236 = pneg %p38
        $region14: #{inception_aux_forward.1} parent=11 // pred_check_branch
          %238 = sbr.rel (%p236) target = $region16
        $region15: #{inception_aux_forward.1} parent=11 // pred_region
          _
        $region16: #{inception_aux_forward.1} parent=11 // pred_fallthru
          _
        // Predicated region
        $region17: #{inception_aux_forward.1} parent=11 // pred_check
          %p239 = pneg %p59
        $region18: #{inception_aux_forward.1} parent=11 // pred_check_branch
          %241 = sbr.rel (%p239) target = $region20
        $region19: #{inception_aux_forward.1} parent=11 // pred_region
          _
        $region20: #{inception_aux_forward.1} parent=11 // pred_fallthru
          _
        // Predicated region
        $region21: #{inception_aux_forward.1} parent=11 // pred_check
          %p242 = pneg %p80
        $region22: #{inception_aux_forward.1} parent=11 // pred_check_branch
          %244 = sbr.rel (%p242) target = $region24
        $region23: #{inception_aux_forward.1} parent=11 // pred_region
          %s246 = ssub.s32 64, 64
          %247 = vsyncadd [#allocation4], %s246
          %s249 = sshll.u32 [#allocation3], 4
          %s250 = int_to_ptr.vmem [resolvable:$true] %s249
          %252 = dma.hbm_to_vmem [thread:$0]  %s2, 64, %s250, [#allocation4]
        $region24: #{inception_aux_forward.1} parent=11 // pred_fallthru
          _
        // Predicated region
        $region25: #{inception_aux_forward.1} parent=11 // pred_check
          %p253 = pneg %p101
        $region26: #{inception_aux_forward.1} parent=11 // pred_check_branch
          %255 = sbr.rel (%p253) target = $region28
        $region27: #{inception_aux_forward.1} parent=11 // pred_region
          %s257 = ssub.s32 16, 16
          %258 = vsyncadd [#allocation7], %s257
          %s260 = sshll.u32 [#allocation6], 4
          %s261 = int_to_ptr.vmem [resolvable:$true] %s260
          %263 = dma.hbm_to_vmem [thread:$0]  %s3, 16, %s261, [#allocation7]
        $region28: #{inception_aux_forward.1} parent=11 // pred_fallthru
          _
        // Predicated region
        $region29: #{inception_aux_forward.1} parent=11 // pred_check
          %p264 = pneg %p200
        $region30: #{inception_aux_forward.1} parent=11 // pred_check_branch
          %266 = sbr.rel (%p264) target = $region32
        $region31: #{inception_aux_forward.1} parent=11 // pred_region
          %s268 = ssub.s32 16, 16
          %269 = vsyncadd [#allocation7], %s268
          %s271 = sshll.u32 [#allocation11], 4
          %s272 = int_to_ptr.vmem [resolvable:$true] %s271
          %274 = dma.hbm_to_vmem [thread:$0]  %s7, 16, %s272, [#allocation7]
        $region32: #{inception_aux_forward.1} parent=11 // pred_fallthru
          _
      $region12: #{inception_aux_forward.1} parent=5 // pred_fallthru
        _
      %p275 = scmp.lt.s32.totalorder %s17, 2
      // Predicated region
      $region33: #{inception_aux_forward.1} parent=5 // pred_check
        %p276 = pneg %p275
      $region34: #{inception_aux_forward.1} parent=5 // pred_check_branch
        %278 = sbr.rel (%p276) target = $region36
      $region35: #{inception_aux_forward.1} parent=5 // pred_region
        // Predicated region
        $region37: #{inception_aux_forward.1} parent=35 // pred_check
          %p279 = pneg %p121
        $region38: #{inception_aux_forward.1} parent=35 // pred_check_branch
          %281 = sbr.rel (%p279) target = $region40
        $region39: #{inception_aux_forward.1} parent=35 // pred_region
          %s282 = sand.u32 %s17, 1
          %s283 = scalar_lea.sflag [#allocation4], %s282
          %s284 = sand.u32 %s111, 1
          %s285 = smul.addr %s284, 4096
          %s286 = scalar_lea.vmem [#allocation8], %s285
          %s287 = smul.u32 4, %s17
          %s289 = ssub.s32 65536, 65536
          %290 = vsyncadd %s283, %s289
          %s291 = smul.addr %s287, 64
          %s292 = scalar_lea.hbm %s4, %s291
          %s293 = sshll.u32 %s286, 4
          %s294 = int_to_ptr.vmem [resolvable:$true] %s293
          %299 = dma.hbm_to_vmem [thread:$0]  %s292, 65536, %s294, %s283, 512, 256, 16
        $region40: #{inception_aux_forward.1} parent=35 // pred_fallthru
          _
        // Predicated region
        $region41: #{inception_aux_forward.1} parent=35 // pred_check
          %p300 = pneg %p147
        $region42: #{inception_aux_forward.1} parent=35 // pred_check_branch
          %302 = sbr.rel (%p300) target = $region44
        $region43: #{inception_aux_forward.1} parent=35 // pred_region
          %s303 = sand.u32 %s17, 1
          %s304 = scalar_lea.sflag [#allocation4], %s303
          %s305 = sand.u32 %s137, 1
          %s306 = smul.addr %s305, 4
          %s307 = scalar_lea.vmem [#allocation9], %s306
          %s308 = smul.u32 4, %s17
          %s310 = ssub.s32 64, 64
          %311 = vsyncadd %s304, %s310
          %s312 = smul.addr %s308, 16
          %s313 = scalar_lea.hbm %s5, %s312
          %s315 = sshll.u32 %s307, 4
          %s316 = int_to_ptr.vmem [resolvable:$true] %s315
          %318 = dma.hbm_to_vmem [thread:$0]  %s313, 64, %s316, %s304
        $region44: #{inception_aux_forward.1} parent=35 // pred_fallthru
          _
        // Predicated region
        $region45: #{inception_aux_forward.1} parent=35 // pred_check
          %p319 = pneg %p173
        $region46: #{inception_aux_forward.1} parent=35 // pred_check_branch
          %321 = sbr.rel (%p319) target = $region48
        $region47: #{inception_aux_forward.1} parent=35 // pred_region
          %s322 = sand.u32 %s17, 1
          %s323 = scalar_lea.sflag [#allocation4], %s322
          %s324 = sand.u32 %s163, 1
          %s325 = smul.addr %s324, 256
          %s326 = scalar_lea.vmem [#allocation10], %s325
          %s327 = smul.u32 64, %s17
          %s329 = ssub.s32 4096, 4096
          %330 = vsyncadd %s323, %s329
          %s331 = smul.addr %s327, 64
          %s332 = scalar_lea.hbm %s6, %s331
          %s333 = sshll.u32 %s326, 4
          %s334 = int_to_ptr.vmem [resolvable:$true] %s333
          %339 = dma.hbm_to_vmem [thread:$0]  %s332, 4096, %s334, %s323, 64, 64, 4
        $region48: #{inception_aux_forward.1} parent=35 // pred_fallthru
          _
      $region36: #{inception_aux_forward.1} parent=5 // pred_fallthru
        _
      %p340 = scmp.le.s32.totalorder 1, %s17
      %p341 = scmp.lt.s32.totalorder %s17, 3
      %p342 = pnand %p340, %p341
      %p343 = pneg %p342
      // Predicated region
      $region49: #{inception_aux_forward.1} parent=5 // pred_check
        _
      $region50: #{inception_aux_forward.1} parent=5 // pred_check_branch
        %345 = sbr.rel (%p342) target = $region52
      $region51: #{inception_aux_forward.1} parent=5 // pred_region
        %s346 = ssub.s32 %s17, 1
        // Predicated region
        $region53: #{inception_aux_forward.1} parent=51 // pred_check
          %p347 = pneg %p80
        $region54: #{inception_aux_forward.1} parent=51 // pred_check_branch
          %349 = sbr.rel (%p347) target = $region56
        $region55: #{inception_aux_forward.1} parent=51 // pred_region
          %350 = dma.done [#allocation4], 64
        $region56: #{inception_aux_forward.1} parent=51 // pred_fallthru
          _
        // Predicated region
        $region57: #{inception_aux_forward.1} parent=51 // pred_check
          %p351 = pneg %p101
        $region58: #{inception_aux_forward.1} parent=51 // pred_check_branch
          %353 = sbr.rel (%p351) target = $region60
        $region59: #{inception_aux_forward.1} parent=51 // pred_region
          %354 = dma.done [#allocation7], 16
        $region60: #{inception_aux_forward.1} parent=51 // pred_fallthru
          _
        %s355 = sand.u32 %s22, 1
        %s356 = scalar_lea.sflag [#allocation4], %s355
        %s357 = sand.u32 %s114, 1
        %s358 = smul.addr %s357, 4096
        %s359 = scalar_lea.vmem [#allocation8], %s358
        // Predicated region
        $region61: #{inception_aux_forward.1} parent=51 // pred_check
          %p360 = pneg %p127
        $region62: #{inception_aux_forward.1} parent=51 // pred_check_branch
          %362 = sbr.rel (%p360) target = $region64
        $region63: #{inception_aux_forward.1} parent=51 // pred_region
          %363 = dma.done %s356, 65536
        $region64: #{inception_aux_forward.1} parent=51 // pred_fallthru
          _
        %s364 = sand.u32 %s22, 1
        %s365 = scalar_lea.sflag [#allocation4], %s364
        %s366 = sand.u32 %s140, 1
        %s367 = smul.addr %s366, 4
        %s368 = scalar_lea.vmem [#allocation9], %s367
        // Predicated region
        $region65: #{inception_aux_forward.1} parent=51 // pred_check
          %p369 = pneg %p153
        $region66: #{inception_aux_forward.1} parent=51 // pred_check_branch
          %371 = sbr.rel (%p369) target = $region68
        $region67: #{inception_aux_forward.1} parent=51 // pred_region
          %372 = dma.done %s365, 64
        $region68: #{inception_aux_forward.1} parent=51 // pred_fallthru
          _
        %s373 = sand.u32 %s22, 1
        %s374 = scalar_lea.sflag [#allocation4], %s373
        %s375 = sand.u32 %s166, 1
        %s376 = smul.addr %s375, 256
        %s377 = scalar_lea.vmem [#allocation10], %s376
        // Predicated region
        $region69: #{inception_aux_forward.1} parent=51 // pred_check
          %p378 = pneg %p179
        $region70: #{inception_aux_forward.1} parent=51 // pred_check_branch
          %380 = sbr.rel (%p378) target = $region72
        $region71: #{inception_aux_forward.1} parent=51 // pred_region
          %381 = dma.done %s374, 4096
        $region72: #{inception_aux_forward.1} parent=51 // pred_fallthru
          _
        // Predicated region
        $region73: #{inception_aux_forward.1} parent=51 // pred_check
          %p382 = pneg %p200
        $region74: #{inception_aux_forward.1} parent=51 // pred_check_branch
          %384 = sbr.rel (%p382) target = $region76
        $region75: #{inception_aux_forward.1} parent=51 // pred_region
          %385 = dma.done [#allocation7], 16
        $region76: #{inception_aux_forward.1} parent=51 // pred_fallthru
          _
        %p386 = pneg %p38
        %p387 = pneg %p35
        %p388 = pneg %p59
        %p389 = pneg %p56
        %p390 = pneg %p80
        %p391 = pneg %p77
        %p392 = pneg %p101
        %p393 = pneg %p98
        %s394 = sand.u32 %s22, 1
        %s395 = scalar_lea.sflag [#allocation4], %s394
        %s396 = sand.u32 %s114, 1
        %s397 = smul.addr %s396, 4096
        %s398 = scalar_lea.vmem [#allocation8], %s397
        %p399 = pneg %p127
        %p400 = pneg %p124
        %s401 = sand.u32 %s22, 1
        %s402 = scalar_lea.sflag [#allocation4], %s401
        %s403 = sand.u32 %s140, 1
        %s404 = smul.addr %s403, 4
        %s405 = scalar_lea.vmem [#allocation9], %s404
        %p406 = pneg %p153
        %p407 = pneg %p150
        %s408 = sand.u32 %s22, 1
        %s409 = scalar_lea.sflag [#allocation4], %s408
        %s410 = sand.u32 %s166, 1
        %s411 = smul.addr %s410, 256
        %s412 = scalar_lea.vmem [#allocation10], %s411
        %p413 = pneg %p179
        %p414 = pneg %p176
        %p415 = pneg %p200
        %p416 = pneg %p197
        %p417 = pneg %p221
        %p418 = pneg %p218
        %s419 = smul.u32 4, %s22
        %s420 = smul.u32 4, %s22
        %s421 = smul.u32 64, %s22
        %p423 = scmp.eq.s32.totalorder %s22, 0
        // Predicated region
        $region77: #{inception_aux_forward.1} parent=51 // pred_check
          %p424 = pneg %p423
        $region78: #{inception_aux_forward.1} parent=51 // pred_check_branch
          %426 = sbr.rel (%p424) target = $region80
        $region79: #{inception_aux_forward.1} parent=51 // pred_region
          %v427 = vld [vmem:[%s0] sm:$0xff]
          %v428 = vld [vmem:[%s0 + $0x8] sm:$0xff]
          %v429 = vld [vmem:[%s1] sm:$0xff]
          %v430 = vld [vmem:[%s1 + $0x8] sm:$0xff]
          %v431 = vld [vmem:[%s1 + $0x10] sm:$0xff]
          %v432 = vld [vmem:[%s1 + $0x18] sm:$0xff]
          %v433 = vld [vmem:[%s1 + $0x20] sm:$0xff]
          %v434 = vld [vmem:[%s1 + $0x28] sm:$0xff]
          %v435 = vld [vmem:[%s1 + $0x30] sm:$0xff]
          %v436 = vld [vmem:[%s1 + $0x38] sm:$0xff]
          %v437 = vld [vmem:[%s1 + $0x40] sm:$0xff]
          %v438 = vld [vmem:[%s1 + $0x48] sm:$0xff]
          %v439 = vld [vmem:[%s1 + $0x50] sm:$0xff]
          %v440 = vld [vmem:[%s1 + $0x58] sm:$0xff]
          %v441 = vld [vmem:[%s1 + $0x60] sm:$0xff]
          %v442 = vld [vmem:[%s1 + $0x68] sm:$0xff]
          %v443 = vld [vmem:[%s1 + $0x70] sm:$0xff]
          %v444 = vld [vmem:[%s1 + $0x78] sm:$0xff]
          %v445 = vld [vmem:[%s1 + $0x80] sm:$0xff]
          %v446 = vld [vmem:[%s1 + $0x88] sm:$0xff]
          %v447 = vld [vmem:[%s1 + $0x90] sm:$0xff]
          %v448 = vld [vmem:[%s1 + $0x98] sm:$0xff]
          %v449 = vld [vmem:[%s1 + $0xa0] sm:$0xff]
          %v450 = vld [vmem:[%s1 + $0xa8] sm:$0xff]
          %v451 = vld [vmem:[%s1 + $0xb0] sm:$0xff]
          %v452 = vld [vmem:[%s1 + $0xb8] sm:$0xff]
          %v453 = vld [vmem:[%s1 + $0xc0] sm:$0xf]
          %vm454 = vcmask 556032
          %v456 = vsel %vm454, %v428, 0
          %vm458 = vcmask 1043456
          %v460 = vsel %vm458, %v453, 0
          %462 = vmatprep.subr.mxu0 0.0
          %463 = vmatpush1.msra.mxu0 %v444
          %464 = vmatprep.subr.mxu0 0.0
          %465 = vmatpush1.msra.mxu0 %v443
          %466 = vmatprep.subr.mxu0 0.0
          %467 = vmatpush1.msra.mxu0 %v442
          %468 = vmatprep.subr.mxu0 0.0
          %469 = vmatpush1.msra.mxu0 %v441
          %470 = vmatprep.subr.mxu0 0.0
          %471 = vmatpush1.msra.mxu0 %v440
          %472 = vmatprep.subr.mxu0 0.0
          %473 = vmatpush1.msra.mxu0 %v439
          %474 = vmatprep.subr.mxu0 0.0
          %475 = vmatpush1.msra.mxu0 %v438
          %476 = vmatprep.subr.mxu0 0.0
          %477 = vmatpush1.msra.mxu0 %v437
          %478 = vmatprep.subr.mxu0 0.0
          %479 = vmatpush1.msra.mxu0 %v436
          %480 = vmatprep.subr.mxu0 0.0
          %481 = vmatpush1.msra.mxu0 %v435
          %482 = vmatprep.subr.mxu0 0.0
          %483 = vmatpush1.msra.mxu0 %v434
          %484 = vmatprep.subr.mxu0 0.0
          %485 = vmatpush1.msra.mxu0 %v433
          %486 = vmatprep.subr.mxu0 0.0
          %487 = vmatpush1.msra.mxu0 %v432
          %488 = vmatprep.subr.mxu0 0.0
          %489 = vmatpush1.msra.mxu0 %v431
          %490 = vmatprep.subr.mxu0 0.0
          %491 = vmatpush1.msra.mxu0 %v430
          %492 = vmatprep.subr.mxu0 0.0
          %493 = vmatpush1.msra.mxu0 %v429
          %494 = vmatprep.subr.mxu0 0.0
          %495 = vmatpush2.msra.mxu0 0.0
          %496 = vmatprep.subr.mxu0 0.0
          %497 = vmatpush2.msra.mxu0 0.0
          %498 = vmatprep.subr.mxu0 0.0
          %499 = vmatpush2.msra.mxu0 0.0
          %500 = vmatprep.subr.mxu0 0.0
          %501 = vmatpush2.msra.mxu0 0.0
          %502 = vmatprep.subr.mxu0 0.0
          %503 = vmatpush2.msra.mxu0 0.0
          %504 = vmatprep.subr.mxu0 0.0
          %505 = vmatpush2.msra.mxu0 0.0
          %506 = vmatprep.subr.mxu0 0.0
          %507 = vmatpush2.msra.mxu0 0.0
          %508 = vmatprep.subr.mxu0 0.0
          %509 = vmatpush2.msra.mxu0 %v460
          %510 = vmatprep.subr.mxu0 0.0
          %511 = vmatpush2.msra.mxu0 %v452
          %512 = vmatprep.subr.mxu0 0.0
          %513 = vmatpush2.msra.mxu0 %v451
          %514 = vmatprep.subr.mxu0 0.0
          %515 = vmatpush2.msra.mxu0 %v450
          %516 = vmatprep.subr.mxu0 0.0
          %517 = vmatpush2.msra.mxu0 %v449
          %518 = vmatprep.subr.mxu0 0.0
          %519 = vmatpush2.msra.mxu0 %v448
          %520 = vmatprep.subr.mxu0 0.0
          %521 = vmatpush2.msra.mxu0 %v447
          %522 = vmatprep.subr.mxu0 0.0
          %523 = vmatpush2.msra.mxu0 %v446
          %524 = vmatprep.subr.mxu0 0.0
          %525 = vmatpush2.msra.mxu0 %v445
          %526 = vmatprep.mubr.f32.mxu0 %v456
          %527 = vmatmul.mubr.f32.gmra.mxu0 %v427
          %v528 = vpop.f32.mrf.mxu0
          %v529 = vadd.f32 0.0, %v528
          %v530 = vpop.f32.mrf.mxu0
          %531 = vdwg.mxu0
          %v532 = vmul.f32 %v529, 0.04
          %533 = vxpose.xlu0.b32.start [1/16] %v532, 128
          %534 = vxpose.xlu0.b32.cont [2/16] 0.0, 128
          %535 = vxpose.xlu0.b32.cont [3/16] 0.0, 128
          %536 = vxpose.xlu0.b32.cont [4/16] 0.0, 128
          %537 = vxpose.xlu0.b32.cont [5/16] 0.0, 128
          %538 = vxpose.xlu0.b32.cont [6/16] 0.0, 128
          %539 = vxpose.xlu0.b32.cont [7/16] 0.0, 128
          %540 = vxpose.xlu0.b32.cont [8/16] 0.0, 128
          %541 = vxpose.xlu0.b32.cont [9/16] 0.0, 128
          %542 = vxpose.xlu0.b32.cont [10/16] 0.0, 128
          %543 = vxpose.xlu0.b32.cont [11/16] 0.0, 128
          %544 = vxpose.xlu0.b32.cont [12/16] 0.0, 128
          %545 = vxpose.xlu0.b32.cont [13/16] 0.0, 128
          %546 = vxpose.xlu0.b32.cont [14/16] 0.0, 128
          %547 = vxpose.xlu0.b32.cont [15/16] 0.0, 128
          %548 = vxpose.xlu0.b32.end [16/16] 0.0, 128
          %v549 = vpop.trf.xlu0
          %v550 = vpop.trf.xlu0
          %v551 = vpop.trf.xlu0
          %v552 = vpop.trf.xlu0
          %v553 = vpop.trf.xlu0
          %v554 = vpop.trf.xlu0
          %v555 = vpop.trf.xlu0
          %v556 = vpop.trf.xlu0
          %v557 = vpop.trf.xlu0
          %v558 = vpop.trf.xlu0
          %v559 = vpop.trf.xlu0
          %v560 = vpop.trf.xlu0
          %v561 = vpop.trf.xlu0
          %v562 = vpop.trf.xlu0
          %v563 = vpop.trf.xlu0
          %v564 = vpop.trf.xlu0
          %v565 = vld [vmem:[#allocation3] sm:$0xf]
          %v566 = vld [vmem:[#allocation6] sm:$0x1]
          %v568 = vlaneseq
          %v569 = vshrl.u32 %v568, 7
          %v570 = vsub.s32 0, %v569
          %v571 = vrot.slane %v566, %v570
          %vm573 = vcmask 31744
          %v575 = vsel %vm573, %v549, 0
          %v578 = vsel %vm573, %v550, 0
          %v581 = vsel %vm458, %v565, 0
          %583 = vmatprep.subr.mxu0 0.0
          %584 = vmatpush1.msra.mxu0 0.0
          %585 = vmatprep.subr.mxu0 0.0
          %586 = vmatpush1.msra.mxu0 0.0
          %587 = vmatprep.subr.mxu0 0.0
          %588 = vmatpush1.msra.mxu0 0.0
          %589 = vmatprep.subr.mxu0 0.0
          %590 = vmatpush1.msra.mxu0 0.0
          %591 = vmatprep.subr.mxu0 0.0
          %592 = vmatpush1.msra.mxu0 0.0
          %593 = vmatprep.subr.mxu0 0.0
          %594 = vmatpush1.msra.mxu0 0.0
          %595 = vmatprep.subr.mxu0 0.0
          %596 = vmatpush1.msra.mxu0 0.0
          %597 = vmatprep.subr.mxu0 0.0
          %598 = vmatpush1.msra.mxu0 0.0
          %599 = vmatprep.subr.mxu0 0.0
          %600 = vmatpush1.msra.mxu0 0.0
          %601 = vmatprep.subr.mxu0 0.0
          %602 = vmatpush1.msra.mxu0 0.0
          %603 = vmatprep.subr.mxu0 0.0
          %604 = vmatpush1.msra.mxu0 0.0
          %605 = vmatprep.subr.mxu0 0.0
          %606 = vmatpush1.msra.mxu0 0.0
          %607 = vmatprep.subr.mxu0 0.0
          %608 = vmatpush1.msra.mxu0 0.0
          %609 = vmatprep.subr.mxu0 0.0
          %610 = vmatpush1.msra.mxu0 0.0
          %611 = vmatprep.subr.mxu0 0.0
          %612 = vmatpush1.msra.mxu0 0.0
          %613 = vmatprep.subr.mxu0 0.0
          %614 = vmatpush1.msra.mxu0 %v581
          %615 = vmatprep.subr.mxu0 0.0
          %616 = vmatpush2.msra.mxu0 0.0
          %617 = vmatprep.subr.mxu0 0.0
          %618 = vmatpush2.msra.mxu0 0.0
          %619 = vmatprep.subr.mxu0 0.0
          %620 = vmatpush2.msra.mxu0 0.0
          %621 = vmatprep.subr.mxu0 0.0
          %622 = vmatpush2.msra.mxu0 0.0
          %623 = vmatprep.subr.mxu0 0.0
          %624 = vmatpush2.msra.mxu0 0.0
          %625 = vmatprep.subr.mxu0 0.0
          %626 = vmatpush2.msra.mxu0 0.0
          %627 = vmatprep.subr.mxu0 0.0
          %628 = vmatpush2.msra.mxu0 0.0
          %629 = vmatprep.subr.mxu0 0.0
          %630 = vmatpush2.msra.mxu0 0.0
          %631 = vmatprep.subr.mxu0 0.0
          %632 = vmatpush2.msra.mxu0 0.0
          %633 = vmatprep.subr.mxu0 0.0
          %634 = vmatpush2.msra.mxu0 0.0
          %635 = vmatprep.subr.mxu0 0.0
          %636 = vmatpush2.msra.mxu0 0.0
          %637 = vmatprep.subr.mxu0 0.0
          %638 = vmatpush2.msra.mxu0 0.0
          %639 = vmatprep.subr.mxu0 0.0
          %640 = vmatpush2.msra.mxu0 0.0
          %641 = vmatprep.subr.mxu0 0.0
          %642 = vmatpush2.msra.mxu0 0.0
          %643 = vmatprep.subr.mxu0 0.0
          %644 = vmatpush2.msra.mxu0 0.0
          %645 = vmatprep.subr.mxu0 0.0
          %646 = vmatpush2.msra.mxu0 0.0
          %647 = vmatprep.mubr.f32.mxu0 0.0
          %648 = vmatmul.mubr.f32.gmra.mxu0 %v575
          %v649 = vpop.f32.mrf.mxu0
          %v650 = vadd.f32 %v571, %v649
          %v651 = vpop.f32.mrf.mxu0
          %652 = vmatprep.mubr.f32.mxu0 0.0
          %653 = vmatmul.mubr.f32.gmra.mxu0 %v578
          %v654 = vpop.f32.mrf.mxu0
          %v655 = vadd.f32 %v571, %v654
          %v656 = vpop.f32.mrf.mxu0
          %657 = vdwg.mxu0
          %v658 = vmax.f32 %v650, 0.0
          %v659 = vmax.f32 %v655, 0.0
          %v660 = vpack.c.bf16 %v659, %v658
          %vm661 = vcmask 1040384
          %vm662 = vsmask.f32 256
          %vm663 = vmand %vm661, %vm662
          %v664 = vld [vmem:[#allocation2] sm:$0x1]
          %v665 = vsel %vm663, %v660, %v664
          %666 = vst [vmem:[#allocation2] sm:$0x1] %v665
          %v669 = vunpack.c.l.s4 1966171168
          %v670 = vunpack.c.0.s8 %v669
          %v671 = vlaneseq
          %v672 = vshrl.u32 %v671, 7
          %v673 = vsub.s32 %v670, %v672
          %v674 = vrot.slane %v660, %v673
          %v676 = vunpack.c.l.s4 1966171168
          %v677 = vunpack.c.0.s8 %v676
          %v678 = vlaneseq
          %v679 = vshrl.u32 %v678, 7
          %v680 = vsub.s32 %v677, %v679
          %v681 = vrot.slane %v674, %v680
          %v683 = vshrl.u32 %v681, 16
          %v685 = vrot.slane %v683, 7
          %v686 = vrot.slane %v685, 1
          %v688 = vld [vmem:[#allocation2 + $0x1] sm:$0x1]
          %v689 = vsel %vm663, %v686, %v688
          %690 = vst [vmem:[#allocation2 + $0x1] sm:$0x1] %v689
          %v691 = vcombine.high %v674, %v674
          %v693 = vunpack.c.l.s4 1966171168
          %v694 = vunpack.c.0.s8 %v693
          %v695 = vlaneseq
          %v696 = vshrl.u32 %v695, 7
          %v697 = vsub.s32 %v694, %v696
          %v698 = vrot.slane %v691, %v697
          %v700 = vld [vmem:[#allocation2 + $0x2] sm:$0x1]
          %v701 = vsel %vm663, %v698, %v700
          %702 = vst [vmem:[#allocation2 + $0x2] sm:$0x1] %v701
          %v704 = vshrl.u32 %v698, 16
          %v706 = vrot.slane %v704, 7
          %v707 = vrot.slane %v706, 1
          %v709 = vld [vmem:[#allocation2 + $0x3] sm:$0x1]
          %v710 = vsel %vm663, %v707, %v709
          %711 = vst [vmem:[#allocation2 + $0x3] sm:$0x1] %v710
          %v712 = vcombine.high %v681, %v681
          %v714 = vld [vmem:[#allocation2 + $0x4] sm:$0x1]
          %v715 = vsel %vm663, %v712, %v714
          %716 = vst [vmem:[#allocation2 + $0x4] sm:$0x1] %v715
          %v718 = vshrl.u32 %v712, 16
          %v720 = vrot.slane %v718, 7
          %v721 = vrot.slane %v720, 1
          %v723 = vld [vmem:[#allocation2 + $0x5] sm:$0x1]
          %v724 = vsel %vm663, %v721, %v723
          %725 = vst [vmem:[#allocation2 + $0x5] sm:$0x1] %v724
          %v726 = vcombine.high %v698, %v698
          %v728 = vld [vmem:[#allocation2 + $0x6] sm:$0x1]
          %v729 = vsel %vm663, %v726, %v728
          %730 = vst [vmem:[#allocation2 + $0x6] sm:$0x1] %v729
          %v732 = vshrl.u32 %v726, 16
          %v734 = vrot.slane %v732, 7
          %v735 = vrot.slane %v734, 1
          %v737 = vld [vmem:[#allocation2 + $0x7] sm:$0x1]
          %v738 = vsel %vm663, %v735, %v737
          %739 = vst [vmem:[#allocation2 + $0x7] sm:$0x1] %v738
          %v740 = vcombine.high %v660, %v660
          %v742 = vunpack.c.l.s4 1966171168
          %v743 = vunpack.c.0.s8 %v742
          %v744 = vlaneseq
          %v745 = vshrl.u32 %v744, 7
          %v746 = vsub.s32 %v743, %v745
          %v747 = vrot.slane %v740, %v746
          %v749 = vunpack.c.l.s4 1966171168
          %v750 = vunpack.c.0.s8 %v749
          %v751 = vlaneseq
          %v752 = vshrl.u32 %v751, 7
          %v753 = vsub.s32 %v750, %v752
          %v754 = vrot.slane %v747, %v753
          %v756 = vld [vmem:[#allocation2 + $0x8] sm:$0x1]
          %v757 = vsel %vm663, %v754, %v756
          %758 = vst [vmem:[#allocation2 + $0x8] sm:$0x1] %v757
          %v760 = vshrl.u32 %v754, 16
          %v762 = vrot.slane %v760, 7
          %v763 = vrot.slane %v762, 1
          %v765 = vld [vmem:[#allocation2 + $0x9] sm:$0x1]
          %v766 = vsel %vm663, %v763, %v765
          %767 = vst [vmem:[#allocation2 + $0x9] sm:$0x1] %v766
          %v768 = vcombine.high %v747, %v747
          %v770 = vunpack.c.l.s4 1966171168
          %v771 = vunpack.c.0.s8 %v770
          %v772 = vlaneseq
          %v773 = vshrl.u32 %v772, 7
          %v774 = vsub.s32 %v771, %v773
          %v775 = vrot.slane %v768, %v774
          %v777 = vld [vmem:[#allocation2 + $0xa] sm:$0x1]
          %v778 = vsel %vm663, %v775, %v777
          %779 = vst [vmem:[#allocation2 + $0xa] sm:$0x1] %v778
          %v781 = vshrl.u32 %v775, 16
          %v783 = vrot.slane %v781, 7
          %v784 = vrot.slane %v783, 1
          %v786 = vld [vmem:[#allocation2 + $0xb] sm:$0x1]
          %v787 = vsel %vm663, %v784, %v786
          %788 = vst [vmem:[#allocation2 + $0xb] sm:$0x1] %v787
          %v789 = vcombine.high %v754, %v754
          %v791 = vld [vmem:[#allocation2 + $0xc] sm:$0x1]
          %v792 = vsel %vm663, %v789, %v791
          %793 = vst [vmem:[#allocation2 + $0xc] sm:$0x1] %v792
          %v795 = vshrl.u32 %v789, 16
          %v797 = vrot.slane %v795, 7
          %v798 = vrot.slane %v797, 1
          %v800 = vld [vmem:[#allocation2 + $0xd] sm:$0x1]
          %v801 = vsel %vm663, %v798, %v800
          %802 = vst [vmem:[#allocation2 + $0xd] sm:$0x1] %v801
          %v803 = vcombine.high %v775, %v775
          %v805 = vld [vmem:[#allocation2 + $0xe] sm:$0x1]
          %v806 = vsel %vm663, %v803, %v805
          %807 = vst [vmem:[#allocation2 + $0xe] sm:$0x1] %v806
          %v809 = vshrl.u32 %v803, 16
          %v811 = vrot.slane %v809, 7
          %v812 = vrot.slane %v811, 1
          %v814 = vld [vmem:[#allocation2 + $0xf] sm:$0x1]
          %v815 = vsel %vm663, %v812, %v814
          %816 = vst [vmem:[#allocation2 + $0xf] sm:$0x1] %v815
          %v817 = vld [vmem:[#allocation3] sm:$0xf]
          %v818 = vld [vmem:[#allocation6] sm:$0x1]
          %v820 = vlaneseq
          %v821 = vshrl.u32 %v820, 7
          %v822 = vsub.s32 0, %v821
          %v823 = vrot.slane %v818, %v822
          %825 = vrot.lane.b32.xlu0 %v549, 124
          %v826 = vpop.permute.xlu0 %825
          %827 = vrot.lane.b32.xlu0 %v550, 124
          %v828 = vpop.permute.xlu0 %827
          %v829 = vsel %vm573, %v826, 0
          %v831 = vsel %vm573, %v828, 0
          %v834 = vsel %vm458, %v817, 0
          %836 = vmatprep.subr.mxu0 0.0
          %837 = vmatpush1.msra.mxu0 0.0
          %838 = vmatprep.subr.mxu0 0.0
          %839 = vmatpush1.msra.mxu0 0.0
          %840 = vmatprep.subr.mxu0 0.0
          %841 = vmatpush1.msra.mxu0 0.0
          %842 = vmatprep.subr.mxu0 0.0
          %843 = vmatpush1.msra.mxu0 0.0
          %844 = vmatprep.subr.mxu0 0.0
          %845 = vmatpush1.msra.mxu0 0.0
          %846 = vmatprep.subr.mxu0 0.0
          %847 = vmatpush1.msra.mxu0 0.0
          %848 = vmatprep.subr.mxu0 0.0
          %849 = vmatpush1.msra.mxu0 0.0
          %850 = vmatprep.subr.mxu0 0.0
          %851 = vmatpush1.msra.mxu0 0.0
          %852 = vmatprep.subr.mxu0 0.0
          %853 = vmatpush1.msra.mxu0 0.0
          %854 = vmatprep.subr.mxu0 0.0
          %855 = vmatpush1.msra.mxu0 0.0
          %856 = vmatprep.subr.mxu0 0.0
          %857 = vmatpush1.msra.mxu0 0.0
          %858 = vmatprep.subr.mxu0 0.0
          %859 = vmatpush1.msra.mxu0 0.0
          %860 = vmatprep.subr.mxu0 0.0
          %861 = vmatpush1.msra.mxu0 0.0
          %862 = vmatprep.subr.mxu0 0.0
          %863 = vmatpush1.msra.mxu0 0.0
          %864 = vmatprep.subr.mxu0 0.0
          %865 = vmatpush1.msra.mxu0 0.0
          %866 = vmatprep.subr.mxu0 0.0
          %867 = vmatpush1.msra.mxu0 %v834
          %868 = vmatprep.subr.mxu0 0.0
          %869 = vmatpush2.msra.mxu0 0.0
          %870 = vmatprep.subr.mxu0 0.0
          %871 = vmatpush2.msra.mxu0 0.0
          %872 = vmatprep.subr.mxu0 0.0
          %873 = vmatpush2.msra.mxu0 0.0
          %874 = vmatprep.subr.mxu0 0.0
          %875 = vmatpush2.msra.mxu0 0.0
          %876 = vmatprep.subr.mxu0 0.0
          %877 = vmatpush2.msra.mxu0 0.0
          %878 = vmatprep.subr.mxu0 0.0
          %879 = vmatpush2.msra.mxu0 0.0
          %880 = vmatprep.subr.mxu0 0.0
          %881 = vmatpush2.msra.mxu0 0.0
          %882 = vmatprep.subr.mxu0 0.0
          %883 = vmatpush2.msra.mxu0 0.0
          %884 = vmatprep.subr.mxu0 0.0
          %885 = vmatpush2.msra.mxu0 0.0
          %886 = vmatprep.subr.mxu0 0.0
          %887 = vmatpush2.msra.mxu0 0.0
          %888 = vmatprep.subr.mxu0 0.0
          %889 = vmatpush2.msra.mxu0 0.0
          %890 = vmatprep.subr.mxu0 0.0
          %891 = vmatpush2.msra.mxu0 0.0
          %892 = vmatprep.subr.mxu0 0.0
          %893 = vmatpush2.msra.mxu0 0.0
          %894 = vmatprep.subr.mxu0 0.0
          %895 = vmatpush2.msra.mxu0 0.0
          %896 = vmatprep.subr.mxu0 0.0
          %897 = vmatpush2.msra.mxu0 0.0
          %898 = vmatprep.subr.mxu0 0.0
          %899 = vmatpush2.msra.mxu0 0.0
          %900 = vmatprep.mubr.f32.mxu0 0.0
          %901 = vmatmul.mubr.f32.gmra.mxu0 %v829
          %v902 = vpop.f32.mrf.mxu0
          %v903 = vadd.f32 %v823, %v902
          %v904 = vpop.f32.mrf.mxu0
          %905 = vmatprep.mubr.f32.mxu0 0.0
          %906 = vmatmul.mubr.f32.gmra.mxu0 %v831
          %v907 = vpop.f32.mrf.mxu0
          %v908 = vadd.f32 %v823, %v907
          %v909 = vpop.f32.mrf.mxu0
          %910 = vdwg.mxu0
          %v911 = vmax.f32 %v903, 0.0
          %v912 = vmax.f32 %v908, 0.0
          %v913 = vpack.c.bf16 %v912, %v911
          %v916 = vunpack.c.l.s4 1966171168
          %v917 = vunpack.c.0.s8 %v916
          %v918 = vlaneseq
          %v919 = vshrl.u32 %v918, 7
          %v920 = vsub.s32 %v917, %v919
          %v921 = vrot.slane %v913, %v920
          %v923 = vunpack.c.l.s4 1966171168
          %v924 = vunpack.c.0.s8 %v923
          %v925 = vlaneseq
          %v926 = vshrl.u32 %v925, 7
          %v927 = vsub.s32 %v924, %v926
          %v928 = vrot.slane %v921, %v927
          %v930 = vshll.u32 %v928, 16
          %vm933 = vsmask.f32 7938
          %vm934 = vmand %vm661, %vm933
          %v935 = vld [vmem:[#allocation2] sm:$0x1]
          %v936 = vsel %vm934, %v930, %v935
          %937 = vst [vmem:[#allocation2] sm:$0x1] %v936
          %v938 = vld [vmem:[#allocation2 + $0x1] sm:$0x1]
          %v939 = vsel %vm934, %v913, %v938
          %940 = vst [vmem:[#allocation2 + $0x1] sm:$0x1] %v939
          %v941 = vcombine.high %v921, %v921
          %v943 = vunpack.c.l.s4 1966171168
          %v944 = vunpack.c.0.s8 %v943
          %v945 = vlaneseq
          %v946 = vshrl.u32 %v945, 7
          %v947 = vsub.s32 %v944, %v946
          %v948 = vrot.slane %v941, %v947
          %v950 = vshll.u32 %v948, 16
          %v953 = vld [vmem:[#allocation2 + $0x2] sm:$0x1]
          %v954 = vsel %vm934, %v950, %v953
          %955 = vst [vmem:[#allocation2 + $0x2] sm:$0x1] %v954
          %v957 = vld [vmem:[#allocation2 + $0x3] sm:$0x1]
          %v958 = vsel %vm934, %v948, %v957
          %959 = vst [vmem:[#allocation2 + $0x3] sm:$0x1] %v958
          %v960 = vcombine.high %v928, %v928
          %v962 = vshll.u32 %v960, 16
          %v965 = vld [vmem:[#allocation2 + $0x4] sm:$0x1]
          %v966 = vsel %vm934, %v962, %v965
          %967 = vst [vmem:[#allocation2 + $0x4] sm:$0x1] %v966
          %v969 = vld [vmem:[#allocation2 + $0x5] sm:$0x1]
          %v970 = vsel %vm934, %v960, %v969
          %971 = vst [vmem:[#allocation2 + $0x5] sm:$0x1] %v970
          %v972 = vcombine.high %v948, %v948
          %v974 = vshll.u32 %v972, 16
          %v977 = vld [vmem:[#allocation2 + $0x6] sm:$0x1]
          %v978 = vsel %vm934, %v974, %v977
          %979 = vst [vmem:[#allocation2 + $0x6] sm:$0x1] %v978
          %v981 = vld [vmem:[#allocation2 + $0x7] sm:$0x1]
          %v982 = vsel %vm934, %v972, %v981
          %983 = vst [vmem:[#allocation2 + $0x7] sm:$0x1] %v982
          %v984 = vcombine.high %v913, %v913
          %v986 = vunpack.c.l.s4 1966171168
          %v987 = vunpack.c.0.s8 %v986
          %v988 = vlaneseq
          %v989 = vshrl.u32 %v988, 7
          %v990 = vsub.s32 %v987, %v989
          %v991 = vrot.slane %v984, %v990
          %v993 = vunpack.c.l.s4 1966171168
          %v994 = vunpack.c.0.s8 %v993
          %v995 = vlaneseq
          %v996 = vshrl.u32 %v995, 7
          %v997 = vsub.s32 %v994, %v996
          %v998 = vrot.slane %v991, %v997
          %v1000 = vshll.u32 %v998, 16
          %v1003 = vld [vmem:[#allocation2 + $0x8] sm:$0x1]
          %v1004 = vsel %vm934, %v1000, %v1003
          %1005 = vst [vmem:[#allocation2 + $0x8] sm:$0x1] %v1004
          %v1007 = vld [vmem:[#allocation2 + $0x9] sm:$0x1]
          %v1008 = vsel %vm934, %v998, %v1007
          %1009 = vst [vmem:[#allocation2 + $0x9] sm:$0x1] %v1008
          %v1010 = vcombine.high %v991, %v991
          %v1012 = vunpack.c.l.s4 1966171168
          %v1013 = vunpack.c.0.s8 %v1012
          %v1014 = vlaneseq
          %v1015 = vshrl.u32 %v1014, 7
          %v1016 = vsub.s32 %v1013, %v1015
          %v1017 = vrot.slane %v1010, %v1016
          %v1019 = vshll.u32 %v1017, 16
          %v1022 = vld [vmem:[#allocation2 + $0xa] sm:$0x1]
          %v1023 = vsel %vm934, %v1019, %v1022
          %1024 = vst [vmem:[#allocation2 + $0xa] sm:$0x1] %v1023
          %v1026 = vld [vmem:[#allocation2 + $0xb] sm:$0x1]
          %v1027 = vsel %vm934, %v1017, %v1026
          %1028 = vst [vmem:[#allocation2 + $0xb] sm:$0x1] %v1027
          %v1029 = vcombine.high %v998, %v998
          %v1031 = vshll.u32 %v1029, 16
          %v1034 = vld [vmem:[#allocation2 + $0xc] sm:$0x1]
          %v1035 = vsel %vm934, %v1031, %v1034
          %1036 = vst [vmem:[#allocation2 + $0xc] sm:$0x1] %v1035
          %v1038 = vld [vmem:[#allocation2 + $0xd] sm:$0x1]
          %v1039 = vsel %vm934, %v1029, %v1038
          %1040 = vst [vmem:[#allocation2 + $0xd] sm:$0x1] %v1039
          %v1041 = vcombine.high %v1017, %v1017
          %v1043 = vshll.u32 %v1041, 16
          %v1046 = vld [vmem:[#allocation2 + $0xe] sm:$0x1]
          %v1047 = vsel %vm934, %v1043, %v1046
          %1048 = vst [vmem:[#allocation2 + $0xe] sm:$0x1] %v1047
          %v1050 = vld [vmem:[#allocation2 + $0xf] sm:$0x1]
          %v1051 = vsel %vm934, %v1041, %v1050
          %1052 = vst [vmem:[#allocation2 + $0xf] sm:$0x1] %v1051
          %v1053 = vld [vmem:[#allocation11] sm:$0x1]
          %v1055 = vlaneseq
          %v1056 = vshrl.u32 %v1055, 7
          %v1057 = vsub.s32 0, %v1056
          %v1058 = vrot.slane %v1053, %v1057
          %1060 = vst [vmem:[#allocation12] sm:$0x3] %v1058
        $region80: #{inception_aux_forward.1} parent=51 // pred_fallthru
          _
        %v1061 = vld [vmem:[#allocation2] sm:$0xff]
        %v1062 = vld [vmem:[#allocation2 + $0x8] sm:$0xff]
        %v1063 = vld [vmem:[%s359] sm:$0xff]
        %v1064 = vld [vmem:[%s359 + $0x8] sm:$0xff]
        %v1065 = vld [vmem:[%s359 + $0x10] sm:$0xff]
        %v1066 = vld [vmem:[%s359 + $0x18] sm:$0xff]
        %v1067 = vld [vmem:[%s359 + $0x20] sm:$0xff]
        %v1068 = vld [vmem:[%s359 + $0x28] sm:$0xff]
        %v1069 = vld [vmem:[%s359 + $0x30] sm:$0xff]
        %v1070 = vld [vmem:[%s359 + $0x38] sm:$0xff]
        %v1071 = vld [vmem:[%s359 + $0x40] sm:$0xff]
        %v1072 = vld [vmem:[%s359 + $0x48] sm:$0xff]
        %v1073 = vld [vmem:[%s359 + $0x50] sm:$0xff]
        %v1074 = vld [vmem:[%s359 + $0x58] sm:$0xff]
        %v1075 = vld [vmem:[%s359 + $0x60] sm:$0xff]
        %v1076 = vld [vmem:[%s359 + $0x68] sm:$0xff]
        %v1077 = vld [vmem:[%s359 + $0x70] sm:$0xff]
        %v1078 = vld [vmem:[%s359 + $0x78] sm:$0xff]
        %v1079 = vld [vmem:[%s359 + $0x80] sm:$0xff]
        %v1080 = vld [vmem:[%s359 + $0x88] sm:$0xff]
        %v1081 = vld [vmem:[%s359 + $0x90] sm:$0xff]
        %v1082 = vld [vmem:[%s359 + $0x98] sm:$0xff]
        %v1083 = vld [vmem:[%s359 + $0xa0] sm:$0xff]
        %v1084 = vld [vmem:[%s359 + $0xa8] sm:$0xff]
        %v1085 = vld [vmem:[%s359 + $0xb0] sm:$0xff]
        %v1086 = vld [vmem:[%s359 + $0xb8] sm:$0xff]
        %v1087 = vld [vmem:[%s359 + $0xc0] sm:$0xff]
        %v1088 = vld [vmem:[%s359 + $0xc8] sm:$0xff]
        %v1089 = vld [vmem:[%s359 + $0xd0] sm:$0xff]
        %v1090 = vld [vmem:[%s359 + $0xd8] sm:$0xff]
        %v1091 = vld [vmem:[%s359 + $0xe0] sm:$0xff]
        %v1092 = vld [vmem:[%s359 + $0xe8] sm:$0xff]
        %v1093 = vld [vmem:[%s359 + $0xf0] sm:$0xff]
        %v1094 = vld [vmem:[%s359 + $0xf8] sm:$0xff]
        %v1095 = vld [vmem:[%s359 + $0x100] sm:$0xff]
        %v1096 = vld [vmem:[%s359 + $0x108] sm:$0xff]
        %v1097 = vld [vmem:[%s359 + $0x110] sm:$0xff]
        %v1098 = vld [vmem:[%s359 + $0x118] sm:$0xff]
        %v1099 = vld [vmem:[%s359 + $0x120] sm:$0xff]
        %v1100 = vld [vmem:[%s359 + $0x128] sm:$0xff]
        %v1101 = vld [vmem:[%s359 + $0x130] sm:$0xff]
        %v1102 = vld [vmem:[%s359 + $0x138] sm:$0xff]
        %v1103 = vld [vmem:[%s359 + $0x140] sm:$0xff]
        %v1104 = vld [vmem:[%s359 + $0x148] sm:$0xff]
        %v1105 = vld [vmem:[%s359 + $0x150] sm:$0xff]
        %v1106 = vld [vmem:[%s359 + $0x158] sm:$0xff]
        %v1107 = vld [vmem:[%s359 + $0x160] sm:$0xff]
        %v1108 = vld [vmem:[%s359 + $0x168] sm:$0xff]
        %v1109 = vld [vmem:[%s359 + $0x170] sm:$0xff]
        %v1110 = vld [vmem:[%s359 + $0x178] sm:$0xff]
        %v1111 = vld [vmem:[%s359 + $0x180] sm:$0xff]
        %v1112 = vld [vmem:[%s359 + $0x188] sm:$0xff]
        %v1113 = vld [vmem:[%s359 + $0x190] sm:$0xff]
        %v1114 = vld [vmem:[%s359 + $0x198] sm:$0xff]
        %v1115 = vld [vmem:[%s359 + $0x1a0] sm:$0xff]
        %v1116 = vld [vmem:[%s359 + $0x1a8] sm:$0xff]
        %v1117 = vld [vmem:[%s359 + $0x1b0] sm:$0xff]
        %v1118 = vld [vmem:[%s359 + $0x1b8] sm:$0xff]
        %v1119 = vld [vmem:[%s359 + $0x1c0] sm:$0xff]
        %v1120 = vld [vmem:[%s359 + $0x1c8] sm:$0xff]
        %v1121 = vld [vmem:[%s359 + $0x1d0] sm:$0xff]
        %v1122 = vld [vmem:[%s359 + $0x1d8] sm:$0xff]
        %v1123 = vld [vmem:[%s359 + $0x1e0] sm:$0xff]
        %v1124 = vld [vmem:[%s359 + $0x1e8] sm:$0xff]
        %v1125 = vld [vmem:[%s359 + $0x1f0] sm:$0xff]
        %v1126 = vld [vmem:[%s359 + $0x1f8] sm:$0xff]
        %v1127 = vld [vmem:[%s359 + $0x200] sm:$0xff]
        %v1128 = vld [vmem:[%s359 + $0x208] sm:$0xff]
        %v1129 = vld [vmem:[%s359 + $0x210] sm:$0xff]
        %v1130 = vld [vmem:[%s359 + $0x218] sm:$0xff]
        %v1131 = vld [vmem:[%s359 + $0x220] sm:$0xff]
        %v1132 = vld [vmem:[%s359 + $0x228] sm:$0xff]
        %v1133 = vld [vmem:[%s359 + $0x230] sm:$0xff]
        %v1134 = vld [vmem:[%s359 + $0x238] sm:$0xff]
        %v1135 = vld [vmem:[%s359 + $0x240] sm:$0xff]
        %v1136 = vld [vmem:[%s359 + $0x248] sm:$0xff]
        %v1137 = vld [vmem:[%s359 + $0x250] sm:$0xff]
        %v1138 = vld [vmem:[%s359 + $0x258] sm:$0xff]
        %v1139 = vld [vmem:[%s359 + $0x260] sm:$0xff]
        %v1140 = vld [vmem:[%s359 + $0x268] sm:$0xff]
        %v1141 = vld [vmem:[%s359 + $0x270] sm:$0xff]
        %v1142 = vld [vmem:[%s359 + $0x278] sm:$0xff]
        %v1143 = vld [vmem:[%s359 + $0x280] sm:$0xff]
        %v1144 = vld [vmem:[%s359 + $0x288] sm:$0xff]
        %v1145 = vld [vmem:[%s359 + $0x290] sm:$0xff]
        %v1146 = vld [vmem:[%s359 + $0x298] sm:$0xff]
        %v1147 = vld [vmem:[%s359 + $0x2a0] sm:$0xff]
        %v1148 = vld [vmem:[%s359 + $0x2a8] sm:$0xff]
        %v1149 = vld [vmem:[%s359 + $0x2b0] sm:$0xff]
        %v1150 = vld [vmem:[%s359 + $0x2b8] sm:$0xff]
        %v1151 = vld [vmem:[%s359 + $0x2c0] sm:$0xff]
        %v1152 = vld [vmem:[%s359 + $0x2c8] sm:$0xff]
        %v1153 = vld [vmem:[%s359 + $0x2d0] sm:$0xff]
        %v1154 = vld [vmem:[%s359 + $0x2d8] sm:$0xff]
        %v1155 = vld [vmem:[%s359 + $0x2e0] sm:$0xff]
        %v1156 = vld [vmem:[%s359 + $0x2e8] sm:$0xff]
        %v1157 = vld [vmem:[%s359 + $0x2f0] sm:$0xff]
        %v1158 = vld [vmem:[%s359 + $0x2f8] sm:$0xff]
        %v1159 = vld [vmem:[%s359 + $0x300] sm:$0xff]
        %v1160 = vld [vmem:[%s359 + $0x308] sm:$0xff]
        %v1161 = vld [vmem:[%s359 + $0x310] sm:$0xff]
        %v1162 = vld [vmem:[%s359 + $0x318] sm:$0xff]
        %v1163 = vld [vmem:[%s359 + $0x320] sm:$0xff]
        %v1164 = vld [vmem:[%s359 + $0x328] sm:$0xff]
        %v1165 = vld [vmem:[%s359 + $0x330] sm:$0xff]
        %v1166 = vld [vmem:[%s359 + $0x338] sm:$0xff]
        %v1167 = vld [vmem:[%s359 + $0x340] sm:$0xff]
        %v1168 = vld [vmem:[%s359 + $0x348] sm:$0xff]
        %v1169 = vld [vmem:[%s359 + $0x350] sm:$0xff]
        %v1170 = vld [vmem:[%s359 + $0x358] sm:$0xff]
        %v1171 = vld [vmem:[%s359 + $0x360] sm:$0xff]
        %v1172 = vld [vmem:[%s359 + $0x368] sm:$0xff]
        %v1173 = vld [vmem:[%s359 + $0x370] sm:$0xff]
        %v1174 = vld [vmem:[%s359 + $0x378] sm:$0xff]
        %v1175 = vld [vmem:[%s359 + $0x380] sm:$0xff]
        %v1176 = vld [vmem:[%s359 + $0x388] sm:$0xff]
        %v1177 = vld [vmem:[%s359 + $0x390] sm:$0xff]
        %v1178 = vld [vmem:[%s359 + $0x398] sm:$0xff]
        %v1179 = vld [vmem:[%s359 + $0x3a0] sm:$0xff]
        %v1180 = vld [vmem:[%s359 + $0x3a8] sm:$0xff]
        %v1181 = vld [vmem:[%s359 + $0x3b0] sm:$0xff]
        %v1182 = vld [vmem:[%s359 + $0x3b8] sm:$0xff]
        %v1183 = vld [vmem:[%s359 + $0x3c0] sm:$0xff]
        %v1184 = vld [vmem:[%s359 + $0x3c8] sm:$0xff]
        %v1185 = vld [vmem:[%s359 + $0x3d0] sm:$0xff]
        %v1186 = vld [vmem:[%s359 + $0x3d8] sm:$0xff]
        %v1187 = vld [vmem:[%s359 + $0x3e0] sm:$0xff]
        %v1188 = vld [vmem:[%s359 + $0x3e8] sm:$0xff]
        %v1189 = vld [vmem:[%s359 + $0x3f0] sm:$0xff]
        %v1190 = vld [vmem:[%s359 + $0x3f8] sm:$0xff]
        %v1191 = vld [vmem:[%s359 + $0x400] sm:$0xff]
        %v1192 = vld [vmem:[%s359 + $0x408] sm:$0xff]
        %v1193 = vld [vmem:[%s359 + $0x410] sm:$0xff]
        %v1194 = vld [vmem:[%s359 + $0x418] sm:$0xff]
        %v1195 = vld [vmem:[%s359 + $0x420] sm:$0xff]
        %v1196 = vld [vmem:[%s359 + $0x428] sm:$0xff]
        %v1197 = vld [vmem:[%s359 + $0x430] sm:$0xff]
        %v1198 = vld [vmem:[%s359 + $0x438] sm:$0xff]
        %v1199 = vld [vmem:[%s359 + $0x440] sm:$0xff]
        %v1200 = vld [vmem:[%s359 + $0x448] sm:$0xff]
        %v1201 = vld [vmem:[%s359 + $0x450] sm:$0xff]
        %v1202 = vld [vmem:[%s359 + $0x458] sm:$0xff]
        %v1203 = vld [vmem:[%s359 + $0x460] sm:$0xff]
        %v1204 = vld [vmem:[%s359 + $0x468] sm:$0xff]
        %v1205 = vld [vmem:[%s359 + $0x470] sm:$0xff]
        %v1206 = vld [vmem:[%s359 + $0x478] sm:$0xff]
        %v1207 = vld [vmem:[%s359 + $0x480] sm:$0xff]
        %v1208 = vld [vmem:[%s359 + $0x488] sm:$0xff]
        %v1209 = vld [vmem:[%s359 + $0x490] sm:$0xff]
        %v1210 = vld [vmem:[%s359 + $0x498] sm:$0xff]
        %v1211 = vld [vmem:[%s359 + $0x4a0] sm:$0xff]
        %v1212 = vld [vmem:[%s359 + $0x4a8] sm:$0xff]
        %v1213 = vld [vmem:[%s359 + $0x4b0] sm:$0xff]
        %v1214 = vld [vmem:[%s359 + $0x4b8] sm:$0xff]
        %v1215 = vld [vmem:[%s359 + $0x4c0] sm:$0xff]
        %v1216 = vld [vmem:[%s359 + $0x4c8] sm:$0xff]
        %v1217 = vld [vmem:[%s359 + $0x4d0] sm:$0xff]
        %v1218 = vld [vmem:[%s359 + $0x4d8] sm:$0xff]
        %v1219 = vld [vmem:[%s359 + $0x4e0] sm:$0xff]
        %v1220 = vld [vmem:[%s359 + $0x4e8] sm:$0xff]
        %v1221 = vld [vmem:[%s359 + $0x4f0] sm:$0xff]
        %v1222 = vld [vmem:[%s359 + $0x4f8] sm:$0xff]
        %v1223 = vld [vmem:[%s359 + $0x500] sm:$0xff]
        %v1224 = vld [vmem:[%s359 + $0x508] sm:$0xff]
        %v1225 = vld [vmem:[%s359 + $0x510] sm:$0xff]
        %v1226 = vld [vmem:[%s359 + $0x518] sm:$0xff]
        %v1227 = vld [vmem:[%s359 + $0x520] sm:$0xff]
        %v1228 = vld [vmem:[%s359 + $0x528] sm:$0xff]
        %v1229 = vld [vmem:[%s359 + $0x530] sm:$0xff]
        %v1230 = vld [vmem:[%s359 + $0x538] sm:$0xff]
        %v1231 = vld [vmem:[%s359 + $0x540] sm:$0xff]
        %v1232 = vld [vmem:[%s359 + $0x548] sm:$0xff]
        %v1233 = vld [vmem:[%s359 + $0x550] sm:$0xff]
        %v1234 = vld [vmem:[%s359 + $0x558] sm:$0xff]
        %v1235 = vld [vmem:[%s359 + $0x560] sm:$0xff]
        %v1236 = vld [vmem:[%s359 + $0x568] sm:$0xff]
        %v1237 = vld [vmem:[%s359 + $0x570] sm:$0xff]
        %v1238 = vld [vmem:[%s359 + $0x578] sm:$0xff]
        %v1239 = vld [vmem:[%s359 + $0x580] sm:$0xff]
        %v1240 = vld [vmem:[%s359 + $0x588] sm:$0xff]
        %v1241 = vld [vmem:[%s359 + $0x590] sm:$0xff]
        %v1242 = vld [vmem:[%s359 + $0x598] sm:$0xff]
        %v1243 = vld [vmem:[%s359 + $0x5a0] sm:$0xff]
        %v1244 = vld [vmem:[%s359 + $0x5a8] sm:$0xff]
        %v1245 = vld [vmem:[%s359 + $0x5b0] sm:$0xff]
        %v1246 = vld [vmem:[%s359 + $0x5b8] sm:$0xff]
        %v1247 = vld [vmem:[%s359 + $0x5c0] sm:$0xff]
        %v1248 = vld [vmem:[%s359 + $0x5c8] sm:$0xff]
        %v1249 = vld [vmem:[%s359 + $0x5d0] sm:$0xff]
        %v1250 = vld [vmem:[%s359 + $0x5d8] sm:$0xff]
        %v1251 = vld [vmem:[%s359 + $0x5e0] sm:$0xff]
        %v1252 = vld [vmem:[%s359 + $0x5e8] sm:$0xff]
        %v1253 = vld [vmem:[%s359 + $0x5f0] sm:$0xff]
        %v1254 = vld [vmem:[%s359 + $0x5f8] sm:$0xff]
        %v1255 = vld [vmem:[%s359 + $0x600] sm:$0xff]
        %v1256 = vld [vmem:[%s359 + $0x608] sm:$0xff]
        %v1257 = vld [vmem:[%s359 + $0x610] sm:$0xff]
        %v1258 = vld [vmem:[%s359 + $0x618] sm:$0xff]
        %v1259 = vld [vmem:[%s359 + $0x620] sm:$0xff]
        %v1260 = vld [vmem:[%s359 + $0x628] sm:$0xff]
        %v1261 = vld [vmem:[%s359 + $0x630] sm:$0xff]
        %v1262 = vld [vmem:[%s359 + $0x638] sm:$0xff]
        %v1263 = vld [vmem:[%s359 + $0x640] sm:$0xff]
        %v1264 = vld [vmem:[%s359 + $0x648] sm:$0xff]
        %v1265 = vld [vmem:[%s359 + $0x650] sm:$0xff]
        %v1266 = vld [vmem:[%s359 + $0x658] sm:$0xff]
        %v1267 = vld [vmem:[%s359 + $0x660] sm:$0xff]
        %v1268 = vld [vmem:[%s359 + $0x668] sm:$0xff]
        %v1269 = vld [vmem:[%s359 + $0x670] sm:$0xff]
        %v1270 = vld [vmem:[%s359 + $0x678] sm:$0xff]
        %v1271 = vld [vmem:[%s359 + $0x680] sm:$0xff]
        %v1272 = vld [vmem:[%s359 + $0x688] sm:$0xff]
        %v1273 = vld [vmem:[%s359 + $0x690] sm:$0xff]
        %v1274 = vld [vmem:[%s359 + $0x698] sm:$0xff]
        %v1275 = vld [vmem:[%s359 + $0x6a0] sm:$0xff]
        %v1276 = vld [vmem:[%s359 + $0x6a8] sm:$0xff]
        %v1277 = vld [vmem:[%s359 + $0x6b0] sm:$0xff]
        %v1278 = vld [vmem:[%s359 + $0x6b8] sm:$0xff]
        %v1279 = vld [vmem:[%s359 + $0x6c0] sm:$0xff]
        %v1280 = vld [vmem:[%s359 + $0x6c8] sm:$0xff]
        %v1281 = vld [vmem:[%s359 + $0x6d0] sm:$0xff]
        %v1282 = vld [vmem:[%s359 + $0x6d8] sm:$0xff]
        %v1283 = vld [vmem:[%s359 + $0x6e0] sm:$0xff]
        %v1284 = vld [vmem:[%s359 + $0x6e8] sm:$0xff]
        %v1285 = vld [vmem:[%s359 + $0x6f0] sm:$0xff]
        %v1286 = vld [vmem:[%s359 + $0x6f8] sm:$0xff]
        %v1287 = vld [vmem:[%s359 + $0x700] sm:$0xff]
        %v1288 = vld [vmem:[%s359 + $0x708] sm:$0xff]
        %v1289 = vld [vmem:[%s359 + $0x710] sm:$0xff]
        %v1290 = vld [vmem:[%s359 + $0x718] sm:$0xff]
        %v1291 = vld [vmem:[%s359 + $0x720] sm:$0xff]
        %v1292 = vld [vmem:[%s359 + $0x728] sm:$0xff]
        %v1293 = vld [vmem:[%s359 + $0x730] sm:$0xff]
        %v1294 = vld [vmem:[%s359 + $0x738] sm:$0xff]
        %v1295 = vld [vmem:[%s359 + $0x740] sm:$0xff]
        %v1296 = vld [vmem:[%s359 + $0x748] sm:$0xff]
        %v1297 = vld [vmem:[%s359 + $0x750] sm:$0xff]
        %v1298 = vld [vmem:[%s359 + $0x758] sm:$0xff]
        %v1299 = vld [vmem:[%s359 + $0x760] sm:$0xff]
        %v1300 = vld [vmem:[%s359 + $0x768] sm:$0xff]
        %v1301 = vld [vmem:[%s359 + $0x770] sm:$0xff]
        %v1302 = vld [vmem:[%s359 + $0x778] sm:$0xff]
        %v1303 = vld [vmem:[%s359 + $0x780] sm:$0xff]
        %v1304 = vld [vmem:[%s359 + $0x788] sm:$0xff]
        %v1305 = vld [vmem:[%s359 + $0x790] sm:$0xff]
        %v1306 = vld [vmem:[%s359 + $0x798] sm:$0xff]
        %v1307 = vld [vmem:[%s359 + $0x7a0] sm:$0xff]
        %v1308 = vld [vmem:[%s359 + $0x7a8] sm:$0xff]
        %v1309 = vld [vmem:[%s359 + $0x7b0] sm:$0xff]
        %v1310 = vld [vmem:[%s359 + $0x7b8] sm:$0xff]
        %v1311 = vld [vmem:[%s359 + $0x7c0] sm:$0xff]
        %v1312 = vld [vmem:[%s359 + $0x7c8] sm:$0xff]
        %v1313 = vld [vmem:[%s359 + $0x7d0] sm:$0xff]
        %v1314 = vld [vmem:[%s359 + $0x7d8] sm:$0xff]
        %v1315 = vld [vmem:[%s359 + $0x7e0] sm:$0xff]
        %v1316 = vld [vmem:[%s359 + $0x7e8] sm:$0xff]
        %v1317 = vld [vmem:[%s359 + $0x7f0] sm:$0xff]
        %v1318 = vld [vmem:[%s359 + $0x7f8] sm:$0xff]
        %v1319 = vld [vmem:[%s359 + $0x800] sm:$0xff]
        %v1320 = vld [vmem:[%s359 + $0x808] sm:$0xff]
        %v1321 = vld [vmem:[%s359 + $0x810] sm:$0xff]
        %v1322 = vld [vmem:[%s359 + $0x818] sm:$0xff]
        %v1323 = vld [vmem:[%s359 + $0x820] sm:$0xff]
        %v1324 = vld [vmem:[%s359 + $0x828] sm:$0xff]
        %v1325 = vld [vmem:[%s359 + $0x830] sm:$0xff]
        %v1326 = vld [vmem:[%s359 + $0x838] sm:$0xff]
        %v1327 = vld [vmem:[%s359 + $0x840] sm:$0xff]
        %v1328 = vld [vmem:[%s359 + $0x848] sm:$0xff]
        %v1329 = vld [vmem:[%s359 + $0x850] sm:$0xff]
        %v1330 = vld [vmem:[%s359 + $0x858] sm:$0xff]
        %v1331 = vld [vmem:[%s359 + $0x860] sm:$0xff]
        %v1332 = vld [vmem:[%s359 + $0x868] sm:$0xff]
        %v1333 = vld [vmem:[%s359 + $0x870] sm:$0xff]
        %v1334 = vld [vmem:[%s359 + $0x878] sm:$0xff]
        %v1335 = vld [vmem:[%s359 + $0x880] sm:$0xff]
        %v1336 = vld [vmem:[%s359 + $0x888] sm:$0xff]
        %v1337 = vld [vmem:[%s359 + $0x890] sm:$0xff]
        %v1338 = vld [vmem:[%s359 + $0x898] sm:$0xff]
        %v1339 = vld [vmem:[%s359 + $0x8a0] sm:$0xff]
        %v1340 = vld [vmem:[%s359 + $0x8a8] sm:$0xff]
        %v1341 = vld [vmem:[%s359 + $0x8b0] sm:$0xff]
        %v1342 = vld [vmem:[%s359 + $0x8b8] sm:$0xff]
        %v1343 = vld [vmem:[%s359 + $0x8c0] sm:$0xff]
        %v1344 = vld [vmem:[%s359 + $0x8c8] sm:$0xff]
        %v1345 = vld [vmem:[%s359 + $0x8d0] sm:$0xff]
        %v1346 = vld [vmem:[%s359 + $0x8d8] sm:$0xff]
        %v1347 = vld [vmem:[%s359 + $0x8e0] sm:$0xff]
        %v1348 = vld [vmem:[%s359 + $0x8e8] sm:$0xff]
        %v1349 = vld [vmem:[%s359 + $0x8f0] sm:$0xff]
        %v1350 = vld [vmem:[%s359 + $0x8f8] sm:$0xff]
        %v1351 = vld [vmem:[%s359 + $0x900] sm:$0xff]
        %v1352 = vld [vmem:[%s359 + $0x908] sm:$0xff]
        %v1353 = vld [vmem:[%s359 + $0x910] sm:$0xff]
        %v1354 = vld [vmem:[%s359 + $0x918] sm:$0xff]
        %v1355 = vld [vmem:[%s359 + $0x920] sm:$0xff]
        %v1356 = vld [vmem:[%s359 + $0x928] sm:$0xff]
        %v1357 = vld [vmem:[%s359 + $0x930] sm:$0xff]
        %v1358 = vld [vmem:[%s359 + $0x938] sm:$0xff]
        %v1359 = vld [vmem:[%s359 + $0x940] sm:$0xff]
        %v1360 = vld [vmem:[%s359 + $0x948] sm:$0xff]
        %v1361 = vld [vmem:[%s359 + $0x950] sm:$0xff]
        %v1362 = vld [vmem:[%s359 + $0x958] sm:$0xff]
        %v1363 = vld [vmem:[%s359 + $0x960] sm:$0xff]
        %v1364 = vld [vmem:[%s359 + $0x968] sm:$0xff]
        %v1365 = vld [vmem:[%s359 + $0x970] sm:$0xff]
        %v1366 = vld [vmem:[%s359 + $0x978] sm:$0xff]
        %v1367 = vld [vmem:[%s359 + $0x980] sm:$0xff]
        %v1368 = vld [vmem:[%s359 + $0x988] sm:$0xff]
        %v1369 = vld [vmem:[%s359 + $0x990] sm:$0xff]
        %v1370 = vld [vmem:[%s359 + $0x998] sm:$0xff]
        %v1371 = vld [vmem:[%s359 + $0x9a0] sm:$0xff]
        %v1372 = vld [vmem:[%s359 + $0x9a8] sm:$0xff]
        %v1373 = vld [vmem:[%s359 + $0x9b0] sm:$0xff]
        %v1374 = vld [vmem:[%s359 + $0x9b8] sm:$0xff]
        %v1375 = vld [vmem:[%s359 + $0x9c0] sm:$0xff]
        %v1376 = vld [vmem:[%s359 + $0x9c8] sm:$0xff]
        %v1377 = vld [vmem:[%s359 + $0x9d0] sm:$0xff]
        %v1378 = vld [vmem:[%s359 + $0x9d8] sm:$0xff]
        %v1379 = vld [vmem:[%s359 + $0x9e0] sm:$0xff]
        %v1380 = vld [vmem:[%s359 + $0x9e8] sm:$0xff]
        %v1381 = vld [vmem:[%s359 + $0x9f0] sm:$0xff]
        %v1382 = vld [vmem:[%s359 + $0x9f8] sm:$0xff]
        %v1383 = vld [vmem:[%s359 + $0xa00] sm:$0xff]
        %v1384 = vld [vmem:[%s359 + $0xa08] sm:$0xff]
        %v1385 = vld [vmem:[%s359 + $0xa10] sm:$0xff]
        %v1386 = vld [vmem:[%s359 + $0xa18] sm:$0xff]
        %v1387 = vld [vmem:[%s359 + $0xa20] sm:$0xff]
        %v1388 = vld [vmem:[%s359 + $0xa28] sm:$0xff]
        %v1389 = vld [vmem:[%s359 + $0xa30] sm:$0xff]
        %v1390 = vld [vmem:[%s359 + $0xa38] sm:$0xff]
        %v1391 = vld [vmem:[%s359 + $0xa40] sm:$0xff]
        %v1392 = vld [vmem:[%s359 + $0xa48] sm:$0xff]
        %v1393 = vld [vmem:[%s359 + $0xa50] sm:$0xff]
        %v1394 = vld [vmem:[%s359 + $0xa58] sm:$0xff]
        %v1395 = vld [vmem:[%s359 + $0xa60] sm:$0xff]
        %v1396 = vld [vmem:[%s359 + $0xa68] sm:$0xff]
        %v1397 = vld [vmem:[%s359 + $0xa70] sm:$0xff]
        %v1398 = vld [vmem:[%s359 + $0xa78] sm:$0xff]
        %v1399 = vld [vmem:[%s359 + $0xa80] sm:$0xff]
        %v1400 = vld [vmem:[%s359 + $0xa88] sm:$0xff]
        %v1401 = vld [vmem:[%s359 + $0xa90] sm:$0xff]
        %v1402 = vld [vmem:[%s359 + $0xa98] sm:$0xff]
        %v1403 = vld [vmem:[%s359 + $0xaa0] sm:$0xff]
        %v1404 = vld [vmem:[%s359 + $0xaa8] sm:$0xff]
        %v1405 = vld [vmem:[%s359 + $0xab0] sm:$0xff]
        %v1406 = vld [vmem:[%s359 + $0xab8] sm:$0xff]
        %v1407 = vld [vmem:[%s359 + $0xac0] sm:$0xff]
        %v1408 = vld [vmem:[%s359 + $0xac8] sm:$0xff]
        %v1409 = vld [vmem:[%s359 + $0xad0] sm:$0xff]
        %v1410 = vld [vmem:[%s359 + $0xad8] sm:$0xff]
        %v1411 = vld [vmem:[%s359 + $0xae0] sm:$0xff]
        %v1412 = vld [vmem:[%s359 + $0xae8] sm:$0xff]
        %v1413 = vld [vmem:[%s359 + $0xaf0] sm:$0xff]
        %v1414 = vld [vmem:[%s359 + $0xaf8] sm:$0xff]
        %v1415 = vld [vmem:[%s359 + $0xb00] sm:$0xff]
        %v1416 = vld [vmem:[%s359 + $0xb08] sm:$0xff]
        %v1417 = vld [vmem:[%s359 + $0xb10] sm:$0xff]
        %v1418 = vld [vmem:[%s359 + $0xb18] sm:$0xff]
        %v1419 = vld [vmem:[%s359 + $0xb20] sm:$0xff]
        %v1420 = vld [vmem:[%s359 + $0xb28] sm:$0xff]
        %v1421 = vld [vmem:[%s359 + $0xb30] sm:$0xff]
        %v1422 = vld [vmem:[%s359 + $0xb38] sm:$0xff]
        %v1423 = vld [vmem:[%s359 + $0xb40] sm:$0xff]
        %v1424 = vld [vmem:[%s359 + $0xb48] sm:$0xff]
        %v1425 = vld [vmem:[%s359 + $0xb50] sm:$0xff]
        %v1426 = vld [vmem:[%s359 + $0xb58] sm:$0xff]
        %v1427 = vld [vmem:[%s359 + $0xb60] sm:$0xff]
        %v1428 = vld [vmem:[%s359 + $0xb68] sm:$0xff]
        %v1429 = vld [vmem:[%s359 + $0xb70] sm:$0xff]
        %v1430 = vld [vmem:[%s359 + $0xb78] sm:$0xff]
        %v1431 = vld [vmem:[%s359 + $0xb80] sm:$0xff]
        %v1432 = vld [vmem:[%s359 + $0xb88] sm:$0xff]
        %v1433 = vld [vmem:[%s359 + $0xb90] sm:$0xff]
        %v1434 = vld [vmem:[%s359 + $0xb98] sm:$0xff]
        %v1435 = vld [vmem:[%s359 + $0xba0] sm:$0xff]
        %v1436 = vld [vmem:[%s359 + $0xba8] sm:$0xff]
        %v1437 = vld [vmem:[%s359 + $0xbb0] sm:$0xff]
        %v1438 = vld [vmem:[%s359 + $0xbb8] sm:$0xff]
        %v1439 = vld [vmem:[%s359 + $0xbc0] sm:$0xff]
        %v1440 = vld [vmem:[%s359 + $0xbc8] sm:$0xff]
        %v1441 = vld [vmem:[%s359 + $0xbd0] sm:$0xff]
        %v1442 = vld [vmem:[%s359 + $0xbd8] sm:$0xff]
        %v1443 = vld [vmem:[%s359 + $0xbe0] sm:$0xff]
        %v1444 = vld [vmem:[%s359 + $0xbe8] sm:$0xff]
        %v1445 = vld [vmem:[%s359 + $0xbf0] sm:$0xff]
        %v1446 = vld [vmem:[%s359 + $0xbf8] sm:$0xff]
        %v1447 = vld [vmem:[%s359 + $0xc00] sm:$0xff]
        %v1448 = vld [vmem:[%s359 + $0xc08] sm:$0xff]
        %v1449 = vld [vmem:[%s359 + $0xc10] sm:$0xff]
        %v1450 = vld [vmem:[%s359 + $0xc18] sm:$0xff]
        %v1451 = vld [vmem:[%s359 + $0xc20] sm:$0xff]
        %v1452 = vld [vmem:[%s359 + $0xc28] sm:$0xff]
        %v1453 = vld [vmem:[%s359 + $0xc30] sm:$0xff]
        %v1454 = vld [vmem:[%s359 + $0xc38] sm:$0xff]
        %v1455 = vld [vmem:[%s359 + $0xc40] sm:$0xff]
        %v1456 = vld [vmem:[%s359 + $0xc48] sm:$0xff]
        %v1457 = vld [vmem:[%s359 + $0xc50] sm:$0xff]
        %v1458 = vld [vmem:[%s359 + $0xc58] sm:$0xff]
        %v1459 = vld [vmem:[%s359 + $0xc60] sm:$0xff]
        %v1460 = vld [vmem:[%s359 + $0xc68] sm:$0xff]
        %v1461 = vld [vmem:[%s359 + $0xc70] sm:$0xff]
        %v1462 = vld [vmem:[%s359 + $0xc78] sm:$0xff]
        %v1463 = vld [vmem:[%s359 + $0xc80] sm:$0xff]
        %v1464 = vld [vmem:[%s359 + $0xc88] sm:$0xff]
        %v1465 = vld [vmem:[%s359 + $0xc90] sm:$0xff]
        %v1466 = vld [vmem:[%s359 + $0xc98] sm:$0xff]
        %v1467 = vld [vmem:[%s359 + $0xca0] sm:$0xff]
        %v1468 = vld [vmem:[%s359 + $0xca8] sm:$0xff]
        %v1469 = vld [vmem:[%s359 + $0xcb0] sm:$0xff]
        %v1470 = vld [vmem:[%s359 + $0xcb8] sm:$0xff]
        %v1471 = vld [vmem:[%s359 + $0xcc0] sm:$0xff]
        %v1472 = vld [vmem:[%s359 + $0xcc8] sm:$0xff]
        %v1473 = vld [vmem:[%s359 + $0xcd0] sm:$0xff]
        %v1474 = vld [vmem:[%s359 + $0xcd8] sm:$0xff]
        %v1475 = vld [vmem:[%s359 + $0xce0] sm:$0xff]
        %v1476 = vld [vmem:[%s359 + $0xce8] sm:$0xff]
        %v1477 = vld [vmem:[%s359 + $0xcf0] sm:$0xff]
        %v1478 = vld [vmem:[%s359 + $0xcf8] sm:$0xff]
        %v1479 = vld [vmem:[%s359 + $0xd00] sm:$0xff]
        %v1480 = vld [vmem:[%s359 + $0xd08] sm:$0xff]
        %v1481 = vld [vmem:[%s359 + $0xd10] sm:$0xff]
        %v1482 = vld [vmem:[%s359 + $0xd18] sm:$0xff]
        %v1483 = vld [vmem:[%s359 + $0xd20] sm:$0xff]
        %v1484 = vld [vmem:[%s359 + $0xd28] sm:$0xff]
        %v1485 = vld [vmem:[%s359 + $0xd30] sm:$0xff]
        %v1486 = vld [vmem:[%s359 + $0xd38] sm:$0xff]
        %v1487 = vld [vmem:[%s359 + $0xd40] sm:$0xff]
        %v1488 = vld [vmem:[%s359 + $0xd48] sm:$0xff]
        %v1489 = vld [vmem:[%s359 + $0xd50] sm:$0xff]
        %v1490 = vld [vmem:[%s359 + $0xd58] sm:$0xff]
        %v1491 = vld [vmem:[%s359 + $0xd60] sm:$0xff]
        %v1492 = vld [vmem:[%s359 + $0xd68] sm:$0xff]
        %v1493 = vld [vmem:[%s359 + $0xd70] sm:$0xff]
        %v1494 = vld [vmem:[%s359 + $0xd78] sm:$0xff]
        %v1495 = vld [vmem:[%s359 + $0xd80] sm:$0xff]
        %v1496 = vld [vmem:[%s359 + $0xd88] sm:$0xff]
        %v1497 = vld [vmem:[%s359 + $0xd90] sm:$0xff]
        %v1498 = vld [vmem:[%s359 + $0xd98] sm:$0xff]
        %v1499 = vld [vmem:[%s359 + $0xda0] sm:$0xff]
        %v1500 = vld [vmem:[%s359 + $0xda8] sm:$0xff]
        %v1501 = vld [vmem:[%s359 + $0xdb0] sm:$0xff]
        %v1502 = vld [vmem:[%s359 + $0xdb8] sm:$0xff]
        %v1503 = vld [vmem:[%s359 + $0xdc0] sm:$0xff]
        %v1504 = vld [vmem:[%s359 + $0xdc8] sm:$0xff]
        %v1505 = vld [vmem:[%s359 + $0xdd0] sm:$0xff]
        %v1506 = vld [vmem:[%s359 + $0xdd8] sm:$0xff]
        %v1507 = vld [vmem:[%s359 + $0xde0] sm:$0xff]
        %v1508 = vld [vmem:[%s359 + $0xde8] sm:$0xff]
        %v1509 = vld [vmem:[%s359 + $0xdf0] sm:$0xff]
        %v1510 = vld [vmem:[%s359 + $0xdf8] sm:$0xff]
        %v1511 = vld [vmem:[%s359 + $0xe00] sm:$0xff]
        %v1512 = vld [vmem:[%s359 + $0xe08] sm:$0xff]
        %v1513 = vld [vmem:[%s359 + $0xe10] sm:$0xff]
        %v1514 = vld [vmem:[%s359 + $0xe18] sm:$0xff]
        %v1515 = vld [vmem:[%s359 + $0xe20] sm:$0xff]
        %v1516 = vld [vmem:[%s359 + $0xe28] sm:$0xff]
        %v1517 = vld [vmem:[%s359 + $0xe30] sm:$0xff]
        %v1518 = vld [vmem:[%s359 + $0xe38] sm:$0xff]
        %v1519 = vld [vmem:[%s359 + $0xe40] sm:$0xff]
        %v1520 = vld [vmem:[%s359 + $0xe48] sm:$0xff]
        %v1521 = vld [vmem:[%s359 + $0xe50] sm:$0xff]
        %v1522 = vld [vmem:[%s359 + $0xe58] sm:$0xff]
        %v1523 = vld [vmem:[%s359 + $0xe60] sm:$0xff]
        %v1524 = vld [vmem:[%s359 + $0xe68] sm:$0xff]
        %v1525 = vld [vmem:[%s359 + $0xe70] sm:$0xff]
        %v1526 = vld [vmem:[%s359 + $0xe78] sm:$0xff]
        %v1527 = vld [vmem:[%s359 + $0xe80] sm:$0xff]
        %v1528 = vld [vmem:[%s359 + $0xe88] sm:$0xff]
        %v1529 = vld [vmem:[%s359 + $0xe90] sm:$0xff]
        %v1530 = vld [vmem:[%s359 + $0xe98] sm:$0xff]
        %v1531 = vld [vmem:[%s359 + $0xea0] sm:$0xff]
        %v1532 = vld [vmem:[%s359 + $0xea8] sm:$0xff]
        %v1533 = vld [vmem:[%s359 + $0xeb0] sm:$0xff]
        %v1534 = vld [vmem:[%s359 + $0xeb8] sm:$0xff]
        %v1535 = vld [vmem:[%s359 + $0xec0] sm:$0xff]
        %v1536 = vld [vmem:[%s359 + $0xec8] sm:$0xff]
        %v1537 = vld [vmem:[%s359 + $0xed0] sm:$0xff]
        %v1538 = vld [vmem:[%s359 + $0xed8] sm:$0xff]
        %v1539 = vld [vmem:[%s359 + $0xee0] sm:$0xff]
        %v1540 = vld [vmem:[%s359 + $0xee8] sm:$0xff]
        %v1541 = vld [vmem:[%s359 + $0xef0] sm:$0xff]
        %v1542 = vld [vmem:[%s359 + $0xef8] sm:$0xff]
        %v1543 = vld [vmem:[%s359 + $0xf00] sm:$0xff]
        %v1544 = vld [vmem:[%s359 + $0xf08] sm:$0xff]
        %v1545 = vld [vmem:[%s359 + $0xf10] sm:$0xff]
        %v1546 = vld [vmem:[%s359 + $0xf18] sm:$0xff]
        %v1547 = vld [vmem:[%s359 + $0xf20] sm:$0xff]
        %v1548 = vld [vmem:[%s359 + $0xf28] sm:$0xff]
        %v1549 = vld [vmem:[%s359 + $0xf30] sm:$0xff]
        %v1550 = vld [vmem:[%s359 + $0xf38] sm:$0xff]
        %v1551 = vld [vmem:[%s359 + $0xf40] sm:$0xff]
        %v1552 = vld [vmem:[%s359 + $0xf48] sm:$0xff]
        %v1553 = vld [vmem:[%s359 + $0xf50] sm:$0xff]
        %v1554 = vld [vmem:[%s359 + $0xf58] sm:$0xff]
        %v1555 = vld [vmem:[%s359 + $0xf60] sm:$0xff]
        %v1556 = vld [vmem:[%s359 + $0xf68] sm:$0xff]
        %v1557 = vld [vmem:[%s359 + $0xf70] sm:$0xff]
        %v1558 = vld [vmem:[%s359 + $0xf78] sm:$0xff]
        %v1559 = vld [vmem:[%s359 + $0xf80] sm:$0xff]
        %v1560 = vld [vmem:[%s359 + $0xf88] sm:$0xff]
        %v1561 = vld [vmem:[%s359 + $0xf90] sm:$0xff]
        %v1562 = vld [vmem:[%s359 + $0xf98] sm:$0xff]
        %v1563 = vld [vmem:[%s359 + $0xfa0] sm:$0xff]
        %v1564 = vld [vmem:[%s359 + $0xfa8] sm:$0xff]
        %v1565 = vld [vmem:[%s359 + $0xfb0] sm:$0xff]
        %v1566 = vld [vmem:[%s359 + $0xfb8] sm:$0xff]
        %v1567 = vld [vmem:[%s359 + $0xfc0] sm:$0xff]
        %v1568 = vld [vmem:[%s359 + $0xfc8] sm:$0xff]
        %v1569 = vld [vmem:[%s359 + $0xfd0] sm:$0xff]
        %v1570 = vld [vmem:[%s359 + $0xfd8] sm:$0xff]
        %v1571 = vld [vmem:[%s359 + $0xfe0] sm:$0xff]
        %v1572 = vld [vmem:[%s359 + $0xfe8] sm:$0xff]
        %v1573 = vld [vmem:[%s359 + $0xff0] sm:$0xff]
        %v1574 = vld [vmem:[%s359 + $0xff8] sm:$0xff]
        %v1575 = vld [vmem:[%s368] sm:$0xf]
        %v1577 = vlaneseq
        %v1578 = vshrl.u32 %v1577, 7
        %v1579 = vsub.s32 0, %v1578
        %v1580 = vrot.slane %v1575, %v1579
        %v1581 = vlaneseq
        %v1582 = vshrl.u32 %v1581, 7
        %v1583 = vsub.s32 1, %v1582
        %v1584 = vrot.slane %v1575, %v1583
        %v1585 = vlaneseq
        %v1586 = vshrl.u32 %v1585, 7
        %v1587 = vsub.s32 2, %v1586
        %v1588 = vrot.slane %v1575, %v1587
        %v1589 = vlaneseq
        %v1590 = vshrl.u32 %v1589, 7
        %v1591 = vsub.s32 3, %v1590
        %v1592 = vrot.slane %v1575, %v1591
        %v1599 = vcombine.high %v1061, %v1061
        %v1601 = vunpack.c.l.s4 1966171168
        %v1602 = vunpack.c.0.s8 %v1601
        %v1603 = vlaneseq
        %v1604 = vshrl.u32 %v1603, 7
        %v1605 = vsub.s32 %v1602, %v1604
        %v1606 = vrot.slane %v1061, %v1605
        %v1608 = vunpack.c.l.s4 1966171168
        %v1609 = vunpack.c.0.s8 %v1608
        %v1610 = vlaneseq
        %v1611 = vshrl.u32 %v1610, 7
        %v1612 = vsub.s32 %v1609, %v1611
        %v1613 = vrot.slane %v1599, %v1612
        %v1614 = vcombine.high %v1606, %v1606
        %v1615 = vcombine.high %v1613, %v1613
        %v1617 = vunpack.c.l.s4 1966171168
        %v1618 = vunpack.c.0.s8 %v1617
        %v1619 = vlaneseq
        %v1620 = vshrl.u32 %v1619, 7
        %v1621 = vsub.s32 %v1618, %v1620
        %v1622 = vrot.slane %v1606, %v1621
        %v1624 = vunpack.c.l.s4 1966171168
        %v1625 = vunpack.c.0.s8 %v1624
        %v1626 = vlaneseq
        %v1627 = vshrl.u32 %v1626, 7
        %v1628 = vsub.s32 %v1625, %v1627
        %v1629 = vrot.slane %v1613, %v1628
        %v1631 = vunpack.c.l.s4 1966171168
        %v1632 = vunpack.c.0.s8 %v1631
        %v1633 = vlaneseq
        %v1634 = vshrl.u32 %v1633, 7
        %v1635 = vsub.s32 %v1632, %v1634
        %v1636 = vrot.slane %v1614, %v1635
        %v1638 = vunpack.c.l.s4 1966171168
        %v1639 = vunpack.c.0.s8 %v1638
        %v1640 = vlaneseq
        %v1641 = vshrl.u32 %v1640, 7
        %v1642 = vsub.s32 %v1639, %v1641
        %v1643 = vrot.slane %v1615, %v1642
        %v1644 = vcombine.high %v1622, %v1622
        %v1645 = vcombine.high %v1629, %v1629
        %v1646 = vcombine.high %v1636, %v1636
        %v1647 = vcombine.high %v1643, %v1643
        %v1648 = vcombine.high %v1062, %v1062
        %v1650 = vunpack.c.l.s4 1966171168
        %v1651 = vunpack.c.0.s8 %v1650
        %v1652 = vlaneseq
        %v1653 = vshrl.u32 %v1652, 7
        %v1654 = vsub.s32 %v1651, %v1653
        %v1655 = vrot.slane %v1062, %v1654
        %v1657 = vunpack.c.l.s4 1966171168
        %v1658 = vunpack.c.0.s8 %v1657
        %v1659 = vlaneseq
        %v1660 = vshrl.u32 %v1659, 7
        %v1661 = vsub.s32 %v1658, %v1660
        %v1662 = vrot.slane %v1648, %v1661
        %v1663 = vcombine.high %v1655, %v1655
        %v1664 = vcombine.high %v1662, %v1662
        %v1666 = vunpack.c.l.s4 1966171168
        %v1667 = vunpack.c.0.s8 %v1666
        %v1668 = vlaneseq
        %v1669 = vshrl.u32 %v1668, 7
        %v1670 = vsub.s32 %v1667, %v1669
        %v1671 = vrot.slane %v1655, %v1670
        %v1673 = vunpack.c.l.s4 1966171168
        %v1674 = vunpack.c.0.s8 %v1673
        %v1675 = vlaneseq
        %v1676 = vshrl.u32 %v1675, 7
        %v1677 = vsub.s32 %v1674, %v1676
        %v1678 = vrot.slane %v1662, %v1677
        %v1680 = vunpack.c.l.s4 1966171168
        %v1681 = vunpack.c.0.s8 %v1680
        %v1682 = vlaneseq
        %v1683 = vshrl.u32 %v1682, 7
        %v1684 = vsub.s32 %v1681, %v1683
        %v1685 = vrot.slane %v1663, %v1684
        %v1687 = vunpack.c.l.s4 1966171168
        %v1688 = vunpack.c.0.s8 %v1687
        %v1689 = vlaneseq
        %v1690 = vshrl.u32 %v1689, 7
        %v1691 = vsub.s32 %v1688, %v1690
        %v1692 = vrot.slane %v1664, %v1691
        %v1693 = vcombine.high %v1671, %v1671
        %v1694 = vcombine.high %v1678, %v1678
        %v1695 = vcombine.high %v1685, %v1685
        %v1696 = vcombine.high %v1692, %v1692
        %v2225 = vunpack.c.l.b16 %v1063
        %v2226 = vunpack.c.h.b16 %v1063
        %v2227 = vunpack.c.l.b16 %v1064
        %v2228 = vunpack.c.h.b16 %v1064
        %v2229 = vunpack.c.l.b16 %v1065
        %v2230 = vunpack.c.h.b16 %v1065
        %v2231 = vunpack.c.l.b16 %v1066
        %v2232 = vunpack.c.h.b16 %v1066
        %v2233 = vunpack.c.l.b16 %v1067
        %v2234 = vunpack.c.h.b16 %v1067
        %v2235 = vunpack.c.l.b16 %v1068
        %v2236 = vunpack.c.h.b16 %v1068
        %v2237 = vunpack.c.l.b16 %v1069
        %v2238 = vunpack.c.h.b16 %v1069
        %v2239 = vunpack.c.l.b16 %v1070
        %v2240 = vunpack.c.h.b16 %v1070
        %v2241 = vunpack.c.l.b16 %v1071
        %v2242 = vunpack.c.h.b16 %v1071
        %v2243 = vunpack.c.l.b16 %v1072
        %v2244 = vunpack.c.h.b16 %v1072
        %v2245 = vunpack.c.l.b16 %v1073
        %v2246 = vunpack.c.h.b16 %v1073
        %v2247 = vunpack.c.l.b16 %v1074
        %v2248 = vunpack.c.h.b16 %v1074
        %v2249 = vunpack.c.l.b16 %v1075
        %v2250 = vunpack.c.h.b16 %v1075
        %v2251 = vunpack.c.l.b16 %v1076
        %v2252 = vunpack.c.h.b16 %v1076
        %v2253 = vunpack.c.l.b16 %v1077
        %v2254 = vunpack.c.h.b16 %v1077
        %v2255 = vunpack.c.l.b16 %v1078
        %v2256 = vunpack.c.h.b16 %v1078
        %v2257 = vunpack.c.l.b16 %v1079
        %v2258 = vunpack.c.h.b16 %v1079
        %v2259 = vunpack.c.l.b16 %v1080
        %v2260 = vunpack.c.h.b16 %v1080
        %v2261 = vunpack.c.l.b16 %v1081
        %v2262 = vunpack.c.h.b16 %v1081
        %v2263 = vunpack.c.l.b16 %v1082
        %v2264 = vunpack.c.h.b16 %v1082
        %v2265 = vunpack.c.l.b16 %v1083
        %v2266 = vunpack.c.h.b16 %v1083
        %v2267 = vunpack.c.l.b16 %v1084
        %v2268 = vunpack.c.h.b16 %v1084
        %v2269 = vunpack.c.l.b16 %v1085
        %v2270 = vunpack.c.h.b16 %v1085
        %v2271 = vunpack.c.l.b16 %v1086
        %v2272 = vunpack.c.h.b16 %v1086
        %v2273 = vunpack.c.l.b16 %v1087
        %v2274 = vunpack.c.h.b16 %v1087
        %v2275 = vunpack.c.l.b16 %v1088
        %v2276 = vunpack.c.h.b16 %v1088
        %v2277 = vunpack.c.l.b16 %v1089
        %v2278 = vunpack.c.h.b16 %v1089
        %v2279 = vunpack.c.l.b16 %v1090
        %v2280 = vunpack.c.h.b16 %v1090
        %v2281 = vunpack.c.l.b16 %v1091
        %v2282 = vunpack.c.h.b16 %v1091
        %v2283 = vunpack.c.l.b16 %v1092
        %v2284 = vunpack.c.h.b16 %v1092
        %v2285 = vunpack.c.l.b16 %v1093
        %v2286 = vunpack.c.h.b16 %v1093
        %v2287 = vunpack.c.l.b16 %v1094
        %v2288 = vunpack.c.h.b16 %v1094
        %v2289 = vunpack.c.l.b16 %v1095
        %v2290 = vunpack.c.h.b16 %v1095
        %v2291 = vunpack.c.l.b16 %v1096
        %v2292 = vunpack.c.h.b16 %v1096
        %v2293 = vunpack.c.l.b16 %v1097
        %v2294 = vunpack.c.h.b16 %v1097
        %v2295 = vunpack.c.l.b16 %v1098
        %v2296 = vunpack.c.h.b16 %v1098
        %v2297 = vunpack.c.l.b16 %v1099
        %v2298 = vunpack.c.h.b16 %v1099
        %v2299 = vunpack.c.l.b16 %v1100
        %v2300 = vunpack.c.h.b16 %v1100
        %v2301 = vunpack.c.l.b16 %v1101
        %v2302 = vunpack.c.h.b16 %v1101
        %v2303 = vunpack.c.l.b16 %v1102
        %v2304 = vunpack.c.h.b16 %v1102
        %v2305 = vunpack.c.l.b16 %v1103
        %v2306 = vunpack.c.h.b16 %v1103
        %v2307 = vunpack.c.l.b16 %v1104
        %v2308 = vunpack.c.h.b16 %v1104
        %v2309 = vunpack.c.l.b16 %v1105
        %v2310 = vunpack.c.h.b16 %v1105
        %v2311 = vunpack.c.l.b16 %v1106
        %v2312 = vunpack.c.h.b16 %v1106
        %v2313 = vunpack.c.l.b16 %v1107
        %v2314 = vunpack.c.h.b16 %v1107
        %v2315 = vunpack.c.l.b16 %v1108
        %v2316 = vunpack.c.h.b16 %v1108
        %v2317 = vunpack.c.l.b16 %v1109
        %v2318 = vunpack.c.h.b16 %v1109
        %v2319 = vunpack.c.l.b16 %v1110
        %v2320 = vunpack.c.h.b16 %v1110
        %v2321 = vunpack.c.l.b16 %v1111
        %v2322 = vunpack.c.h.b16 %v1111
        %v2323 = vunpack.c.l.b16 %v1112
        %v2324 = vunpack.c.h.b16 %v1112
        %v2325 = vunpack.c.l.b16 %v1113
        %v2326 = vunpack.c.h.b16 %v1113
        %v2327 = vunpack.c.l.b16 %v1114
        %v2328 = vunpack.c.h.b16 %v1114
        %v2329 = vunpack.c.l.b16 %v1115
        %v2330 = vunpack.c.h.b16 %v1115
        %v2331 = vunpack.c.l.b16 %v1116
        %v2332 = vunpack.c.h.b16 %v1116
        %v2333 = vunpack.c.l.b16 %v1117
        %v2334 = vunpack.c.h.b16 %v1117
        %v2335 = vunpack.c.l.b16 %v1118
        %v2336 = vunpack.c.h.b16 %v1118
        %v2337 = vunpack.c.l.b16 %v1119
        %v2338 = vunpack.c.h.b16 %v1119
        %v2339 = vunpack.c.l.b16 %v1120
        %v2340 = vunpack.c.h.b16 %v1120
        %v2341 = vunpack.c.l.b16 %v1121
        %v2342 = vunpack.c.h.b16 %v1121
        %v2343 = vunpack.c.l.b16 %v1122
        %v2344 = vunpack.c.h.b16 %v1122
        %v2345 = vunpack.c.l.b16 %v1123
        %v2346 = vunpack.c.h.b16 %v1123
        %v2347 = vunpack.c.l.b16 %v1124
        %v2348 = vunpack.c.h.b16 %v1124
        %v2349 = vunpack.c.l.b16 %v1125
        %v2350 = vunpack.c.h.b16 %v1125
        %v2351 = vunpack.c.l.b16 %v1126
        %v2352 = vunpack.c.h.b16 %v1126
        %v2353 = vunpack.c.l.b16 %v1127
        %v2354 = vunpack.c.h.b16 %v1127
        %v2355 = vunpack.c.l.b16 %v1128
        %v2356 = vunpack.c.h.b16 %v1128
        %v2357 = vunpack.c.l.b16 %v1129
        %v2358 = vunpack.c.h.b16 %v1129
        %v2359 = vunpack.c.l.b16 %v1130
        %v2360 = vunpack.c.h.b16 %v1130
        %v2361 = vunpack.c.l.b16 %v1131
        %v2362 = vunpack.c.h.b16 %v1131
        %v2363 = vunpack.c.l.b16 %v1132
        %v2364 = vunpack.c.h.b16 %v1132
        %v2365 = vunpack.c.l.b16 %v1133
        %v2366 = vunpack.c.h.b16 %v1133
        %v2367 = vunpack.c.l.b16 %v1134
        %v2368 = vunpack.c.h.b16 %v1134
        %v2369 = vunpack.c.l.b16 %v1135
        %v2370 = vunpack.c.h.b16 %v1135
        %v2371 = vunpack.c.l.b16 %v1136
        %v2372 = vunpack.c.h.b16 %v1136
        %v2373 = vunpack.c.l.b16 %v1137
        %v2374 = vunpack.c.h.b16 %v1137
        %v2375 = vunpack.c.l.b16 %v1138
        %v2376 = vunpack.c.h.b16 %v1138
        %v2377 = vunpack.c.l.b16 %v1139
        %v2378 = vunpack.c.h.b16 %v1139
        %v2379 = vunpack.c.l.b16 %v1140
        %v2380 = vunpack.c.h.b16 %v1140
        %v2381 = vunpack.c.l.b16 %v1141
        %v2382 = vunpack.c.h.b16 %v1141
        %v2383 = vunpack.c.l.b16 %v1142
        %v2384 = vunpack.c.h.b16 %v1142
        %v2385 = vunpack.c.l.b16 %v1143
        %v2386 = vunpack.c.h.b16 %v1143
        %v2387 = vunpack.c.l.b16 %v1144
        %v2388 = vunpack.c.h.b16 %v1144
        %v2389 = vunpack.c.l.b16 %v1145
        %v2390 = vunpack.c.h.b16 %v1145
        %v2391 = vunpack.c.l.b16 %v1146
        %v2392 = vunpack.c.h.b16 %v1146
        %v2393 = vunpack.c.l.b16 %v1147
        %v2394 = vunpack.c.h.b16 %v1147
        %v2395 = vunpack.c.l.b16 %v1148
        %v2396 = vunpack.c.h.b16 %v1148
        %v2397 = vunpack.c.l.b16 %v1149
        %v2398 = vunpack.c.h.b16 %v1149
        %v2399 = vunpack.c.l.b16 %v1150
        %v2400 = vunpack.c.h.b16 %v1150
        %v2401 = vunpack.c.l.b16 %v1151
        %v2402 = vunpack.c.h.b16 %v1151
        %v2403 = vunpack.c.l.b16 %v1152
        %v2404 = vunpack.c.h.b16 %v1152
        %v2405 = vunpack.c.l.b16 %v1153
        %v2406 = vunpack.c.h.b16 %v1153
        %v2407 = vunpack.c.l.b16 %v1154
        %v2408 = vunpack.c.h.b16 %v1154
        %v2409 = vunpack.c.l.b16 %v1155
        %v2410 = vunpack.c.h.b16 %v1155
        %v2411 = vunpack.c.l.b16 %v1156
        %v2412 = vunpack.c.h.b16 %v1156
        %v2413 = vunpack.c.l.b16 %v1157
        %v2414 = vunpack.c.h.b16 %v1157
        %v2415 = vunpack.c.l.b16 %v1158
        %v2416 = vunpack.c.h.b16 %v1158
        %v2417 = vunpack.c.l.b16 %v1159
        %v2418 = vunpack.c.h.b16 %v1159
        %v2419 = vunpack.c.l.b16 %v1160
        %v2420 = vunpack.c.h.b16 %v1160
        %v2421 = vunpack.c.l.b16 %v1161
        %v2422 = vunpack.c.h.b16 %v1161
        %v2423 = vunpack.c.l.b16 %v1162
        %v2424 = vunpack.c.h.b16 %v1162
        %v2425 = vunpack.c.l.b16 %v1163
        %v2426 = vunpack.c.h.b16 %v1163
        %v2427 = vunpack.c.l.b16 %v1164
        %v2428 = vunpack.c.h.b16 %v1164
        %v2429 = vunpack.c.l.b16 %v1165
        %v2430 = vunpack.c.h.b16 %v1165
        %v2431 = vunpack.c.l.b16 %v1166
        %v2432 = vunpack.c.h.b16 %v1166
        %v2433 = vunpack.c.l.b16 %v1167
        %v2434 = vunpack.c.h.b16 %v1167
        %v2435 = vunpack.c.l.b16 %v1168
        %v2436 = vunpack.c.h.b16 %v1168
        %v2437 = vunpack.c.l.b16 %v1169
        %v2438 = vunpack.c.h.b16 %v1169
        %v2439 = vunpack.c.l.b16 %v1170
        %v2440 = vunpack.c.h.b16 %v1170
        %v2441 = vunpack.c.l.b16 %v1171
        %v2442 = vunpack.c.h.b16 %v1171
        %v2443 = vunpack.c.l.b16 %v1172
        %v2444 = vunpack.c.h.b16 %v1172
        %v2445 = vunpack.c.l.b16 %v1173
        %v2446 = vunpack.c.h.b16 %v1173
        %v2447 = vunpack.c.l.b16 %v1174
        %v2448 = vunpack.c.h.b16 %v1174
        %v2449 = vunpack.c.l.b16 %v1175
        %v2450 = vunpack.c.h.b16 %v1175
        %v2451 = vunpack.c.l.b16 %v1176
        %v2452 = vunpack.c.h.b16 %v1176
        %v2453 = vunpack.c.l.b16 %v1177
        %v2454 = vunpack.c.h.b16 %v1177
        %v2455 = vunpack.c.l.b16 %v1178
        %v2456 = vunpack.c.h.b16 %v1178
        %v2457 = vunpack.c.l.b16 %v1179
        %v2458 = vunpack.c.h.b16 %v1179
        %v2459 = vunpack.c.l.b16 %v1180
        %v2460 = vunpack.c.h.b16 %v1180
        %v2461 = vunpack.c.l.b16 %v1181
        %v2462 = vunpack.c.h.b16 %v1181
        %v2463 = vunpack.c.l.b16 %v1182
        %v2464 = vunpack.c.h.b16 %v1182
        %v2465 = vunpack.c.l.b16 %v1183
        %v2466 = vunpack.c.h.b16 %v1183
        %v2467 = vunpack.c.l.b16 %v1184
        %v2468 = vunpack.c.h.b16 %v1184
        %v2469 = vunpack.c.l.b16 %v1185
        %v2470 = vunpack.c.h.b16 %v1185
        %v2471 = vunpack.c.l.b16 %v1186
        %v2472 = vunpack.c.h.b16 %v1186
        %v2473 = vunpack.c.l.b16 %v1187
        %v2474 = vunpack.c.h.b16 %v1187
        %v2475 = vunpack.c.l.b16 %v1188
        %v2476 = vunpack.c.h.b16 %v1188
        %v2477 = vunpack.c.l.b16 %v1189
        %v2478 = vunpack.c.h.b16 %v1189
        %v2479 = vunpack.c.l.b16 %v1190
        %v2480 = vunpack.c.h.b16 %v1190
        %v2481 = vunpack.c.l.b16 %v1191
        %v2482 = vunpack.c.h.b16 %v1191
        %v2483 = vunpack.c.l.b16 %v1192
        %v2484 = vunpack.c.h.b16 %v1192
        %v2485 = vunpack.c.l.b16 %v1193
        %v2486 = vunpack.c.h.b16 %v1193
        %v2487 = vunpack.c.l.b16 %v1194
        %v2488 = vunpack.c.h.b16 %v1194
        %v2489 = vunpack.c.l.b16 %v1195
        %v2490 = vunpack.c.h.b16 %v1195
        %v2491 = vunpack.c.l.b16 %v1196
        %v2492 = vunpack.c.h.b16 %v1196
        %v2493 = vunpack.c.l.b16 %v1197
        %v2494 = vunpack.c.h.b16 %v1197
        %v2495 = vunpack.c.l.b16 %v1198
        %v2496 = vunpack.c.h.b16 %v1198
        %v2497 = vunpack.c.l.b16 %v1199
        %v2498 = vunpack.c.h.b16 %v1199
        %v2499 = vunpack.c.l.b16 %v1200
        %v2500 = vunpack.c.h.b16 %v1200
        %v2501 = vunpack.c.l.b16 %v1201
        %v2502 = vunpack.c.h.b16 %v1201
        %v2503 = vunpack.c.l.b16 %v1202
        %v2504 = vunpack.c.h.b16 %v1202
        %v2505 = vunpack.c.l.b16 %v1203
        %v2506 = vunpack.c.h.b16 %v1203
        %v2507 = vunpack.c.l.b16 %v1204
        %v2508 = vunpack.c.h.b16 %v1204
        %v2509 = vunpack.c.l.b16 %v1205
        %v2510 = vunpack.c.h.b16 %v1205
        %v2511 = vunpack.c.l.b16 %v1206
        %v2512 = vunpack.c.h.b16 %v1206
        %v2513 = vunpack.c.l.b16 %v1207
        %v2514 = vunpack.c.h.b16 %v1207
        %v2515 = vunpack.c.l.b16 %v1208
        %v2516 = vunpack.c.h.b16 %v1208
        %v2517 = vunpack.c.l.b16 %v1209
        %v2518 = vunpack.c.h.b16 %v1209
        %v2519 = vunpack.c.l.b16 %v1210
        %v2520 = vunpack.c.h.b16 %v1210
        %v2521 = vunpack.c.l.b16 %v1211
        %v2522 = vunpack.c.h.b16 %v1211
        %v2523 = vunpack.c.l.b16 %v1212
        %v2524 = vunpack.c.h.b16 %v1212
        %v2525 = vunpack.c.l.b16 %v1213
        %v2526 = vunpack.c.h.b16 %v1213
        %v2527 = vunpack.c.l.b16 %v1214
        %v2528 = vunpack.c.h.b16 %v1214
        %v2529 = vunpack.c.l.b16 %v1215
        %v2530 = vunpack.c.h.b16 %v1215
        %v2531 = vunpack.c.l.b16 %v1216
        %v2532 = vunpack.c.h.b16 %v1216
        %v2533 = vunpack.c.l.b16 %v1217
        %v2534 = vunpack.c.h.b16 %v1217
        %v2535 = vunpack.c.l.b16 %v1218
        %v2536 = vunpack.c.h.b16 %v1218
        %v2537 = vunpack.c.l.b16 %v1219
        %v2538 = vunpack.c.h.b16 %v1219
        %v2539 = vunpack.c.l.b16 %v1220
        %v2540 = vunpack.c.h.b16 %v1220
        %v2541 = vunpack.c.l.b16 %v1221
        %v2542 = vunpack.c.h.b16 %v1221
        %v2543 = vunpack.c.l.b16 %v1222
        %v2544 = vunpack.c.h.b16 %v1222
        %v2545 = vunpack.c.l.b16 %v1223
        %v2546 = vunpack.c.h.b16 %v1223
        %v2547 = vunpack.c.l.b16 %v1224
        %v2548 = vunpack.c.h.b16 %v1224
        %v2549 = vunpack.c.l.b16 %v1225
        %v2550 = vunpack.c.h.b16 %v1225
        %v2551 = vunpack.c.l.b16 %v1226
        %v2552 = vunpack.c.h.b16 %v1226
        %v2553 = vunpack.c.l.b16 %v1227
        %v2554 = vunpack.c.h.b16 %v1227
        %v2555 = vunpack.c.l.b16 %v1228
        %v2556 = vunpack.c.h.b16 %v1228
        %v2557 = vunpack.c.l.b16 %v1229
        %v2558 = vunpack.c.h.b16 %v1229
        %v2559 = vunpack.c.l.b16 %v1230
        %v2560 = vunpack.c.h.b16 %v1230
        %v2561 = vunpack.c.l.b16 %v1231
        %v2562 = vunpack.c.h.b16 %v1231
        %v2563 = vunpack.c.l.b16 %v1232
        %v2564 = vunpack.c.h.b16 %v1232
        %v2565 = vunpack.c.l.b16 %v1233
        %v2566 = vunpack.c.h.b16 %v1233
        %v2567 = vunpack.c.l.b16 %v1234
        %v2568 = vunpack.c.h.b16 %v1234
        %v2569 = vunpack.c.l.b16 %v1235
        %v2570 = vunpack.c.h.b16 %v1235
        %v2571 = vunpack.c.l.b16 %v1236
        %v2572 = vunpack.c.h.b16 %v1236
        %v2573 = vunpack.c.l.b16 %v1237
        %v2574 = vunpack.c.h.b16 %v1237
        %v2575 = vunpack.c.l.b16 %v1238
        %v2576 = vunpack.c.h.b16 %v1238
        %v2577 = vunpack.c.l.b16 %v1239
        %v2578 = vunpack.c.h.b16 %v1239
        %v2579 = vunpack.c.l.b16 %v1240
        %v2580 = vunpack.c.h.b16 %v1240
        %v2581 = vunpack.c.l.b16 %v1241
        %v2582 = vunpack.c.h.b16 %v1241
        %v2583 = vunpack.c.l.b16 %v1242
        %v2584 = vunpack.c.h.b16 %v1242
        %v2585 = vunpack.c.l.b16 %v1243
        %v2586 = vunpack.c.h.b16 %v1243
        %v2587 = vunpack.c.l.b16 %v1244
        %v2588 = vunpack.c.h.b16 %v1244
        %v2589 = vunpack.c.l.b16 %v1245
        %v2590 = vunpack.c.h.b16 %v1245
        %v2591 = vunpack.c.l.b16 %v1246
        %v2592 = vunpack.c.h.b16 %v1246
        %v2593 = vunpack.c.l.b16 %v1247
        %v2594 = vunpack.c.h.b16 %v1247
        %v2595 = vunpack.c.l.b16 %v1248
        %v2596 = vunpack.c.h.b16 %v1248
        %v2597 = vunpack.c.l.b16 %v1249
        %v2598 = vunpack.c.h.b16 %v1249
        %v2599 = vunpack.c.l.b16 %v1250
        %v2600 = vunpack.c.h.b16 %v1250
        %v2601 = vunpack.c.l.b16 %v1251
        %v2602 = vunpack.c.h.b16 %v1251
        %v2603 = vunpack.c.l.b16 %v1252
        %v2604 = vunpack.c.h.b16 %v1252
        %v2605 = vunpack.c.l.b16 %v1253
        %v2606 = vunpack.c.h.b16 %v1253
        %v2607 = vunpack.c.l.b16 %v1254
        %v2608 = vunpack.c.h.b16 %v1254
        %v2609 = vunpack.c.l.b16 %v1255
        %v2610 = vunpack.c.h.b16 %v1255
        %v2611 = vunpack.c.l.b16 %v1256
        %v2612 = vunpack.c.h.b16 %v1256
        %v2613 = vunpack.c.l.b16 %v1257
        %v2614 = vunpack.c.h.b16 %v1257
        %v2615 = vunpack.c.l.b16 %v1258
        %v2616 = vunpack.c.h.b16 %v1258
        %v2617 = vunpack.c.l.b16 %v1259
        %v2618 = vunpack.c.h.b16 %v1259
        %v2619 = vunpack.c.l.b16 %v1260
        %v2620 = vunpack.c.h.b16 %v1260
        %v2621 = vunpack.c.l.b16 %v1261
        %v2622 = vunpack.c.h.b16 %v1261
        %v2623 = vunpack.c.l.b16 %v1262
        %v2624 = vunpack.c.h.b16 %v1262
        %v2625 = vunpack.c.l.b16 %v1263
        %v2626 = vunpack.c.h.b16 %v1263
        %v2627 = vunpack.c.l.b16 %v1264
        %v2628 = vunpack.c.h.b16 %v1264
        %v2629 = vunpack.c.l.b16 %v1265
        %v2630 = vunpack.c.h.b16 %v1265
        %v2631 = vunpack.c.l.b16 %v1266
        %v2632 = vunpack.c.h.b16 %v1266
        %v2633 = vunpack.c.l.b16 %v1267
        %v2634 = vunpack.c.h.b16 %v1267
        %v2635 = vunpack.c.l.b16 %v1268
        %v2636 = vunpack.c.h.b16 %v1268
        %v2637 = vunpack.c.l.b16 %v1269
        %v2638 = vunpack.c.h.b16 %v1269
        %v2639 = vunpack.c.l.b16 %v1270
        %v2640 = vunpack.c.h.b16 %v1270
        %v2641 = vunpack.c.l.b16 %v1271
        %v2642 = vunpack.c.h.b16 %v1271
        %v2643 = vunpack.c.l.b16 %v1272
        %v2644 = vunpack.c.h.b16 %v1272
        %v2645 = vunpack.c.l.b16 %v1273
        %v2646 = vunpack.c.h.b16 %v1273
        %v2647 = vunpack.c.l.b16 %v1274
        %v2648 = vunpack.c.h.b16 %v1274
        %v2649 = vunpack.c.l.b16 %v1275
        %v2650 = vunpack.c.h.b16 %v1275
        %v2651 = vunpack.c.l.b16 %v1276
        %v2652 = vunpack.c.h.b16 %v1276
        %v2653 = vunpack.c.l.b16 %v1277
        %v2654 = vunpack.c.h.b16 %v1277
        %v2655 = vunpack.c.l.b16 %v1278
        %v2656 = vunpack.c.h.b16 %v1278
        %v2657 = vunpack.c.l.b16 %v1279
        %v2658 = vunpack.c.h.b16 %v1279
        %v2659 = vunpack.c.l.b16 %v1280
        %v2660 = vunpack.c.h.b16 %v1280
        %v2661 = vunpack.c.l.b16 %v1281
        %v2662 = vunpack.c.h.b16 %v1281
        %v2663 = vunpack.c.l.b16 %v1282
        %v2664 = vunpack.c.h.b16 %v1282
        %v2665 = vunpack.c.l.b16 %v1283
        %v2666 = vunpack.c.h.b16 %v1283
        %v2667 = vunpack.c.l.b16 %v1284
        %v2668 = vunpack.c.h.b16 %v1284
        %v2669 = vunpack.c.l.b16 %v1285
        %v2670 = vunpack.c.h.b16 %v1285
        %v2671 = vunpack.c.l.b16 %v1286
        %v2672 = vunpack.c.h.b16 %v1286
        %v2673 = vunpack.c.l.b16 %v1287
        %v2674 = vunpack.c.h.b16 %v1287
        %v2675 = vunpack.c.l.b16 %v1288
        %v2676 = vunpack.c.h.b16 %v1288
        %v2677 = vunpack.c.l.b16 %v1289
        %v2678 = vunpack.c.h.b16 %v1289
        %v2679 = vunpack.c.l.b16 %v1290
        %v2680 = vunpack.c.h.b16 %v1290
        %v2681 = vunpack.c.l.b16 %v1291
        %v2682 = vunpack.c.h.b16 %v1291
        %v2683 = vunpack.c.l.b16 %v1292
        %v2684 = vunpack.c.h.b16 %v1292
        %v2685 = vunpack.c.l.b16 %v1293
        %v2686 = vunpack.c.h.b16 %v1293
        %v2687 = vunpack.c.l.b16 %v1294
        %v2688 = vunpack.c.h.b16 %v1294
        %v2689 = vunpack.c.l.b16 %v1295
        %v2690 = vunpack.c.h.b16 %v1295
        %v2691 = vunpack.c.l.b16 %v1296
        %v2692 = vunpack.c.h.b16 %v1296
        %v2693 = vunpack.c.l.b16 %v1297
        %v2694 = vunpack.c.h.b16 %v1297
        %v2695 = vunpack.c.l.b16 %v1298
        %v2696 = vunpack.c.h.b16 %v1298
        %v2697 = vunpack.c.l.b16 %v1299
        %v2698 = vunpack.c.h.b16 %v1299
        %v2699 = vunpack.c.l.b16 %v1300
        %v2700 = vunpack.c.h.b16 %v1300
        %v2701 = vunpack.c.l.b16 %v1301
        %v2702 = vunpack.c.h.b16 %v1301
        %v2703 = vunpack.c.l.b16 %v1302
        %v2704 = vunpack.c.h.b16 %v1302
        %v2705 = vunpack.c.l.b16 %v1303
        %v2706 = vunpack.c.h.b16 %v1303
        %v2707 = vunpack.c.l.b16 %v1304
        %v2708 = vunpack.c.h.b16 %v1304
        %v2709 = vunpack.c.l.b16 %v1305
        %v2710 = vunpack.c.h.b16 %v1305
        %v2711 = vunpack.c.l.b16 %v1306
        %v2712 = vunpack.c.h.b16 %v1306
        %v2713 = vunpack.c.l.b16 %v1307
        %v2714 = vunpack.c.h.b16 %v1307
        %v2715 = vunpack.c.l.b16 %v1308
        %v2716 = vunpack.c.h.b16 %v1308
        %v2717 = vunpack.c.l.b16 %v1309
        %v2718 = vunpack.c.h.b16 %v1309
        %v2719 = vunpack.c.l.b16 %v1310
        %v2720 = vunpack.c.h.b16 %v1310
        %v2721 = vunpack.c.l.b16 %v1311
        %v2722 = vunpack.c.h.b16 %v1311
        %v2723 = vunpack.c.l.b16 %v1312
        %v2724 = vunpack.c.h.b16 %v1312
        %v2725 = vunpack.c.l.b16 %v1313
        %v2726 = vunpack.c.h.b16 %v1313
        %v2727 = vunpack.c.l.b16 %v1314
        %v2728 = vunpack.c.h.b16 %v1314
        %v2729 = vunpack.c.l.b16 %v1315
        %v2730 = vunpack.c.h.b16 %v1315
        %v2731 = vunpack.c.l.b16 %v1316
        %v2732 = vunpack.c.h.b16 %v1316
        %v2733 = vunpack.c.l.b16 %v1317
        %v2734 = vunpack.c.h.b16 %v1317
        %v2735 = vunpack.c.l.b16 %v1318
        %v2736 = vunpack.c.h.b16 %v1318
        %v2737 = vunpack.c.l.b16 %v1319
        %v2738 = vunpack.c.h.b16 %v1319
        %v2739 = vunpack.c.l.b16 %v1320
        %v2740 = vunpack.c.h.b16 %v1320
        %v2741 = vunpack.c.l.b16 %v1321
        %v2742 = vunpack.c.h.b16 %v1321
        %v2743 = vunpack.c.l.b16 %v1322
        %v2744 = vunpack.c.h.b16 %v1322
        %v2745 = vunpack.c.l.b16 %v1323
        %v2746 = vunpack.c.h.b16 %v1323
        %v2747 = vunpack.c.l.b16 %v1324
        %v2748 = vunpack.c.h.b16 %v1324
        %v2749 = vunpack.c.l.b16 %v1325
        %v2750 = vunpack.c.h.b16 %v1325
        %v2751 = vunpack.c.l.b16 %v1326
        %v2752 = vunpack.c.h.b16 %v1326
        %v2753 = vunpack.c.l.b16 %v1327
        %v2754 = vunpack.c.h.b16 %v1327
        %v2755 = vunpack.c.l.b16 %v1328
        %v2756 = vunpack.c.h.b16 %v1328
        %v2757 = vunpack.c.l.b16 %v1329
        %v2758 = vunpack.c.h.b16 %v1329
        %v2759 = vunpack.c.l.b16 %v1330
        %v2760 = vunpack.c.h.b16 %v1330
        %v2761 = vunpack.c.l.b16 %v1331
        %v2762 = vunpack.c.h.b16 %v1331
        %v2763 = vunpack.c.l.b16 %v1332
        %v2764 = vunpack.c.h.b16 %v1332
        %v2765 = vunpack.c.l.b16 %v1333
        %v2766 = vunpack.c.h.b16 %v1333
        %v2767 = vunpack.c.l.b16 %v1334
        %v2768 = vunpack.c.h.b16 %v1334
        %v2769 = vunpack.c.l.b16 %v1335
        %v2770 = vunpack.c.h.b16 %v1335
        %v2771 = vunpack.c.l.b16 %v1336
        %v2772 = vunpack.c.h.b16 %v1336
        %v2773 = vunpack.c.l.b16 %v1337
        %v2774 = vunpack.c.h.b16 %v1337
        %v2775 = vunpack.c.l.b16 %v1338
        %v2776 = vunpack.c.h.b16 %v1338
        %v2777 = vunpack.c.l.b16 %v1339
        %v2778 = vunpack.c.h.b16 %v1339
        %v2779 = vunpack.c.l.b16 %v1340
        %v2780 = vunpack.c.h.b16 %v1340
        %v2781 = vunpack.c.l.b16 %v1341
        %v2782 = vunpack.c.h.b16 %v1341
        %v2783 = vunpack.c.l.b16 %v1342
        %v2784 = vunpack.c.h.b16 %v1342
        %v2785 = vunpack.c.l.b16 %v1343
        %v2786 = vunpack.c.h.b16 %v1343
        %v2787 = vunpack.c.l.b16 %v1344
        %v2788 = vunpack.c.h.b16 %v1344
        %v2789 = vunpack.c.l.b16 %v1345
        %v2790 = vunpack.c.h.b16 %v1345
        %v2791 = vunpack.c.l.b16 %v1346
        %v2792 = vunpack.c.h.b16 %v1346
        %v2793 = vunpack.c.l.b16 %v1347
        %v2794 = vunpack.c.h.b16 %v1347
        %v2795 = vunpack.c.l.b16 %v1348
        %v2796 = vunpack.c.h.b16 %v1348
        %v2797 = vunpack.c.l.b16 %v1349
        %v2798 = vunpack.c.h.b16 %v1349
        %v2799 = vunpack.c.l.b16 %v1350
        %v2800 = vunpack.c.h.b16 %v1350
        %v2801 = vunpack.c.l.b16 %v1351
        %v2802 = vunpack.c.h.b16 %v1351
        %v2803 = vunpack.c.l.b16 %v1352
        %v2804 = vunpack.c.h.b16 %v1352
        %v2805 = vunpack.c.l.b16 %v1353
        %v2806 = vunpack.c.h.b16 %v1353
        %v2807 = vunpack.c.l.b16 %v1354
        %v2808 = vunpack.c.h.b16 %v1354
        %v2809 = vunpack.c.l.b16 %v1355
        %v2810 = vunpack.c.h.b16 %v1355
        %v2811 = vunpack.c.l.b16 %v1356
        %v2812 = vunpack.c.h.b16 %v1356
        %v2813 = vunpack.c.l.b16 %v1357
        %v2814 = vunpack.c.h.b16 %v1357
        %v2815 = vunpack.c.l.b16 %v1358
        %v2816 = vunpack.c.h.b16 %v1358
        %v2817 = vunpack.c.l.b16 %v1359
        %v2818 = vunpack.c.h.b16 %v1359
        %v2819 = vunpack.c.l.b16 %v1360
        %v2820 = vunpack.c.h.b16 %v1360
        %v2821 = vunpack.c.l.b16 %v1361
        %v2822 = vunpack.c.h.b16 %v1361
        %v2823 = vunpack.c.l.b16 %v1362
        %v2824 = vunpack.c.h.b16 %v1362
        %v2825 = vunpack.c.l.b16 %v1363
        %v2826 = vunpack.c.h.b16 %v1363
        %v2827 = vunpack.c.l.b16 %v1364
        %v2828 = vunpack.c.h.b16 %v1364
        %v2829 = vunpack.c.l.b16 %v1365
        %v2830 = vunpack.c.h.b16 %v1365
        %v2831 = vunpack.c.l.b16 %v1366
        %v2832 = vunpack.c.h.b16 %v1366
        %v2833 = vunpack.c.l.b16 %v1367
        %v2834 = vunpack.c.h.b16 %v1367
        %v2835 = vunpack.c.l.b16 %v1368
        %v2836 = vunpack.c.h.b16 %v1368
        %v2837 = vunpack.c.l.b16 %v1369
        %v2838 = vunpack.c.h.b16 %v1369
        %v2839 = vunpack.c.l.b16 %v1370
        %v2840 = vunpack.c.h.b16 %v1370
        %v2841 = vunpack.c.l.b16 %v1371
        %v2842 = vunpack.c.h.b16 %v1371
        %v2843 = vunpack.c.l.b16 %v1372
        %v2844 = vunpack.c.h.b16 %v1372
        %v2845 = vunpack.c.l.b16 %v1373
        %v2846 = vunpack.c.h.b16 %v1373
        %v2847 = vunpack.c.l.b16 %v1374
        %v2848 = vunpack.c.h.b16 %v1374
        %v2849 = vunpack.c.l.b16 %v1375
        %v2850 = vunpack.c.h.b16 %v1375
        %v2851 = vunpack.c.l.b16 %v1376
        %v2852 = vunpack.c.h.b16 %v1376
        %v2853 = vunpack.c.l.b16 %v1377
        %v2854 = vunpack.c.h.b16 %v1377
        %v2855 = vunpack.c.l.b16 %v1378
        %v2856 = vunpack.c.h.b16 %v1378
        %v2857 = vunpack.c.l.b16 %v1379
        %v2858 = vunpack.c.h.b16 %v1379
        %v2859 = vunpack.c.l.b16 %v1380
        %v2860 = vunpack.c.h.b16 %v1380
        %v2861 = vunpack.c.l.b16 %v1381
        %v2862 = vunpack.c.h.b16 %v1381
        %v2863 = vunpack.c.l.b16 %v1382
        %v2864 = vunpack.c.h.b16 %v1382
        %v2865 = vunpack.c.l.b16 %v1383
        %v2866 = vunpack.c.h.b16 %v1383
        %v2867 = vunpack.c.l.b16 %v1384
        %v2868 = vunpack.c.h.b16 %v1384
        %v2869 = vunpack.c.l.b16 %v1385
        %v2870 = vunpack.c.h.b16 %v1385
        %v2871 = vunpack.c.l.b16 %v1386
        %v2872 = vunpack.c.h.b16 %v1386
        %v2873 = vunpack.c.l.b16 %v1387
        %v2874 = vunpack.c.h.b16 %v1387
        %v2875 = vunpack.c.l.b16 %v1388
        %v2876 = vunpack.c.h.b16 %v1388
        %v2877 = vunpack.c.l.b16 %v1389
        %v2878 = vunpack.c.h.b16 %v1389
        %v2879 = vunpack.c.l.b16 %v1390
        %v2880 = vunpack.c.h.b16 %v1390
        %v2881 = vunpack.c.l.b16 %v1391
        %v2882 = vunpack.c.h.b16 %v1391
        %v2883 = vunpack.c.l.b16 %v1392
        %v2884 = vunpack.c.h.b16 %v1392
        %v2885 = vunpack.c.l.b16 %v1393
        %v2886 = vunpack.c.h.b16 %v1393
        %v2887 = vunpack.c.l.b16 %v1394
        %v2888 = vunpack.c.h.b16 %v1394
        %v2889 = vunpack.c.l.b16 %v1395
        %v2890 = vunpack.c.h.b16 %v1395
        %v2891 = vunpack.c.l.b16 %v1396
        %v2892 = vunpack.c.h.b16 %v1396
        %v2893 = vunpack.c.l.b16 %v1397
        %v2894 = vunpack.c.h.b16 %v1397
        %v2895 = vunpack.c.l.b16 %v1398
        %v2896 = vunpack.c.h.b16 %v1398
        %v2897 = vunpack.c.l.b16 %v1399
        %v2898 = vunpack.c.h.b16 %v1399
        %v2899 = vunpack.c.l.b16 %v1400
        %v2900 = vunpack.c.h.b16 %v1400
        %v2901 = vunpack.c.l.b16 %v1401
        %v2902 = vunpack.c.h.b16 %v1401
        %v2903 = vunpack.c.l.b16 %v1402
        %v2904 = vunpack.c.h.b16 %v1402
        %v2905 = vunpack.c.l.b16 %v1403
        %v2906 = vunpack.c.h.b16 %v1403
        %v2907 = vunpack.c.l.b16 %v1404
        %v2908 = vunpack.c.h.b16 %v1404
        %v2909 = vunpack.c.l.b16 %v1405
        %v2910 = vunpack.c.h.b16 %v1405
        %v2911 = vunpack.c.l.b16 %v1406
        %v2912 = vunpack.c.h.b16 %v1406
        %v2913 = vunpack.c.l.b16 %v1407
        %v2914 = vunpack.c.h.b16 %v1407
        %v2915 = vunpack.c.l.b16 %v1408
        %v2916 = vunpack.c.h.b16 %v1408
        %v2917 = vunpack.c.l.b16 %v1409
        %v2918 = vunpack.c.h.b16 %v1409
        %v2919 = vunpack.c.l.b16 %v1410
        %v2920 = vunpack.c.h.b16 %v1410
        %v2921 = vunpack.c.l.b16 %v1411
        %v2922 = vunpack.c.h.b16 %v1411
        %v2923 = vunpack.c.l.b16 %v1412
        %v2924 = vunpack.c.h.b16 %v1412
        %v2925 = vunpack.c.l.b16 %v1413
        %v2926 = vunpack.c.h.b16 %v1413
        %v2927 = vunpack.c.l.b16 %v1414
        %v2928 = vunpack.c.h.b16 %v1414
        %v2929 = vunpack.c.l.b16 %v1415
        %v2930 = vunpack.c.h.b16 %v1415
        %v2931 = vunpack.c.l.b16 %v1416
        %v2932 = vunpack.c.h.b16 %v1416
        %v2933 = vunpack.c.l.b16 %v1417
        %v2934 = vunpack.c.h.b16 %v1417
        %v2935 = vunpack.c.l.b16 %v1418
        %v2936 = vunpack.c.h.b16 %v1418
        %v2937 = vunpack.c.l.b16 %v1419
        %v2938 = vunpack.c.h.b16 %v1419
        %v2939 = vunpack.c.l.b16 %v1420
        %v2940 = vunpack.c.h.b16 %v1420
        %v2941 = vunpack.c.l.b16 %v1421
        %v2942 = vunpack.c.h.b16 %v1421
        %v2943 = vunpack.c.l.b16 %v1422
        %v2944 = vunpack.c.h.b16 %v1422
        %v2945 = vunpack.c.l.b16 %v1423
        %v2946 = vunpack.c.h.b16 %v1423
        %v2947 = vunpack.c.l.b16 %v1424
        %v2948 = vunpack.c.h.b16 %v1424
        %v2949 = vunpack.c.l.b16 %v1425
        %v2950 = vunpack.c.h.b16 %v1425
        %v2951 = vunpack.c.l.b16 %v1426
        %v2952 = vunpack.c.h.b16 %v1426
        %v2953 = vunpack.c.l.b16 %v1427
        %v2954 = vunpack.c.h.b16 %v1427
        %v2955 = vunpack.c.l.b16 %v1428
        %v2956 = vunpack.c.h.b16 %v1428
        %v2957 = vunpack.c.l.b16 %v1429
        %v2958 = vunpack.c.h.b16 %v1429
        %v2959 = vunpack.c.l.b16 %v1430
        %v2960 = vunpack.c.h.b16 %v1430
        %v2961 = vunpack.c.l.b16 %v1431
        %v2962 = vunpack.c.h.b16 %v1431
        %v2963 = vunpack.c.l.b16 %v1432
        %v2964 = vunpack.c.h.b16 %v1432
        %v2965 = vunpack.c.l.b16 %v1433
        %v2966 = vunpack.c.h.b16 %v1433
        %v2967 = vunpack.c.l.b16 %v1434
        %v2968 = vunpack.c.h.b16 %v1434
        %v2969 = vunpack.c.l.b16 %v1435
        %v2970 = vunpack.c.h.b16 %v1435
        %v2971 = vunpack.c.l.b16 %v1436
        %v2972 = vunpack.c.h.b16 %v1436
        %v2973 = vunpack.c.l.b16 %v1437
        %v2974 = vunpack.c.h.b16 %v1437
        %v2975 = vunpack.c.l.b16 %v1438
        %v2976 = vunpack.c.h.b16 %v1438
        %v2977 = vunpack.c.l.b16 %v1439
        %v2978 = vunpack.c.h.b16 %v1439
        %v2979 = vunpack.c.l.b16 %v1440
        %v2980 = vunpack.c.h.b16 %v1440
        %v2981 = vunpack.c.l.b16 %v1441
        %v2982 = vunpack.c.h.b16 %v1441
        %v2983 = vunpack.c.l.b16 %v1442
        %v2984 = vunpack.c.h.b16 %v1442
        %v2985 = vunpack.c.l.b16 %v1443
        %v2986 = vunpack.c.h.b16 %v1443
        %v2987 = vunpack.c.l.b16 %v1444
        %v2988 = vunpack.c.h.b16 %v1444
        %v2989 = vunpack.c.l.b16 %v1445
        %v2990 = vunpack.c.h.b16 %v1445
        %v2991 = vunpack.c.l.b16 %v1446
        %v2992 = vunpack.c.h.b16 %v1446
        %v2993 = vunpack.c.l.b16 %v1447
        %v2994 = vunpack.c.h.b16 %v1447
        %v2995 = vunpack.c.l.b16 %v1448
        %v2996 = vunpack.c.h.b16 %v1448
        %v2997 = vunpack.c.l.b16 %v1449
        %v2998 = vunpack.c.h.b16 %v1449
        %v2999 = vunpack.c.l.b16 %v1450
        %v3000 = vunpack.c.h.b16 %v1450
        %v3001 = vunpack.c.l.b16 %v1451
        %v3002 = vunpack.c.h.b16 %v1451
        %v3003 = vunpack.c.l.b16 %v1452
        %v3004 = vunpack.c.h.b16 %v1452
        %v3005 = vunpack.c.l.b16 %v1453
        %v3006 = vunpack.c.h.b16 %v1453
        %v3007 = vunpack.c.l.b16 %v1454
        %v3008 = vunpack.c.h.b16 %v1454
        %v3009 = vunpack.c.l.b16 %v1455
        %v3010 = vunpack.c.h.b16 %v1455
        %v3011 = vunpack.c.l.b16 %v1456
        %v3012 = vunpack.c.h.b16 %v1456
        %v3013 = vunpack.c.l.b16 %v1457
        %v3014 = vunpack.c.h.b16 %v1457
        %v3015 = vunpack.c.l.b16 %v1458
        %v3016 = vunpack.c.h.b16 %v1458
        %v3017 = vunpack.c.l.b16 %v1459
        %v3018 = vunpack.c.h.b16 %v1459
        %v3019 = vunpack.c.l.b16 %v1460
        %v3020 = vunpack.c.h.b16 %v1460
        %v3021 = vunpack.c.l.b16 %v1461
        %v3022 = vunpack.c.h.b16 %v1461
        %v3023 = vunpack.c.l.b16 %v1462
        %v3024 = vunpack.c.h.b16 %v1462
        %v3025 = vunpack.c.l.b16 %v1463
        %v3026 = vunpack.c.h.b16 %v1463
        %v3027 = vunpack.c.l.b16 %v1464
        %v3028 = vunpack.c.h.b16 %v1464
        %v3029 = vunpack.c.l.b16 %v1465
        %v3030 = vunpack.c.h.b16 %v1465
        %v3031 = vunpack.c.l.b16 %v1466
        %v3032 = vunpack.c.h.b16 %v1466
        %v3033 = vunpack.c.l.b16 %v1467
        %v3034 = vunpack.c.h.b16 %v1467
        %v3035 = vunpack.c.l.b16 %v1468
        %v3036 = vunpack.c.h.b16 %v1468
        %v3037 = vunpack.c.l.b16 %v1469
        %v3038 = vunpack.c.h.b16 %v1469
        %v3039 = vunpack.c.l.b16 %v1470
        %v3040 = vunpack.c.h.b16 %v1470
        %v3041 = vunpack.c.l.b16 %v1471
        %v3042 = vunpack.c.h.b16 %v1471
        %v3043 = vunpack.c.l.b16 %v1472
        %v3044 = vunpack.c.h.b16 %v1472
        %v3045 = vunpack.c.l.b16 %v1473
        %v3046 = vunpack.c.h.b16 %v1473
        %v3047 = vunpack.c.l.b16 %v1474
        %v3048 = vunpack.c.h.b16 %v1474
        %v3049 = vunpack.c.l.b16 %v1475
        %v3050 = vunpack.c.h.b16 %v1475
        %v3051 = vunpack.c.l.b16 %v1476
        %v3052 = vunpack.c.h.b16 %v1476
        %v3053 = vunpack.c.l.b16 %v1477
        %v3054 = vunpack.c.h.b16 %v1477
        %v3055 = vunpack.c.l.b16 %v1478
        %v3056 = vunpack.c.h.b16 %v1478
        %v3057 = vunpack.c.l.b16 %v1479
        %v3058 = vunpack.c.h.b16 %v1479
        %v3059 = vunpack.c.l.b16 %v1480
        %v3060 = vunpack.c.h.b16 %v1480
        %v3061 = vunpack.c.l.b16 %v1481
        %v3062 = vunpack.c.h.b16 %v1481
        %v3063 = vunpack.c.l.b16 %v1482
        %v3064 = vunpack.c.h.b16 %v1482
        %v3065 = vunpack.c.l.b16 %v1483
        %v3066 = vunpack.c.h.b16 %v1483
        %v3067 = vunpack.c.l.b16 %v1484
        %v3068 = vunpack.c.h.b16 %v1484
        %v3069 = vunpack.c.l.b16 %v1485
        %v3070 = vunpack.c.h.b16 %v1485
        %v3071 = vunpack.c.l.b16 %v1486
        %v3072 = vunpack.c.h.b16 %v1486
        %v3073 = vunpack.c.l.b16 %v1487
        %v3074 = vunpack.c.h.b16 %v1487
        %v3075 = vunpack.c.l.b16 %v1488
        %v3076 = vunpack.c.h.b16 %v1488
        %v3077 = vunpack.c.l.b16 %v1489
        %v3078 = vunpack.c.h.b16 %v1489
        %v3079 = vunpack.c.l.b16 %v1490
        %v3080 = vunpack.c.h.b16 %v1490
        %v3081 = vunpack.c.l.b16 %v1491
        %v3082 = vunpack.c.h.b16 %v1491
        %v3083 = vunpack.c.l.b16 %v1492
        %v3084 = vunpack.c.h.b16 %v1492
        %v3085 = vunpack.c.l.b16 %v1493
        %v3086 = vunpack.c.h.b16 %v1493
        %v3087 = vunpack.c.l.b16 %v1494
        %v3088 = vunpack.c.h.b16 %v1494
        %v3089 = vunpack.c.l.b16 %v1495
        %v3090 = vunpack.c.h.b16 %v1495
        %v3091 = vunpack.c.l.b16 %v1496
        %v3092 = vunpack.c.h.b16 %v1496
        %v3093 = vunpack.c.l.b16 %v1497
        %v3094 = vunpack.c.h.b16 %v1497
        %v3095 = vunpack.c.l.b16 %v1498
        %v3096 = vunpack.c.h.b16 %v1498
        %v3097 = vunpack.c.l.b16 %v1499
        %v3098 = vunpack.c.h.b16 %v1499
        %v3099 = vunpack.c.l.b16 %v1500
        %v3100 = vunpack.c.h.b16 %v1500
        %v3101 = vunpack.c.l.b16 %v1501
        %v3102 = vunpack.c.h.b16 %v1501
        %v3103 = vunpack.c.l.b16 %v1502
        %v3104 = vunpack.c.h.b16 %v1502
        %v3105 = vunpack.c.l.b16 %v1503
        %v3106 = vunpack.c.h.b16 %v1503
        %v3107 = vunpack.c.l.b16 %v1504
        %v3108 = vunpack.c.h.b16 %v1504
        %v3109 = vunpack.c.l.b16 %v1505
        %v3110 = vunpack.c.h.b16 %v1505
        %v3111 = vunpack.c.l.b16 %v1506
        %v3112 = vunpack.c.h.b16 %v1506
        %v3113 = vunpack.c.l.b16 %v1507
        %v3114 = vunpack.c.h.b16 %v1507
        %v3115 = vunpack.c.l.b16 %v1508
        %v3116 = vunpack.c.h.b16 %v1508
        %v3117 = vunpack.c.l.b16 %v1509
        %v3118 = vunpack.c.h.b16 %v1509
        %v3119 = vunpack.c.l.b16 %v1510
        %v3120 = vunpack.c.h.b16 %v1510
        %v3121 = vunpack.c.l.b16 %v1511
        %v3122 = vunpack.c.h.b16 %v1511
        %v3123 = vunpack.c.l.b16 %v1512
        %v3124 = vunpack.c.h.b16 %v1512
        %v3125 = vunpack.c.l.b16 %v1513
        %v3126 = vunpack.c.h.b16 %v1513
        %v3127 = vunpack.c.l.b16 %v1514
        %v3128 = vunpack.c.h.b16 %v1514
        %v3129 = vunpack.c.l.b16 %v1515
        %v3130 = vunpack.c.h.b16 %v1515
        %v3131 = vunpack.c.l.b16 %v1516
        %v3132 = vunpack.c.h.b16 %v1516
        %v3133 = vunpack.c.l.b16 %v1517
        %v3134 = vunpack.c.h.b16 %v1517
        %v3135 = vunpack.c.l.b16 %v1518
        %v3136 = vunpack.c.h.b16 %v1518
        %v3137 = vunpack.c.l.b16 %v1519
        %v3138 = vunpack.c.h.b16 %v1519
        %v3139 = vunpack.c.l.b16 %v1520
        %v3140 = vunpack.c.h.b16 %v1520
        %v3141 = vunpack.c.l.b16 %v1521
        %v3142 = vunpack.c.h.b16 %v1521
        %v3143 = vunpack.c.l.b16 %v1522
        %v3144 = vunpack.c.h.b16 %v1522
        %v3145 = vunpack.c.l.b16 %v1523
        %v3146 = vunpack.c.h.b16 %v1523
        %v3147 = vunpack.c.l.b16 %v1524
        %v3148 = vunpack.c.h.b16 %v1524
        %v3149 = vunpack.c.l.b16 %v1525
        %v3150 = vunpack.c.h.b16 %v1525
        %v3151 = vunpack.c.l.b16 %v1526
        %v3152 = vunpack.c.h.b16 %v1526
        %v3153 = vunpack.c.l.b16 %v1527
        %v3154 = vunpack.c.h.b16 %v1527
        %v3155 = vunpack.c.l.b16 %v1528
        %v3156 = vunpack.c.h.b16 %v1528
        %v3157 = vunpack.c.l.b16 %v1529
        %v3158 = vunpack.c.h.b16 %v1529
        %v3159 = vunpack.c.l.b16 %v1530
        %v3160 = vunpack.c.h.b16 %v1530
        %v3161 = vunpack.c.l.b16 %v1531
        %v3162 = vunpack.c.h.b16 %v1531
        %v3163 = vunpack.c.l.b16 %v1532
        %v3164 = vunpack.c.h.b16 %v1532
        %v3165 = vunpack.c.l.b16 %v1533
        %v3166 = vunpack.c.h.b16 %v1533
        %v3167 = vunpack.c.l.b16 %v1534
        %v3168 = vunpack.c.h.b16 %v1534
        %v3169 = vunpack.c.l.b16 %v1535
        %v3170 = vunpack.c.h.b16 %v1535
        %v3171 = vunpack.c.l.b16 %v1536
        %v3172 = vunpack.c.h.b16 %v1536
        %v3173 = vunpack.c.l.b16 %v1537
        %v3174 = vunpack.c.h.b16 %v1537
        %v3175 = vunpack.c.l.b16 %v1538
        %v3176 = vunpack.c.h.b16 %v1538
        %v3177 = vunpack.c.l.b16 %v1539
        %v3178 = vunpack.c.h.b16 %v1539
        %v3179 = vunpack.c.l.b16 %v1540
        %v3180 = vunpack.c.h.b16 %v1540
        %v3181 = vunpack.c.l.b16 %v1541
        %v3182 = vunpack.c.h.b16 %v1541
        %v3183 = vunpack.c.l.b16 %v1542
        %v3184 = vunpack.c.h.b16 %v1542
        %v3185 = vunpack.c.l.b16 %v1543
        %v3186 = vunpack.c.h.b16 %v1543
        %v3187 = vunpack.c.l.b16 %v1544
        %v3188 = vunpack.c.h.b16 %v1544
        %v3189 = vunpack.c.l.b16 %v1545
        %v3190 = vunpack.c.h.b16 %v1545
        %v3191 = vunpack.c.l.b16 %v1546
        %v3192 = vunpack.c.h.b16 %v1546
        %v3193 = vunpack.c.l.b16 %v1547
        %v3194 = vunpack.c.h.b16 %v1547
        %v3195 = vunpack.c.l.b16 %v1548
        %v3196 = vunpack.c.h.b16 %v1548
        %v3197 = vunpack.c.l.b16 %v1549
        %v3198 = vunpack.c.h.b16 %v1549
        %v3199 = vunpack.c.l.b16 %v1550
        %v3200 = vunpack.c.h.b16 %v1550
        %v3201 = vunpack.c.l.b16 %v1551
        %v3202 = vunpack.c.h.b16 %v1551
        %v3203 = vunpack.c.l.b16 %v1552
        %v3204 = vunpack.c.h.b16 %v1552
        %v3205 = vunpack.c.l.b16 %v1553
        %v3206 = vunpack.c.h.b16 %v1553
        %v3207 = vunpack.c.l.b16 %v1554
        %v3208 = vunpack.c.h.b16 %v1554
        %v3209 = vunpack.c.l.b16 %v1555
        %v3210 = vunpack.c.h.b16 %v1555
        %v3211 = vunpack.c.l.b16 %v1556
        %v3212 = vunpack.c.h.b16 %v1556
        %v3213 = vunpack.c.l.b16 %v1557
        %v3214 = vunpack.c.h.b16 %v1557
        %v3215 = vunpack.c.l.b16 %v1558
        %v3216 = vunpack.c.h.b16 %v1558
        %v3217 = vunpack.c.l.b16 %v1559
        %v3218 = vunpack.c.h.b16 %v1559
        %v3219 = vunpack.c.l.b16 %v1560
        %v3220 = vunpack.c.h.b16 %v1560
        %v3221 = vunpack.c.l.b16 %v1561
        %v3222 = vunpack.c.h.b16 %v1561
        %v3223 = vunpack.c.l.b16 %v1562
        %v3224 = vunpack.c.h.b16 %v1562
        %v3225 = vunpack.c.l.b16 %v1563
        %v3226 = vunpack.c.h.b16 %v1563
        %v3227 = vunpack.c.l.b16 %v1564
        %v3228 = vunpack.c.h.b16 %v1564
        %v3229 = vunpack.c.l.b16 %v1565
        %v3230 = vunpack.c.h.b16 %v1565
        %v3231 = vunpack.c.l.b16 %v1566
        %v3232 = vunpack.c.h.b16 %v1566
        %v3233 = vunpack.c.l.b16 %v1567
        %v3234 = vunpack.c.h.b16 %v1567
        %v3235 = vunpack.c.l.b16 %v1568
        %v3236 = vunpack.c.h.b16 %v1568
        %v3237 = vunpack.c.l.b16 %v1569
        %v3238 = vunpack.c.h.b16 %v1569
        %v3239 = vunpack.c.l.b16 %v1570
        %v3240 = vunpack.c.h.b16 %v1570
        %v3241 = vunpack.c.l.b16 %v1571
        %v3242 = vunpack.c.h.b16 %v1571
        %v3243 = vunpack.c.l.b16 %v1572
        %v3244 = vunpack.c.h.b16 %v1572
        %v3245 = vunpack.c.l.b16 %v1573
        %v3246 = vunpack.c.h.b16 %v1573
        %v3247 = vunpack.c.l.b16 %v1574
        %v3248 = vunpack.c.h.b16 %v1574
        %v3249 = vpack.c.b16 %v2229, %v2225
        %v3250 = vpack.c.b16 %v2230, %v2226
        %v3251 = vpack.c.b16 %v2231, %v2227
        %v3252 = vpack.c.b16 %v2232, %v2228
        %v3253 = vpack.c.b16 %v2237, %v2233
        %v3254 = vpack.c.b16 %v2238, %v2234
        %v3255 = vpack.c.b16 %v2239, %v2235
        %v3256 = vpack.c.b16 %v2240, %v2236
        %v3257 = vpack.c.b16 %v2245, %v2241
        %v3258 = vpack.c.b16 %v2246, %v2242
        %v3259 = vpack.c.b16 %v2247, %v2243
        %v3260 = vpack.c.b16 %v2248, %v2244
        %v3261 = vpack.c.b16 %v2253, %v2249
        %v3262 = vpack.c.b16 %v2254, %v2250
        %v3263 = vpack.c.b16 %v2255, %v2251
        %v3264 = vpack.c.b16 %v2256, %v2252
        %v3265 = vpack.c.b16 %v2261, %v2257
        %v3266 = vpack.c.b16 %v2262, %v2258
        %v3267 = vpack.c.b16 %v2263, %v2259
        %v3268 = vpack.c.b16 %v2264, %v2260
        %v3269 = vpack.c.b16 %v2269, %v2265
        %v3270 = vpack.c.b16 %v2270, %v2266
        %v3271 = vpack.c.b16 %v2271, %v2267
        %v3272 = vpack.c.b16 %v2272, %v2268
        %v3273 = vpack.c.b16 %v2277, %v2273
        %v3274 = vpack.c.b16 %v2278, %v2274
        %v3275 = vpack.c.b16 %v2279, %v2275
        %v3276 = vpack.c.b16 %v2280, %v2276
        %v3277 = vpack.c.b16 %v2285, %v2281
        %v3278 = vpack.c.b16 %v2286, %v2282
        %v3279 = vpack.c.b16 %v2287, %v2283
        %v3280 = vpack.c.b16 %v2288, %v2284
        %v3281 = vpack.c.b16 %v2293, %v2289
        %v3282 = vpack.c.b16 %v2294, %v2290
        %v3283 = vpack.c.b16 %v2295, %v2291
        %v3284 = vpack.c.b16 %v2296, %v2292
        %v3285 = vpack.c.b16 %v2301, %v2297
        %v3286 = vpack.c.b16 %v2302, %v2298
        %v3287 = vpack.c.b16 %v2303, %v2299
        %v3288 = vpack.c.b16 %v2304, %v2300
        %v3289 = vpack.c.b16 %v2309, %v2305
        %v3290 = vpack.c.b16 %v2310, %v2306
        %v3291 = vpack.c.b16 %v2311, %v2307
        %v3292 = vpack.c.b16 %v2312, %v2308
        %v3293 = vpack.c.b16 %v2317, %v2313
        %v3294 = vpack.c.b16 %v2318, %v2314
        %v3295 = vpack.c.b16 %v2319, %v2315
        %v3296 = vpack.c.b16 %v2320, %v2316
        %v3297 = vpack.c.b16 %v2325, %v2321
        %v3298 = vpack.c.b16 %v2326, %v2322
        %v3299 = vpack.c.b16 %v2327, %v2323
        %v3300 = vpack.c.b16 %v2328, %v2324
        %v3301 = vpack.c.b16 %v2333, %v2329
        %v3302 = vpack.c.b16 %v2334, %v2330
        %v3303 = vpack.c.b16 %v2335, %v2331
        %v3304 = vpack.c.b16 %v2336, %v2332
        %v3305 = vpack.c.b16 %v2341, %v2337
        %v3306 = vpack.c.b16 %v2342, %v2338
        %v3307 = vpack.c.b16 %v2343, %v2339
        %v3308 = vpack.c.b16 %v2344, %v2340
        %v3309 = vpack.c.b16 %v2349, %v2345
        %v3310 = vpack.c.b16 %v2350, %v2346
        %v3311 = vpack.c.b16 %v2351, %v2347
        %v3312 = vpack.c.b16 %v2352, %v2348
        %v3313 = vpack.c.b16 %v2357, %v2353
        %v3314 = vpack.c.b16 %v2358, %v2354
        %v3315 = vpack.c.b16 %v2359, %v2355
        %v3316 = vpack.c.b16 %v2360, %v2356
        %v3317 = vpack.c.b16 %v2365, %v2361
        %v3318 = vpack.c.b16 %v2366, %v2362
        %v3319 = vpack.c.b16 %v2367, %v2363
        %v3320 = vpack.c.b16 %v2368, %v2364
        %v3321 = vpack.c.b16 %v2373, %v2369
        %v3322 = vpack.c.b16 %v2374, %v2370
        %v3323 = vpack.c.b16 %v2375, %v2371
        %v3324 = vpack.c.b16 %v2376, %v2372
        %v3325 = vpack.c.b16 %v2381, %v2377
        %v3326 = vpack.c.b16 %v2382, %v2378
        %v3327 = vpack.c.b16 %v2383, %v2379
        %v3328 = vpack.c.b16 %v2384, %v2380
        %v3329 = vpack.c.b16 %v2389, %v2385
        %v3330 = vpack.c.b16 %v2390, %v2386
        %v3331 = vpack.c.b16 %v2391, %v2387
        %v3332 = vpack.c.b16 %v2392, %v2388
        %v3333 = vpack.c.b16 %v2397, %v2393
        %v3334 = vpack.c.b16 %v2398, %v2394
        %v3335 = vpack.c.b16 %v2399, %v2395
        %v3336 = vpack.c.b16 %v2400, %v2396
        %v3337 = vpack.c.b16 %v2405, %v2401
        %v3338 = vpack.c.b16 %v2406, %v2402
        %v3339 = vpack.c.b16 %v2407, %v2403
        %v3340 = vpack.c.b16 %v2408, %v2404
        %v3341 = vpack.c.b16 %v2413, %v2409
        %v3342 = vpack.c.b16 %v2414, %v2410
        %v3343 = vpack.c.b16 %v2415, %v2411
        %v3344 = vpack.c.b16 %v2416, %v2412
        %v3345 = vpack.c.b16 %v2421, %v2417
        %v3346 = vpack.c.b16 %v2422, %v2418
        %v3347 = vpack.c.b16 %v2423, %v2419
        %v3348 = vpack.c.b16 %v2424, %v2420
        %v3349 = vpack.c.b16 %v2429, %v2425
        %v3350 = vpack.c.b16 %v2430, %v2426
        %v3351 = vpack.c.b16 %v2431, %v2427
        %v3352 = vpack.c.b16 %v2432, %v2428
        %v3353 = vpack.c.b16 %v2437, %v2433
        %v3354 = vpack.c.b16 %v2438, %v2434
        %v3355 = vpack.c.b16 %v2439, %v2435
        %v3356 = vpack.c.b16 %v2440, %v2436
        %v3357 = vpack.c.b16 %v2445, %v2441
        %v3358 = vpack.c.b16 %v2446, %v2442
        %v3359 = vpack.c.b16 %v2447, %v2443
        %v3360 = vpack.c.b16 %v2448, %v2444
        %v3361 = vpack.c.b16 %v2453, %v2449
        %v3362 = vpack.c.b16 %v2454, %v2450
        %v3363 = vpack.c.b16 %v2455, %v2451
        %v3364 = vpack.c.b16 %v2456, %v2452
        %v3365 = vpack.c.b16 %v2461, %v2457
        %v3366 = vpack.c.b16 %v2462, %v2458
        %v3367 = vpack.c.b16 %v2463, %v2459
        %v3368 = vpack.c.b16 %v2464, %v2460
        %v3369 = vpack.c.b16 %v2469, %v2465
        %v3370 = vpack.c.b16 %v2470, %v2466
        %v3371 = vpack.c.b16 %v2471, %v2467
        %v3372 = vpack.c.b16 %v2472, %v2468
        %v3373 = vpack.c.b16 %v2477, %v2473
        %v3374 = vpack.c.b16 %v2478, %v2474
        %v3375 = vpack.c.b16 %v2479, %v2475
        %v3376 = vpack.c.b16 %v2480, %v2476
        %v3377 = vpack.c.b16 %v2485, %v2481
        %v3378 = vpack.c.b16 %v2486, %v2482
        %v3379 = vpack.c.b16 %v2487, %v2483
        %v3380 = vpack.c.b16 %v2488, %v2484
        %v3381 = vpack.c.b16 %v2493, %v2489
        %v3382 = vpack.c.b16 %v2494, %v2490
        %v3383 = vpack.c.b16 %v2495, %v2491
        %v3384 = vpack.c.b16 %v2496, %v2492
        %v3385 = vpack.c.b16 %v2501, %v2497
        %v3386 = vpack.c.b16 %v2502, %v2498
        %v3387 = vpack.c.b16 %v2503, %v2499
        %v3388 = vpack.c.b16 %v2504, %v2500
        %v3389 = vpack.c.b16 %v2509, %v2505
        %v3390 = vpack.c.b16 %v2510, %v2506
        %v3391 = vpack.c.b16 %v2511, %v2507
        %v3392 = vpack.c.b16 %v2512, %v2508
        %v3393 = vpack.c.b16 %v2517, %v2513
        %v3394 = vpack.c.b16 %v2518, %v2514
        %v3395 = vpack.c.b16 %v2519, %v2515
        %v3396 = vpack.c.b16 %v2520, %v2516
        %v3397 = vpack.c.b16 %v2525, %v2521
        %v3398 = vpack.c.b16 %v2526, %v2522
        %v3399 = vpack.c.b16 %v2527, %v2523
        %v3400 = vpack.c.b16 %v2528, %v2524
        %v3401 = vpack.c.b16 %v2533, %v2529
        %v3402 = vpack.c.b16 %v2534, %v2530
        %v3403 = vpack.c.b16 %v2535, %v2531
        %v3404 = vpack.c.b16 %v2536, %v2532
        %v3405 = vpack.c.b16 %v2541, %v2537
        %v3406 = vpack.c.b16 %v2542, %v2538
        %v3407 = vpack.c.b16 %v2543, %v2539
        %v3408 = vpack.c.b16 %v2544, %v2540
        %v3409 = vpack.c.b16 %v2549, %v2545
        %v3410 = vpack.c.b16 %v2550, %v2546
        %v3411 = vpack.c.b16 %v2551, %v2547
        %v3412 = vpack.c.b16 %v2552, %v2548
        %v3413 = vpack.c.b16 %v2557, %v2553
        %v3414 = vpack.c.b16 %v2558, %v2554
        %v3415 = vpack.c.b16 %v2559, %v2555
        %v3416 = vpack.c.b16 %v2560, %v2556
        %v3417 = vpack.c.b16 %v2565, %v2561
        %v3418 = vpack.c.b16 %v2566, %v2562
        %v3419 = vpack.c.b16 %v2567, %v2563
        %v3420 = vpack.c.b16 %v2568, %v2564
        %v3421 = vpack.c.b16 %v2573, %v2569
        %v3422 = vpack.c.b16 %v2574, %v2570
        %v3423 = vpack.c.b16 %v2575, %v2571
        %v3424 = vpack.c.b16 %v2576, %v2572
        %v3425 = vpack.c.b16 %v2581, %v2577
        %v3426 = vpack.c.b16 %v2582, %v2578
        %v3427 = vpack.c.b16 %v2583, %v2579
        %v3428 = vpack.c.b16 %v2584, %v2580
        %v3429 = vpack.c.b16 %v2589, %v2585
        %v3430 = vpack.c.b16 %v2590, %v2586
        %v3431 = vpack.c.b16 %v2591, %v2587
        %v3432 = vpack.c.b16 %v2592, %v2588
        %v3433 = vpack.c.b16 %v2597, %v2593
        %v3434 = vpack.c.b16 %v2598, %v2594
        %v3435 = vpack.c.b16 %v2599, %v2595
        %v3436 = vpack.c.b16 %v2600, %v2596
        %v3437 = vpack.c.b16 %v2605, %v2601
        %v3438 = vpack.c.b16 %v2606, %v2602
        %v3439 = vpack.c.b16 %v2607, %v2603
        %v3440 = vpack.c.b16 %v2608, %v2604
        %v3441 = vpack.c.b16 %v2613, %v2609
        %v3442 = vpack.c.b16 %v2614, %v2610
        %v3443 = vpack.c.b16 %v2615, %v2611
        %v3444 = vpack.c.b16 %v2616, %v2612
        %v3445 = vpack.c.b16 %v2621, %v2617
        %v3446 = vpack.c.b16 %v2622, %v2618
        %v3447 = vpack.c.b16 %v2623, %v2619
        %v3448 = vpack.c.b16 %v2624, %v2620
        %v3449 = vpack.c.b16 %v2629, %v2625
        %v3450 = vpack.c.b16 %v2630, %v2626
        %v3451 = vpack.c.b16 %v2631, %v2627
        %v3452 = vpack.c.b16 %v2632, %v2628
        %v3453 = vpack.c.b16 %v2637, %v2633
        %v3454 = vpack.c.b16 %v2638, %v2634
        %v3455 = vpack.c.b16 %v2639, %v2635
        %v3456 = vpack.c.b16 %v2640, %v2636
        %v3457 = vpack.c.b16 %v2645, %v2641
        %v3458 = vpack.c.b16 %v2646, %v2642
        %v3459 = vpack.c.b16 %v2647, %v2643
        %v3460 = vpack.c.b16 %v2648, %v2644
        %v3461 = vpack.c.b16 %v2653, %v2649
        %v3462 = vpack.c.b16 %v2654, %v2650
        %v3463 = vpack.c.b16 %v2655, %v2651
        %v3464 = vpack.c.b16 %v2656, %v2652
        %v3465 = vpack.c.b16 %v2661, %v2657
        %v3466 = vpack.c.b16 %v2662, %v2658
        %v3467 = vpack.c.b16 %v2663, %v2659
        %v3468 = vpack.c.b16 %v2664, %v2660
        %v3469 = vpack.c.b16 %v2669, %v2665
        %v3470 = vpack.c.b16 %v2670, %v2666
        %v3471 = vpack.c.b16 %v2671, %v2667
        %v3472 = vpack.c.b16 %v2672, %v2668
        %v3473 = vpack.c.b16 %v2677, %v2673
        %v3474 = vpack.c.b16 %v2678, %v2674
        %v3475 = vpack.c.b16 %v2679, %v2675
        %v3476 = vpack.c.b16 %v2680, %v2676
        %v3477 = vpack.c.b16 %v2685, %v2681
        %v3478 = vpack.c.b16 %v2686, %v2682
        %v3479 = vpack.c.b16 %v2687, %v2683
        %v3480 = vpack.c.b16 %v2688, %v2684
        %v3481 = vpack.c.b16 %v2693, %v2689
        %v3482 = vpack.c.b16 %v2694, %v2690
        %v3483 = vpack.c.b16 %v2695, %v2691
        %v3484 = vpack.c.b16 %v2696, %v2692
        %v3485 = vpack.c.b16 %v2701, %v2697
        %v3486 = vpack.c.b16 %v2702, %v2698
        %v3487 = vpack.c.b16 %v2703, %v2699
        %v3488 = vpack.c.b16 %v2704, %v2700
        %v3489 = vpack.c.b16 %v2709, %v2705
        %v3490 = vpack.c.b16 %v2710, %v2706
        %v3491 = vpack.c.b16 %v2711, %v2707
        %v3492 = vpack.c.b16 %v2712, %v2708
        %v3493 = vpack.c.b16 %v2717, %v2713
        %v3494 = vpack.c.b16 %v2718, %v2714
        %v3495 = vpack.c.b16 %v2719, %v2715
        %v3496 = vpack.c.b16 %v2720, %v2716
        %v3497 = vpack.c.b16 %v2725, %v2721
        %v3498 = vpack.c.b16 %v2726, %v2722
        %v3499 = vpack.c.b16 %v2727, %v2723
        %v3500 = vpack.c.b16 %v2728, %v2724
        %v3501 = vpack.c.b16 %v2733, %v2729
        %v3502 = vpack.c.b16 %v2734, %v2730
        %v3503 = vpack.c.b16 %v2735, %v2731
        %v3504 = vpack.c.b16 %v2736, %v2732
        %v3505 = vpack.c.b16 %v2741, %v2737
        %v3506 = vpack.c.b16 %v2742, %v2738
        %v3507 = vpack.c.b16 %v2743, %v2739
        %v3508 = vpack.c.b16 %v2744, %v2740
        %v3509 = vpack.c.b16 %v2749, %v2745
        %v3510 = vpack.c.b16 %v2750, %v2746
        %v3511 = vpack.c.b16 %v2751, %v2747
        %v3512 = vpack.c.b16 %v2752, %v2748
        %v3513 = vpack.c.b16 %v2757, %v2753
        %v3514 = vpack.c.b16 %v2758, %v2754
        %v3515 = vpack.c.b16 %v2759, %v2755
        %v3516 = vpack.c.b16 %v2760, %v2756
        %v3517 = vpack.c.b16 %v2765, %v2761
        %v3518 = vpack.c.b16 %v2766, %v2762
        %v3519 = vpack.c.b16 %v2767, %v2763
        %v3520 = vpack.c.b16 %v2768, %v2764
        %v3521 = vpack.c.b16 %v2773, %v2769
        %v3522 = vpack.c.b16 %v2774, %v2770
        %v3523 = vpack.c.b16 %v2775, %v2771
        %v3524 = vpack.c.b16 %v2776, %v2772
        %v3525 = vpack.c.b16 %v2781, %v2777
        %v3526 = vpack.c.b16 %v2782, %v2778
        %v3527 = vpack.c.b16 %v2783, %v2779
        %v3528 = vpack.c.b16 %v2784, %v2780
        %v3529 = vpack.c.b16 %v2789, %v2785
        %v3530 = vpack.c.b16 %v2790, %v2786
        %v3531 = vpack.c.b16 %v2791, %v2787
        %v3532 = vpack.c.b16 %v2792, %v2788
        %v3533 = vpack.c.b16 %v2797, %v2793
        %v3534 = vpack.c.b16 %v2798, %v2794
        %v3535 = vpack.c.b16 %v2799, %v2795
        %v3536 = vpack.c.b16 %v2800, %v2796
        %v3537 = vpack.c.b16 %v2805, %v2801
        %v3538 = vpack.c.b16 %v2806, %v2802
        %v3539 = vpack.c.b16 %v2807, %v2803
        %v3540 = vpack.c.b16 %v2808, %v2804
        %v3541 = vpack.c.b16 %v2813, %v2809
        %v3542 = vpack.c.b16 %v2814, %v2810
        %v3543 = vpack.c.b16 %v2815, %v2811
        %v3544 = vpack.c.b16 %v2816, %v2812
        %v3545 = vpack.c.b16 %v2821, %v2817
        %v3546 = vpack.c.b16 %v2822, %v2818
        %v3547 = vpack.c.b16 %v2823, %v2819
        %v3548 = vpack.c.b16 %v2824, %v2820
        %v3549 = vpack.c.b16 %v2829, %v2825
        %v3550 = vpack.c.b16 %v2830, %v2826
        %v3551 = vpack.c.b16 %v2831, %v2827
        %v3552 = vpack.c.b16 %v2832, %v2828
        %v3553 = vpack.c.b16 %v2837, %v2833
        %v3554 = vpack.c.b16 %v2838, %v2834
        %v3555 = vpack.c.b16 %v2839, %v2835
        %v3556 = vpack.c.b16 %v2840, %v2836
        %v3557 = vpack.c.b16 %v2845, %v2841
        %v3558 = vpack.c.b16 %v2846, %v2842
        %v3559 = vpack.c.b16 %v2847, %v2843
        %v3560 = vpack.c.b16 %v2848, %v2844
        %v3561 = vpack.c.b16 %v2853, %v2849
        %v3562 = vpack.c.b16 %v2854, %v2850
        %v3563 = vpack.c.b16 %v2855, %v2851
        %v3564 = vpack.c.b16 %v2856, %v2852
        %v3565 = vpack.c.b16 %v2861, %v2857
        %v3566 = vpack.c.b16 %v2862, %v2858
        %v3567 = vpack.c.b16 %v2863, %v2859
        %v3568 = vpack.c.b16 %v2864, %v2860
        %v3569 = vpack.c.b16 %v2869, %v2865
        %v3570 = vpack.c.b16 %v2870, %v2866
        %v3571 = vpack.c.b16 %v2871, %v2867
        %v3572 = vpack.c.b16 %v2872, %v2868
        %v3573 = vpack.c.b16 %v2877, %v2873
        %v3574 = vpack.c.b16 %v2878, %v2874
        %v3575 = vpack.c.b16 %v2879, %v2875
        %v3576 = vpack.c.b16 %v2880, %v2876
        %v3577 = vpack.c.b16 %v2885, %v2881
        %v3578 = vpack.c.b16 %v2886, %v2882
        %v3579 = vpack.c.b16 %v2887, %v2883
        %v3580 = vpack.c.b16 %v2888, %v2884
        %v3581 = vpack.c.b16 %v2893, %v2889
        %v3582 = vpack.c.b16 %v2894, %v2890
        %v3583 = vpack.c.b16 %v2895, %v2891
        %v3584 = vpack.c.b16 %v2896, %v2892
        %v3585 = vpack.c.b16 %v2901, %v2897
        %v3586 = vpack.c.b16 %v2902, %v2898
        %v3587 = vpack.c.b16 %v2903, %v2899
        %v3588 = vpack.c.b16 %v2904, %v2900
        %v3589 = vpack.c.b16 %v2909, %v2905
        %v3590 = vpack.c.b16 %v2910, %v2906
        %v3591 = vpack.c.b16 %v2911, %v2907
        %v3592 = vpack.c.b16 %v2912, %v2908
        %v3593 = vpack.c.b16 %v2917, %v2913
        %v3594 = vpack.c.b16 %v2918, %v2914
        %v3595 = vpack.c.b16 %v2919, %v2915
        %v3596 = vpack.c.b16 %v2920, %v2916
        %v3597 = vpack.c.b16 %v2925, %v2921
        %v3598 = vpack.c.b16 %v2926, %v2922
        %v3599 = vpack.c.b16 %v2927, %v2923
        %v3600 = vpack.c.b16 %v2928, %v2924
        %v3601 = vpack.c.b16 %v2933, %v2929
        %v3602 = vpack.c.b16 %v2934, %v2930
        %v3603 = vpack.c.b16 %v2935, %v2931
        %v3604 = vpack.c.b16 %v2936, %v2932
        %v3605 = vpack.c.b16 %v2941, %v2937
        %v3606 = vpack.c.b16 %v2942, %v2938
        %v3607 = vpack.c.b16 %v2943, %v2939
        %v3608 = vpack.c.b16 %v2944, %v2940
        %v3609 = vpack.c.b16 %v2949, %v2945
        %v3610 = vpack.c.b16 %v2950, %v2946
        %v3611 = vpack.c.b16 %v2951, %v2947
        %v3612 = vpack.c.b16 %v2952, %v2948
        %v3613 = vpack.c.b16 %v2957, %v2953
        %v3614 = vpack.c.b16 %v2958, %v2954
        %v3615 = vpack.c.b16 %v2959, %v2955
        %v3616 = vpack.c.b16 %v2960, %v2956
        %v3617 = vpack.c.b16 %v2965, %v2961
        %v3618 = vpack.c.b16 %v2966, %v2962
        %v3619 = vpack.c.b16 %v2967, %v2963
        %v3620 = vpack.c.b16 %v2968, %v2964
        %v3621 = vpack.c.b16 %v2973, %v2969
        %v3622 = vpack.c.b16 %v2974, %v2970
        %v3623 = vpack.c.b16 %v2975, %v2971
        %v3624 = vpack.c.b16 %v2976, %v2972
        %v3625 = vpack.c.b16 %v2981, %v2977
        %v3626 = vpack.c.b16 %v2982, %v2978
        %v3627 = vpack.c.b16 %v2983, %v2979
        %v3628 = vpack.c.b16 %v2984, %v2980
        %v3629 = vpack.c.b16 %v2989, %v2985
        %v3630 = vpack.c.b16 %v2990, %v2986
        %v3631 = vpack.c.b16 %v2991, %v2987
        %v3632 = vpack.c.b16 %v2992, %v2988
        %v3633 = vpack.c.b16 %v2997, %v2993
        %v3634 = vpack.c.b16 %v2998, %v2994
        %v3635 = vpack.c.b16 %v2999, %v2995
        %v3636 = vpack.c.b16 %v3000, %v2996
        %v3637 = vpack.c.b16 %v3005, %v3001
        %v3638 = vpack.c.b16 %v3006, %v3002
        %v3639 = vpack.c.b16 %v3007, %v3003
        %v3640 = vpack.c.b16 %v3008, %v3004
        %v3641 = vpack.c.b16 %v3013, %v3009
        %v3642 = vpack.c.b16 %v3014, %v3010
        %v3643 = vpack.c.b16 %v3015, %v3011
        %v3644 = vpack.c.b16 %v3016, %v3012
        %v3645 = vpack.c.b16 %v3021, %v3017
        %v3646 = vpack.c.b16 %v3022, %v3018
        %v3647 = vpack.c.b16 %v3023, %v3019
        %v3648 = vpack.c.b16 %v3024, %v3020
        %v3649 = vpack.c.b16 %v3029, %v3025
        %v3650 = vpack.c.b16 %v3030, %v3026
        %v3651 = vpack.c.b16 %v3031, %v3027
        %v3652 = vpack.c.b16 %v3032, %v3028
        %v3653 = vpack.c.b16 %v3037, %v3033
        %v3654 = vpack.c.b16 %v3038, %v3034
        %v3655 = vpack.c.b16 %v3039, %v3035
        %v3656 = vpack.c.b16 %v3040, %v3036
        %v3657 = vpack.c.b16 %v3045, %v3041
        %v3658 = vpack.c.b16 %v3046, %v3042
        %v3659 = vpack.c.b16 %v3047, %v3043
        %v3660 = vpack.c.b16 %v3048, %v3044
        %v3661 = vpack.c.b16 %v3053, %v3049
        %v3662 = vpack.c.b16 %v3054, %v3050
        %v3663 = vpack.c.b16 %v3055, %v3051
        %v3664 = vpack.c.b16 %v3056, %v3052
        %v3665 = vpack.c.b16 %v3061, %v3057
        %v3666 = vpack.c.b16 %v3062, %v3058
        %v3667 = vpack.c.b16 %v3063, %v3059
        %v3668 = vpack.c.b16 %v3064, %v3060
        %v3669 = vpack.c.b16 %v3069, %v3065
        %v3670 = vpack.c.b16 %v3070, %v3066
        %v3671 = vpack.c.b16 %v3071, %v3067
        %v3672 = vpack.c.b16 %v3072, %v3068
        %v3673 = vpack.c.b16 %v3077, %v3073
        %v3674 = vpack.c.b16 %v3078, %v3074
        %v3675 = vpack.c.b16 %v3079, %v3075
        %v3676 = vpack.c.b16 %v3080, %v3076
        %v3677 = vpack.c.b16 %v3085, %v3081
        %v3678 = vpack.c.b16 %v3086, %v3082
        %v3679 = vpack.c.b16 %v3087, %v3083
        %v3680 = vpack.c.b16 %v3088, %v3084
        %v3681 = vpack.c.b16 %v3093, %v3089
        %v3682 = vpack.c.b16 %v3094, %v3090
        %v3683 = vpack.c.b16 %v3095, %v3091
        %v3684 = vpack.c.b16 %v3096, %v3092
        %v3685 = vpack.c.b16 %v3101, %v3097
        %v3686 = vpack.c.b16 %v3102, %v3098
        %v3687 = vpack.c.b16 %v3103, %v3099
        %v3688 = vpack.c.b16 %v3104, %v3100
        %v3689 = vpack.c.b16 %v3109, %v3105
        %v3690 = vpack.c.b16 %v3110, %v3106
        %v3691 = vpack.c.b16 %v3111, %v3107
        %v3692 = vpack.c.b16 %v3112, %v3108
        %v3693 = vpack.c.b16 %v3117, %v3113
        %v3694 = vpack.c.b16 %v3118, %v3114
        %v3695 = vpack.c.b16 %v3119, %v3115
        %v3696 = vpack.c.b16 %v3120, %v3116
        %v3697 = vpack.c.b16 %v3125, %v3121
        %v3698 = vpack.c.b16 %v3126, %v3122
        %v3699 = vpack.c.b16 %v3127, %v3123
        %v3700 = vpack.c.b16 %v3128, %v3124
        %v3701 = vpack.c.b16 %v3133, %v3129
        %v3702 = vpack.c.b16 %v3134, %v3130
        %v3703 = vpack.c.b16 %v3135, %v3131
        %v3704 = vpack.c.b16 %v3136, %v3132
        %v3705 = vpack.c.b16 %v3141, %v3137
        %v3706 = vpack.c.b16 %v3142, %v3138
        %v3707 = vpack.c.b16 %v3143, %v3139
        %v3708 = vpack.c.b16 %v3144, %v3140
        %v3709 = vpack.c.b16 %v3149, %v3145
        %v3710 = vpack.c.b16 %v3150, %v3146
        %v3711 = vpack.c.b16 %v3151, %v3147
        %v3712 = vpack.c.b16 %v3152, %v3148
        %v3713 = vpack.c.b16 %v3157, %v3153
        %v3714 = vpack.c.b16 %v3158, %v3154
        %v3715 = vpack.c.b16 %v3159, %v3155
        %v3716 = vpack.c.b16 %v3160, %v3156
        %v3717 = vpack.c.b16 %v3165, %v3161
        %v3718 = vpack.c.b16 %v3166, %v3162
        %v3719 = vpack.c.b16 %v3167, %v3163
        %v3720 = vpack.c.b16 %v3168, %v3164
        %v3721 = vpack.c.b16 %v3173, %v3169
        %v3722 = vpack.c.b16 %v3174, %v3170
        %v3723 = vpack.c.b16 %v3175, %v3171
        %v3724 = vpack.c.b16 %v3176, %v3172
        %v3725 = vpack.c.b16 %v3181, %v3177
        %v3726 = vpack.c.b16 %v3182, %v3178
        %v3727 = vpack.c.b16 %v3183, %v3179
        %v3728 = vpack.c.b16 %v3184, %v3180
        %v3729 = vpack.c.b16 %v3189, %v3185
        %v3730 = vpack.c.b16 %v3190, %v3186
        %v3731 = vpack.c.b16 %v3191, %v3187
        %v3732 = vpack.c.b16 %v3192, %v3188
        %v3733 = vpack.c.b16 %v3197, %v3193
        %v3734 = vpack.c.b16 %v3198, %v3194
        %v3735 = vpack.c.b16 %v3199, %v3195
        %v3736 = vpack.c.b16 %v3200, %v3196
        %v3737 = vpack.c.b16 %v3205, %v3201
        %v3738 = vpack.c.b16 %v3206, %v3202
        %v3739 = vpack.c.b16 %v3207, %v3203
        %v3740 = vpack.c.b16 %v3208, %v3204
        %v3741 = vpack.c.b16 %v3213, %v3209
        %v3742 = vpack.c.b16 %v3214, %v3210
        %v3743 = vpack.c.b16 %v3215, %v3211
        %v3744 = vpack.c.b16 %v3216, %v3212
        %v3745 = vpack.c.b16 %v3221, %v3217
        %v3746 = vpack.c.b16 %v3222, %v3218
        %v3747 = vpack.c.b16 %v3223, %v3219
        %v3748 = vpack.c.b16 %v3224, %v3220
        %v3749 = vpack.c.b16 %v3229, %v3225
        %v3750 = vpack.c.b16 %v3230, %v3226
        %v3751 = vpack.c.b16 %v3231, %v3227
        %v3752 = vpack.c.b16 %v3232, %v3228
        %v3753 = vpack.c.b16 %v3237, %v3233
        %v3754 = vpack.c.b16 %v3238, %v3234
        %v3755 = vpack.c.b16 %v3239, %v3235
        %v3756 = vpack.c.b16 %v3240, %v3236
        %v3757 = vpack.c.b16 %v3245, %v3241
        %v3758 = vpack.c.b16 %v3246, %v3242
        %v3759 = vpack.c.b16 %v3247, %v3243
        %v3760 = vpack.c.b16 %v3248, %v3244
        %4273 = vmatprep.subr.bf16.mxu0 %v3278
        %4274 = vmatpush1.bf16.msra.mxu0 %v3277
        %4275 = vmatprep.subr.bf16.mxu0 %v3274
        %4276 = vmatpush1.bf16.msra.mxu0 %v3273
        %4277 = vmatprep.subr.bf16.mxu0 %v3270
        %4278 = vmatpush1.bf16.msra.mxu0 %v3269
        %4279 = vmatprep.subr.bf16.mxu0 %v3266
        %4280 = vmatpush1.bf16.msra.mxu0 %v3265
        %4281 = vmatprep.subr.bf16.mxu0 %v3262
        %4282 = vmatpush1.bf16.msra.mxu0 %v3261
        %4283 = vmatprep.subr.bf16.mxu0 %v3258
        %4284 = vmatpush1.bf16.msra.mxu0 %v3257
        %4285 = vmatprep.subr.bf16.mxu0 %v3254
        %4286 = vmatpush1.bf16.msra.mxu0 %v3253
        %4287 = vmatprep.subr.bf16.mxu0 %v3250
        %4288 = vmatpush1.bf16.msra.mxu0 %v3249
        %4289 = vmatprep.subr.bf16.mxu0 %v3310
        %4290 = vmatpush2.bf16.msra.mxu0 %v3309
        %4291 = vmatprep.subr.bf16.mxu0 %v3306
        %4292 = vmatpush2.bf16.msra.mxu0 %v3305
        %4293 = vmatprep.subr.bf16.mxu0 %v3302
        %4294 = vmatpush2.bf16.msra.mxu0 %v3301
        %4295 = vmatprep.subr.bf16.mxu0 %v3298
        %4296 = vmatpush2.bf16.msra.mxu0 %v3297
        %4297 = vmatprep.subr.bf16.mxu0 %v3294
        %4298 = vmatpush2.bf16.msra.mxu0 %v3293
        %4299 = vmatprep.subr.bf16.mxu0 %v3290
        %4300 = vmatpush2.bf16.msra.mxu0 %v3289
        %4301 = vmatprep.subr.bf16.mxu0 %v3286
        %4302 = vmatpush2.bf16.msra.mxu0 %v3285
        %4303 = vmatprep.subr.bf16.mxu0 %v3282
        %4304 = vmatpush2.bf16.msra.mxu0 %v3281
        %4305 = vmatprep.mubr.bf16.mxu0 %v1636
        %4306 = vmatmul.mubr.bf16.gmra.mxu0 %v1622
        %v4307 = vpop.f32.mrf.mxu0
        %v4308 = vadd.f32 %v1580, %v4307
        %v4309 = vpop.f32.mrf.mxu0
        %v4310 = vadd.f32 %v1584, %v4309
        %v4311 = vpop.f32.mrf.mxu0
        %v4312 = vpop.f32.mrf.mxu0
        %4313 = vdwg.mxu0
        %4314 = vmatprep.subr.bf16.mxu0 %v3342
        %4315 = vmatpush1.bf16.msra.mxu0 %v3341
        %4316 = vmatprep.subr.bf16.mxu0 %v3338
        %4317 = vmatpush1.bf16.msra.mxu0 %v3337
        %4318 = vmatprep.subr.bf16.mxu0 %v3334
        %4319 = vmatpush1.bf16.msra.mxu0 %v3333
        %4320 = vmatprep.subr.bf16.mxu0 %v3330
        %4321 = vmatpush1.bf16.msra.mxu0 %v3329
        %4322 = vmatprep.subr.bf16.mxu0 %v3326
        %4323 = vmatpush1.bf16.msra.mxu0 %v3325
        %4324 = vmatprep.subr.bf16.mxu0 %v3322
        %4325 = vmatpush1.bf16.msra.mxu0 %v3321
        %4326 = vmatprep.subr.bf16.mxu0 %v3318
        %4327 = vmatpush1.bf16.msra.mxu0 %v3317
        %4328 = vmatprep.subr.bf16.mxu0 %v3314
        %4329 = vmatpush1.bf16.msra.mxu0 %v3313
        %4330 = vmatprep.subr.bf16.mxu0 %v3374
        %4331 = vmatpush2.bf16.msra.mxu0 %v3373
        %4332 = vmatprep.subr.bf16.mxu0 %v3370
        %4333 = vmatpush2.bf16.msra.mxu0 %v3369
        %4334 = vmatprep.subr.bf16.mxu0 %v3366
        %4335 = vmatpush2.bf16.msra.mxu0 %v3365
        %4336 = vmatprep.subr.bf16.mxu0 %v3362
        %4337 = vmatpush2.bf16.msra.mxu0 %v3361
        %4338 = vmatprep.subr.bf16.mxu0 %v3358
        %4339 = vmatpush2.bf16.msra.mxu0 %v3357
        %4340 = vmatprep.subr.bf16.mxu0 %v3354
        %4341 = vmatpush2.bf16.msra.mxu0 %v3353
        %4342 = vmatprep.subr.bf16.mxu0 %v3350
        %4343 = vmatpush2.bf16.msra.mxu0 %v3349
        %4344 = vmatprep.subr.bf16.mxu0 %v3346
        %4345 = vmatpush2.bf16.msra.mxu0 %v3345
        %4346 = vmatprep.mubr.bf16.mxu0 %v1646
        %4347 = vmatmul.mubr.bf16.gmra.mxu0 %v1644
        %v4348 = vpop.f32.mrf.mxu0
        %v4349 = vadd.f32 %v4308, %v4348
        %v4350 = vpop.f32.mrf.mxu0
        %v4351 = vadd.f32 %v4310, %v4350
        %v4352 = vpop.f32.mrf.mxu0
        %v4353 = vpop.f32.mrf.mxu0
        %4354 = vdwg.mxu0
        %4355 = vmatprep.subr.bf16.mxu0 %v3406
        %4356 = vmatpush1.bf16.msra.mxu0 %v3405
        %4357 = vmatprep.subr.bf16.mxu0 %v3402
        %4358 = vmatpush1.bf16.msra.mxu0 %v3401
        %4359 = vmatprep.subr.bf16.mxu0 %v3398
        %4360 = vmatpush1.bf16.msra.mxu0 %v3397
        %4361 = vmatprep.subr.bf16.mxu0 %v3394
        %4362 = vmatpush1.bf16.msra.mxu0 %v3393
        %4363 = vmatprep.subr.bf16.mxu0 %v3390
        %4364 = vmatpush1.bf16.msra.mxu0 %v3389
        %4365 = vmatprep.subr.bf16.mxu0 %v3386
        %4366 = vmatpush1.bf16.msra.mxu0 %v3385
        %4367 = vmatprep.subr.bf16.mxu0 %v3382
        %4368 = vmatpush1.bf16.msra.mxu0 %v3381
        %4369 = vmatprep.subr.bf16.mxu0 %v3378
        %4370 = vmatpush1.bf16.msra.mxu0 %v3377
        %4371 = vmatprep.subr.bf16.mxu0 %v3438
        %4372 = vmatpush2.bf16.msra.mxu0 %v3437
        %4373 = vmatprep.subr.bf16.mxu0 %v3434
        %4374 = vmatpush2.bf16.msra.mxu0 %v3433
        %4375 = vmatprep.subr.bf16.mxu0 %v3430
        %4376 = vmatpush2.bf16.msra.mxu0 %v3429
        %4377 = vmatprep.subr.bf16.mxu0 %v3426
        %4378 = vmatpush2.bf16.msra.mxu0 %v3425
        %4379 = vmatprep.subr.bf16.mxu0 %v3422
        %4380 = vmatpush2.bf16.msra.mxu0 %v3421
        %4381 = vmatprep.subr.bf16.mxu0 %v3418
        %4382 = vmatpush2.bf16.msra.mxu0 %v3417
        %4383 = vmatprep.subr.bf16.mxu0 %v3414
        %4384 = vmatpush2.bf16.msra.mxu0 %v3413
        %4385 = vmatprep.subr.bf16.mxu0 %v3410
        %4386 = vmatpush2.bf16.msra.mxu0 %v3409
        %4387 = vmatprep.mubr.bf16.mxu0 %v1643
        %4388 = vmatmul.mubr.bf16.gmra.mxu0 %v1629
        %v4389 = vpop.f32.mrf.mxu0
        %v4390 = vadd.f32 %v4349, %v4389
        %v4391 = vpop.f32.mrf.mxu0
        %v4392 = vadd.f32 %v4351, %v4391
        %v4393 = vpop.f32.mrf.mxu0
        %v4394 = vpop.f32.mrf.mxu0
        %4395 = vdwg.mxu0
        %4396 = vmatprep.subr.bf16.mxu0 %v3470
        %4397 = vmatpush1.bf16.msra.mxu0 %v3469
        %4398 = vmatprep.subr.bf16.mxu0 %v3466
        %4399 = vmatpush1.bf16.msra.mxu0 %v3465
        %4400 = vmatprep.subr.bf16.mxu0 %v3462
        %4401 = vmatpush1.bf16.msra.mxu0 %v3461
        %4402 = vmatprep.subr.bf16.mxu0 %v3458
        %4403 = vmatpush1.bf16.msra.mxu0 %v3457
        %4404 = vmatprep.subr.bf16.mxu0 %v3454
        %4405 = vmatpush1.bf16.msra.mxu0 %v3453
        %4406 = vmatprep.subr.bf16.mxu0 %v3450
        %4407 = vmatpush1.bf16.msra.mxu0 %v3449
        %4408 = vmatprep.subr.bf16.mxu0 %v3446
        %4409 = vmatpush1.bf16.msra.mxu0 %v3445
        %4410 = vmatprep.subr.bf16.mxu0 %v3442
        %4411 = vmatpush1.bf16.msra.mxu0 %v3441
        %4412 = vmatprep.subr.bf16.mxu0 %v3502
        %4413 = vmatpush2.bf16.msra.mxu0 %v3501
        %4414 = vmatprep.subr.bf16.mxu0 %v3498
        %4415 = vmatpush2.bf16.msra.mxu0 %v3497
        %4416 = vmatprep.subr.bf16.mxu0 %v3494
        %4417 = vmatpush2.bf16.msra.mxu0 %v3493
        %4418 = vmatprep.subr.bf16.mxu0 %v3490
        %4419 = vmatpush2.bf16.msra.mxu0 %v3489
        %4420 = vmatprep.subr.bf16.mxu0 %v3486
        %4421 = vmatpush2.bf16.msra.mxu0 %v3485
        %4422 = vmatprep.subr.bf16.mxu0 %v3482
        %4423 = vmatpush2.bf16.msra.mxu0 %v3481
        %4424 = vmatprep.subr.bf16.mxu0 %v3478
        %4425 = vmatpush2.bf16.msra.mxu0 %v3477
        %4426 = vmatprep.subr.bf16.mxu0 %v3474
        %4427 = vmatpush2.bf16.msra.mxu0 %v3473
        %4428 = vmatprep.mubr.bf16.mxu0 %v1647
        %4429 = vmatmul.mubr.bf16.gmra.mxu0 %v1645
        %v4430 = vpop.f32.mrf.mxu0
        %v4431 = vadd.f32 %v4390, %v4430
        %v4432 = vpop.f32.mrf.mxu0
        %v4433 = vadd.f32 %v4392, %v4432
        %v4434 = vpop.f32.mrf.mxu0
        %v4435 = vpop.f32.mrf.mxu0
        %4436 = vdwg.mxu0
        %4437 = vmatprep.subr.bf16.mxu0 %v3534
        %4438 = vmatpush1.bf16.msra.mxu0 %v3533
        %4439 = vmatprep.subr.bf16.mxu0 %v3530
        %4440 = vmatpush1.bf16.msra.mxu0 %v3529
        %4441 = vmatprep.subr.bf16.mxu0 %v3526
        %4442 = vmatpush1.bf16.msra.mxu0 %v3525
        %4443 = vmatprep.subr.bf16.mxu0 %v3522
        %4444 = vmatpush1.bf16.msra.mxu0 %v3521
        %4445 = vmatprep.subr.bf16.mxu0 %v3518
        %4446 = vmatpush1.bf16.msra.mxu0 %v3517
        %4447 = vmatprep.subr.bf16.mxu0 %v3514
        %4448 = vmatpush1.bf16.msra.mxu0 %v3513
        %4449 = vmatprep.subr.bf16.mxu0 %v3510
        %4450 = vmatpush1.bf16.msra.mxu0 %v3509
        %4451 = vmatprep.subr.bf16.mxu0 %v3506
        %4452 = vmatpush1.bf16.msra.mxu0 %v3505
        %4453 = vmatprep.subr.bf16.mxu0 %v3566
        %4454 = vmatpush2.bf16.msra.mxu0 %v3565
        %4455 = vmatprep.subr.bf16.mxu0 %v3562
        %4456 = vmatpush2.bf16.msra.mxu0 %v3561
        %4457 = vmatprep.subr.bf16.mxu0 %v3558
        %4458 = vmatpush2.bf16.msra.mxu0 %v3557
        %4459 = vmatprep.subr.bf16.mxu0 %v3554
        %4460 = vmatpush2.bf16.msra.mxu0 %v3553
        %4461 = vmatprep.subr.bf16.mxu0 %v3550
        %4462 = vmatpush2.bf16.msra.mxu0 %v3549
        %4463 = vmatprep.subr.bf16.mxu0 %v3546
        %4464 = vmatpush2.bf16.msra.mxu0 %v3545
        %4465 = vmatprep.subr.bf16.mxu0 %v3542
        %4466 = vmatpush2.bf16.msra.mxu0 %v3541
        %4467 = vmatprep.subr.bf16.mxu0 %v3538
        %4468 = vmatpush2.bf16.msra.mxu0 %v3537
        %4469 = vmatprep.mubr.bf16.mxu0 %v1685
        %4470 = vmatmul.mubr.bf16.gmra.mxu0 %v1671
        %v4471 = vpop.f32.mrf.mxu0
        %v4472 = vadd.f32 %v4431, %v4471
        %v4473 = vpop.f32.mrf.mxu0
        %v4474 = vadd.f32 %v4433, %v4473
        %v4475 = vpop.f32.mrf.mxu0
        %v4476 = vpop.f32.mrf.mxu0
        %4477 = vdwg.mxu0
        %4478 = vmatprep.subr.bf16.mxu0 %v3598
        %4479 = vmatpush1.bf16.msra.mxu0 %v3597
        %4480 = vmatprep.subr.bf16.mxu0 %v3594
        %4481 = vmatpush1.bf16.msra.mxu0 %v3593
        %4482 = vmatprep.subr.bf16.mxu0 %v3590
        %4483 = vmatpush1.bf16.msra.mxu0 %v3589
        %4484 = vmatprep.subr.bf16.mxu0 %v3586
        %4485 = vmatpush1.bf16.msra.mxu0 %v3585
        %4486 = vmatprep.subr.bf16.mxu0 %v3582
        %4487 = vmatpush1.bf16.msra.mxu0 %v3581
        %4488 = vmatprep.subr.bf16.mxu0 %v3578
        %4489 = vmatpush1.bf16.msra.mxu0 %v3577
        %4490 = vmatprep.subr.bf16.mxu0 %v3574
        %4491 = vmatpush1.bf16.msra.mxu0 %v3573
        %4492 = vmatprep.subr.bf16.mxu0 %v3570
        %4493 = vmatpush1.bf16.msra.mxu0 %v3569
        %4494 = vmatprep.subr.bf16.mxu0 %v3630
        %4495 = vmatpush2.bf16.msra.mxu0 %v3629
        %4496 = vmatprep.subr.bf16.mxu0 %v3626
        %4497 = vmatpush2.bf16.msra.mxu0 %v3625
        %4498 = vmatprep.subr.bf16.mxu0 %v3622
        %4499 = vmatpush2.bf16.msra.mxu0 %v3621
        %4500 = vmatprep.subr.bf16.mxu0 %v3618
        %4501 = vmatpush2.bf16.msra.mxu0 %v3617
        %4502 = vmatprep.subr.bf16.mxu0 %v3614
        %4503 = vmatpush2.bf16.msra.mxu0 %v3613
        %4504 = vmatprep.subr.bf16.mxu0 %v3610
        %4505 = vmatpush2.bf16.msra.mxu0 %v3609
        %4506 = vmatprep.subr.bf16.mxu0 %v3606
        %4507 = vmatpush2.bf16.msra.mxu0 %v3605
        %4508 = vmatprep.subr.bf16.mxu0 %v3602
        %4509 = vmatpush2.bf16.msra.mxu0 %v3601
        %4510 = vmatprep.mubr.bf16.mxu0 %v1695
        %4511 = vmatmul.mubr.bf16.gmra.mxu0 %v1693
        %v4512 = vpop.f32.mrf.mxu0
        %v4513 = vadd.f32 %v4472, %v4512
        %v4514 = vpop.f32.mrf.mxu0
        %v4515 = vadd.f32 %v4474, %v4514
        %v4516 = vpop.f32.mrf.mxu0
        %v4517 = vpop.f32.mrf.mxu0
        %4518 = vdwg.mxu0
        %4519 = vmatprep.subr.bf16.mxu0 %v3662
        %4520 = vmatpush1.bf16.msra.mxu0 %v3661
        %4521 = vmatprep.subr.bf16.mxu0 %v3658
        %4522 = vmatpush1.bf16.msra.mxu0 %v3657
        %4523 = vmatprep.subr.bf16.mxu0 %v3654
        %4524 = vmatpush1.bf16.msra.mxu0 %v3653
        %4525 = vmatprep.subr.bf16.mxu0 %v3650
        %4526 = vmatpush1.bf16.msra.mxu0 %v3649
        %4527 = vmatprep.subr.bf16.mxu0 %v3646
        %4528 = vmatpush1.bf16.msra.mxu0 %v3645
        %4529 = vmatprep.subr.bf16.mxu0 %v3642
        %4530 = vmatpush1.bf16.msra.mxu0 %v3641
        %4531 = vmatprep.subr.bf16.mxu0 %v3638
        %4532 = vmatpush1.bf16.msra.mxu0 %v3637
        %4533 = vmatprep.subr.bf16.mxu0 %v3634
        %4534 = vmatpush1.bf16.msra.mxu0 %v3633
        %4535 = vmatprep.subr.bf16.mxu0 %v3694
        %4536 = vmatpush2.bf16.msra.mxu0 %v3693
        %4537 = vmatprep.subr.bf16.mxu0 %v3690
        %4538 = vmatpush2.bf16.msra.mxu0 %v3689
        %4539 = vmatprep.subr.bf16.mxu0 %v3686
        %4540 = vmatpush2.bf16.msra.mxu0 %v3685
        %4541 = vmatprep.subr.bf16.mxu0 %v3682
        %4542 = vmatpush2.bf16.msra.mxu0 %v3681
        %4543 = vmatprep.subr.bf16.mxu0 %v3678
        %4544 = vmatpush2.bf16.msra.mxu0 %v3677
        %4545 = vmatprep.subr.bf16.mxu0 %v3674
        %4546 = vmatpush2.bf16.msra.mxu0 %v3673
        %4547 = vmatprep.subr.bf16.mxu0 %v3670
        %4548 = vmatpush2.bf16.msra.mxu0 %v3669
        %4549 = vmatprep.subr.bf16.mxu0 %v3666
        %4550 = vmatpush2.bf16.msra.mxu0 %v3665
        %4551 = vmatprep.mubr.bf16.mxu0 %v1692
        %4552 = vmatmul.mubr.bf16.gmra.mxu0 %v1678
        %v4553 = vpop.f32.mrf.mxu0
        %v4554 = vadd.f32 %v4513, %v4553
        %v4555 = vpop.f32.mrf.mxu0
        %v4556 = vadd.f32 %v4515, %v4555
        %v4557 = vpop.f32.mrf.mxu0
        %v4558 = vpop.f32.mrf.mxu0
        %4559 = vdwg.mxu0
        %4560 = vmatprep.subr.bf16.mxu0 %v3726
        %4561 = vmatpush1.bf16.msra.mxu0 %v3725
        %4562 = vmatprep.subr.bf16.mxu0 %v3722
        %4563 = vmatpush1.bf16.msra.mxu0 %v3721
        %4564 = vmatprep.subr.bf16.mxu0 %v3718
        %4565 = vmatpush1.bf16.msra.mxu0 %v3717
        %4566 = vmatprep.subr.bf16.mxu0 %v3714
        %4567 = vmatpush1.bf16.msra.mxu0 %v3713
        %4568 = vmatprep.subr.bf16.mxu0 %v3710
        %4569 = vmatpush1.bf16.msra.mxu0 %v3709
        %4570 = vmatprep.subr.bf16.mxu0 %v3706
        %4571 = vmatpush1.bf16.msra.mxu0 %v3705
        %4572 = vmatprep.subr.bf16.mxu0 %v3702
        %4573 = vmatpush1.bf16.msra.mxu0 %v3701
        %4574 = vmatprep.subr.bf16.mxu0 %v3698
        %4575 = vmatpush1.bf16.msra.mxu0 %v3697
        %4576 = vmatprep.subr.bf16.mxu0 %v3758
        %4577 = vmatpush2.bf16.msra.mxu0 %v3757
        %4578 = vmatprep.subr.bf16.mxu0 %v3754
        %4579 = vmatpush2.bf16.msra.mxu0 %v3753
        %4580 = vmatprep.subr.bf16.mxu0 %v3750
        %4581 = vmatpush2.bf16.msra.mxu0 %v3749
        %4582 = vmatprep.subr.bf16.mxu0 %v3746
        %4583 = vmatpush2.bf16.msra.mxu0 %v3745
        %4584 = vmatprep.subr.bf16.mxu0 %v3742
        %4585 = vmatpush2.bf16.msra.mxu0 %v3741
        %4586 = vmatprep.subr.bf16.mxu0 %v3738
        %4587 = vmatpush2.bf16.msra.mxu0 %v3737
        %4588 = vmatprep.subr.bf16.mxu0 %v3734
        %4589 = vmatpush2.bf16.msra.mxu0 %v3733
        %4590 = vmatprep.subr.bf16.mxu0 %v3730
        %4591 = vmatpush2.bf16.msra.mxu0 %v3729
        %4592 = vmatprep.mubr.bf16.mxu0 %v1696
        %4593 = vmatmul.mubr.bf16.gmra.mxu0 %v1694
        %v4594 = vpop.f32.mrf.mxu0
        %v4595 = vadd.f32 %v4554, %v4594
        %v4596 = vpop.f32.mrf.mxu0
        %v4597 = vadd.f32 %v4556, %v4596
        %v4598 = vpop.f32.mrf.mxu0
        %v4599 = vpop.f32.mrf.mxu0
        %4600 = vdwg.mxu0
        %4601 = vmatprep.subr.bf16.mxu0 %v3280
        %4602 = vmatpush1.bf16.msra.mxu0 %v3279
        %4603 = vmatprep.subr.bf16.mxu0 %v3276
        %4604 = vmatpush1.bf16.msra.mxu0 %v3275
        %4605 = vmatprep.subr.bf16.mxu0 %v3272
        %4606 = vmatpush1.bf16.msra.mxu0 %v3271
        %4607 = vmatprep.subr.bf16.mxu0 %v3268
        %4608 = vmatpush1.bf16.msra.mxu0 %v3267
        %4609 = vmatprep.subr.bf16.mxu0 %v3264
        %4610 = vmatpush1.bf16.msra.mxu0 %v3263
        %4611 = vmatprep.subr.bf16.mxu0 %v3260
        %4612 = vmatpush1.bf16.msra.mxu0 %v3259
        %4613 = vmatprep.subr.bf16.mxu0 %v3256
        %4614 = vmatpush1.bf16.msra.mxu0 %v3255
        %4615 = vmatprep.subr.bf16.mxu0 %v3252
        %4616 = vmatpush1.bf16.msra.mxu0 %v3251
        %4617 = vmatprep.subr.bf16.mxu0 %v3312
        %4618 = vmatpush2.bf16.msra.mxu0 %v3311
        %4619 = vmatprep.subr.bf16.mxu0 %v3308
        %4620 = vmatpush2.bf16.msra.mxu0 %v3307
        %4621 = vmatprep.subr.bf16.mxu0 %v3304
        %4622 = vmatpush2.bf16.msra.mxu0 %v3303
        %4623 = vmatprep.subr.bf16.mxu0 %v3300
        %4624 = vmatpush2.bf16.msra.mxu0 %v3299
        %4625 = vmatprep.subr.bf16.mxu0 %v3296
        %4626 = vmatpush2.bf16.msra.mxu0 %v3295
        %4627 = vmatprep.subr.bf16.mxu0 %v3292
        %4628 = vmatpush2.bf16.msra.mxu0 %v3291
        %4629 = vmatprep.subr.bf16.mxu0 %v3288
        %4630 = vmatpush2.bf16.msra.mxu0 %v3287
        %4631 = vmatprep.subr.bf16.mxu0 %v3284
        %4632 = vmatpush2.bf16.msra.mxu0 %v3283
        %4633 = vmatprep.mubr.bf16.mxu0 %v1636
        %4634 = vmatmul.mubr.bf16.gmra.mxu0 %v1622
        %v4635 = vpop.f32.mrf.mxu0
        %v4636 = vadd.f32 %v1588, %v4635
        %v4637 = vpop.f32.mrf.mxu0
        %v4638 = vadd.f32 %v1592, %v4637
        %v4639 = vpop.f32.mrf.mxu0
        %v4640 = vpop.f32.mrf.mxu0
        %4641 = vdwg.mxu0
        %4642 = vmatprep.subr.bf16.mxu0 %v3344
        %4643 = vmatpush1.bf16.msra.mxu0 %v3343
        %4644 = vmatprep.subr.bf16.mxu0 %v3340
        %4645 = vmatpush1.bf16.msra.mxu0 %v3339
        %4646 = vmatprep.subr.bf16.mxu0 %v3336
        %4647 = vmatpush1.bf16.msra.mxu0 %v3335
        %4648 = vmatprep.subr.bf16.mxu0 %v3332
        %4649 = vmatpush1.bf16.msra.mxu0 %v3331
        %4650 = vmatprep.subr.bf16.mxu0 %v3328
        %4651 = vmatpush1.bf16.msra.mxu0 %v3327
        %4652 = vmatprep.subr.bf16.mxu0 %v3324
        %4653 = vmatpush1.bf16.msra.mxu0 %v3323
        %4654 = vmatprep.subr.bf16.mxu0 %v3320
        %4655 = vmatpush1.bf16.msra.mxu0 %v3319
        %4656 = vmatprep.subr.bf16.mxu0 %v3316
        %4657 = vmatpush1.bf16.msra.mxu0 %v3315
        %4658 = vmatprep.subr.bf16.mxu0 %v3376
        %4659 = vmatpush2.bf16.msra.mxu0 %v3375
        %4660 = vmatprep.subr.bf16.mxu0 %v3372
        %4661 = vmatpush2.bf16.msra.mxu0 %v3371
        %4662 = vmatprep.subr.bf16.mxu0 %v3368
        %4663 = vmatpush2.bf16.msra.mxu0 %v3367
        %4664 = vmatprep.subr.bf16.mxu0 %v3364
        %4665 = vmatpush2.bf16.msra.mxu0 %v3363
        %4666 = vmatprep.subr.bf16.mxu0 %v3360
        %4667 = vmatpush2.bf16.msra.mxu0 %v3359
        %4668 = vmatprep.subr.bf16.mxu0 %v3356
        %4669 = vmatpush2.bf16.msra.mxu0 %v3355
        %4670 = vmatprep.subr.bf16.mxu0 %v3352
        %4671 = vmatpush2.bf16.msra.mxu0 %v3351
        %4672 = vmatprep.subr.bf16.mxu0 %v3348
        %4673 = vmatpush2.bf16.msra.mxu0 %v3347
        %4674 = vmatprep.mubr.bf16.mxu0 %v1646
        %4675 = vmatmul.mubr.bf16.gmra.mxu0 %v1644
        %v4676 = vpop.f32.mrf.mxu0
        %v4677 = vadd.f32 %v4636, %v4676
        %v4678 = vpop.f32.mrf.mxu0
        %v4679 = vadd.f32 %v4638, %v4678
        %v4680 = vpop.f32.mrf.mxu0
        %v4681 = vpop.f32.mrf.mxu0
        %4682 = vdwg.mxu0
        %4683 = vmatprep.subr.bf16.mxu0 %v3408
        %4684 = vmatpush1.bf16.msra.mxu0 %v3407
        %4685 = vmatprep.subr.bf16.mxu0 %v3404
        %4686 = vmatpush1.bf16.msra.mxu0 %v3403
        %4687 = vmatprep.subr.bf16.mxu0 %v3400
        %4688 = vmatpush1.bf16.msra.mxu0 %v3399
        %4689 = vmatprep.subr.bf16.mxu0 %v3396
        %4690 = vmatpush1.bf16.msra.mxu0 %v3395
        %4691 = vmatprep.subr.bf16.mxu0 %v3392
        %4692 = vmatpush1.bf16.msra.mxu0 %v3391
        %4693 = vmatprep.subr.bf16.mxu0 %v3388
        %4694 = vmatpush1.bf16.msra.mxu0 %v3387
        %4695 = vmatprep.subr.bf16.mxu0 %v3384
        %4696 = vmatpush1.bf16.msra.mxu0 %v3383
        %4697 = vmatprep.subr.bf16.mxu0 %v3380
        %4698 = vmatpush1.bf16.msra.mxu0 %v3379
        %4699 = vmatprep.subr.bf16.mxu0 %v3440
        %4700 = vmatpush2.bf16.msra.mxu0 %v3439
        %4701 = vmatprep.subr.bf16.mxu0 %v3436
        %4702 = vmatpush2.bf16.msra.mxu0 %v3435
        %4703 = vmatprep.subr.bf16.mxu0 %v3432
        %4704 = vmatpush2.bf16.msra.mxu0 %v3431
        %4705 = vmatprep.subr.bf16.mxu0 %v3428
        %4706 = vmatpush2.bf16.msra.mxu0 %v3427
        %4707 = vmatprep.subr.bf16.mxu0 %v3424
        %4708 = vmatpush2.bf16.msra.mxu0 %v3423
        %4709 = vmatprep.subr.bf16.mxu0 %v3420
        %4710 = vmatpush2.bf16.msra.mxu0 %v3419
        %4711 = vmatprep.subr.bf16.mxu0 %v3416
        %4712 = vmatpush2.bf16.msra.mxu0 %v3415
        %4713 = vmatprep.subr.bf16.mxu0 %v3412
        %4714 = vmatpush2.bf16.msra.mxu0 %v3411
        %4715 = vmatprep.mubr.bf16.mxu0 %v1643
        %4716 = vmatmul.mubr.bf16.gmra.mxu0 %v1629
        %v4717 = vpop.f32.mrf.mxu0
        %v4718 = vadd.f32 %v4677, %v4717
        %v4719 = vpop.f32.mrf.mxu0
        %v4720 = vadd.f32 %v4679, %v4719
        %v4721 = vpop.f32.mrf.mxu0
        %v4722 = vpop.f32.mrf.mxu0
        %4723 = vdwg.mxu0
        %4724 = vmatprep.subr.bf16.mxu0 %v3472
        %4725 = vmatpush1.bf16.msra.mxu0 %v3471
        %4726 = vmatprep.subr.bf16.mxu0 %v3468
        %4727 = vmatpush1.bf16.msra.mxu0 %v3467
        %4728 = vmatprep.subr.bf16.mxu0 %v3464
        %4729 = vmatpush1.bf16.msra.mxu0 %v3463
        %4730 = vmatprep.subr.bf16.mxu0 %v3460
        %4731 = vmatpush1.bf16.msra.mxu0 %v3459
        %4732 = vmatprep.subr.bf16.mxu0 %v3456
        %4733 = vmatpush1.bf16.msra.mxu0 %v3455
        %4734 = vmatprep.subr.bf16.mxu0 %v3452
        %4735 = vmatpush1.bf16.msra.mxu0 %v3451
        %4736 = vmatprep.subr.bf16.mxu0 %v3448
        %4737 = vmatpush1.bf16.msra.mxu0 %v3447
        %4738 = vmatprep.subr.bf16.mxu0 %v3444
        %4739 = vmatpush1.bf16.msra.mxu0 %v3443
        %4740 = vmatprep.subr.bf16.mxu0 %v3504
        %4741 = vmatpush2.bf16.msra.mxu0 %v3503
        %4742 = vmatprep.subr.bf16.mxu0 %v3500
        %4743 = vmatpush2.bf16.msra.mxu0 %v3499
        %4744 = vmatprep.subr.bf16.mxu0 %v3496
        %4745 = vmatpush2.bf16.msra.mxu0 %v3495
        %4746 = vmatprep.subr.bf16.mxu0 %v3492
        %4747 = vmatpush2.bf16.msra.mxu0 %v3491
        %4748 = vmatprep.subr.bf16.mxu0 %v3488
        %4749 = vmatpush2.bf16.msra.mxu0 %v3487
        %4750 = vmatprep.subr.bf16.mxu0 %v3484
        %4751 = vmatpush2.bf16.msra.mxu0 %v3483
        %4752 = vmatprep.subr.bf16.mxu0 %v3480
        %4753 = vmatpush2.bf16.msra.mxu0 %v3479
        %4754 = vmatprep.subr.bf16.mxu0 %v3476
        %4755 = vmatpush2.bf16.msra.mxu0 %v3475
        %4756 = vmatprep.mubr.bf16.mxu0 %v1647
        %4757 = vmatmul.mubr.bf16.gmra.mxu0 %v1645
        %v4758 = vpop.f32.mrf.mxu0
        %v4759 = vadd.f32 %v4718, %v4758
        %v4760 = vpop.f32.mrf.mxu0
        %v4761 = vadd.f32 %v4720, %v4760
        %v4762 = vpop.f32.mrf.mxu0
        %v4763 = vpop.f32.mrf.mxu0
        %4764 = vdwg.mxu0
        %4765 = vmatprep.subr.bf16.mxu0 %v3536
        %4766 = vmatpush1.bf16.msra.mxu0 %v3535
        %4767 = vmatprep.subr.bf16.mxu0 %v3532
        %4768 = vmatpush1.bf16.msra.mxu0 %v3531
        %4769 = vmatprep.subr.bf16.mxu0 %v3528
        %4770 = vmatpush1.bf16.msra.mxu0 %v3527
        %4771 = vmatprep.subr.bf16.mxu0 %v3524
        %4772 = vmatpush1.bf16.msra.mxu0 %v3523
        %4773 = vmatprep.subr.bf16.mxu0 %v3520
        %4774 = vmatpush1.bf16.msra.mxu0 %v3519
        %4775 = vmatprep.subr.bf16.mxu0 %v3516
        %4776 = vmatpush1.bf16.msra.mxu0 %v3515
        %4777 = vmatprep.subr.bf16.mxu0 %v3512
        %4778 = vmatpush1.bf16.msra.mxu0 %v3511
        %4779 = vmatprep.subr.bf16.mxu0 %v3508
        %4780 = vmatpush1.bf16.msra.mxu0 %v3507
        %4781 = vmatprep.subr.bf16.mxu0 %v3568
        %4782 = vmatpush2.bf16.msra.mxu0 %v3567
        %4783 = vmatprep.subr.bf16.mxu0 %v3564
        %4784 = vmatpush2.bf16.msra.mxu0 %v3563
        %4785 = vmatprep.subr.bf16.mxu0 %v3560
        %4786 = vmatpush2.bf16.msra.mxu0 %v3559
        %4787 = vmatprep.subr.bf16.mxu0 %v3556
        %4788 = vmatpush2.bf16.msra.mxu0 %v3555
        %4789 = vmatprep.subr.bf16.mxu0 %v3552
        %4790 = vmatpush2.bf16.msra.mxu0 %v3551
        %4791 = vmatprep.subr.bf16.mxu0 %v3548
        %4792 = vmatpush2.bf16.msra.mxu0 %v3547
        %4793 = vmatprep.subr.bf16.mxu0 %v3544
        %4794 = vmatpush2.bf16.msra.mxu0 %v3543
        %4795 = vmatprep.subr.bf16.mxu0 %v3540
        %4796 = vmatpush2.bf16.msra.mxu0 %v3539
        %4797 = vmatprep.mubr.bf16.mxu0 %v1685
        %4798 = vmatmul.mubr.bf16.gmra.mxu0 %v1671
        %v4799 = vpop.f32.mrf.mxu0
        %v4800 = vadd.f32 %v4759, %v4799
        %v4801 = vpop.f32.mrf.mxu0
        %v4802 = vadd.f32 %v4761, %v4801
        %v4803 = vpop.f32.mrf.mxu0
        %v4804 = vpop.f32.mrf.mxu0
        %4805 = vdwg.mxu0
        %4806 = vmatprep.subr.bf16.mxu0 %v3600
        %4807 = vmatpush1.bf16.msra.mxu0 %v3599
        %4808 = vmatprep.subr.bf16.mxu0 %v3596
        %4809 = vmatpush1.bf16.msra.mxu0 %v3595
        %4810 = vmatprep.subr.bf16.mxu0 %v3592
        %4811 = vmatpush1.bf16.msra.mxu0 %v3591
        %4812 = vmatprep.subr.bf16.mxu0 %v3588
        %4813 = vmatpush1.bf16.msra.mxu0 %v3587
        %4814 = vmatprep.subr.bf16.mxu0 %v3584
        %4815 = vmatpush1.bf16.msra.mxu0 %v3583
        %4816 = vmatprep.subr.bf16.mxu0 %v3580
        %4817 = vmatpush1.bf16.msra.mxu0 %v3579
        %4818 = vmatprep.subr.bf16.mxu0 %v3576
        %4819 = vmatpush1.bf16.msra.mxu0 %v3575
        %4820 = vmatprep.subr.bf16.mxu0 %v3572
        %4821 = vmatpush1.bf16.msra.mxu0 %v3571
        %4822 = vmatprep.subr.bf16.mxu0 %v3632
        %4823 = vmatpush2.bf16.msra.mxu0 %v3631
        %4824 = vmatprep.subr.bf16.mxu0 %v3628
        %4825 = vmatpush2.bf16.msra.mxu0 %v3627
        %4826 = vmatprep.subr.bf16.mxu0 %v3624
        %4827 = vmatpush2.bf16.msra.mxu0 %v3623
        %4828 = vmatprep.subr.bf16.mxu0 %v3620
        %4829 = vmatpush2.bf16.msra.mxu0 %v3619
        %4830 = vmatprep.subr.bf16.mxu0 %v3616
        %4831 = vmatpush2.bf16.msra.mxu0 %v3615
        %4832 = vmatprep.subr.bf16.mxu0 %v3612
        %4833 = vmatpush2.bf16.msra.mxu0 %v3611
        %4834 = vmatprep.subr.bf16.mxu0 %v3608
        %4835 = vmatpush2.bf16.msra.mxu0 %v3607
        %4836 = vmatprep.subr.bf16.mxu0 %v3604
        %4837 = vmatpush2.bf16.msra.mxu0 %v3603
        %4838 = vmatprep.mubr.bf16.mxu0 %v1695
        %4839 = vmatmul.mubr.bf16.gmra.mxu0 %v1693
        %v4840 = vpop.f32.mrf.mxu0
        %v4841 = vadd.f32 %v4800, %v4840
        %v4842 = vpop.f32.mrf.mxu0
        %v4843 = vadd.f32 %v4802, %v4842
        %v4844 = vpop.f32.mrf.mxu0
        %v4845 = vpop.f32.mrf.mxu0
        %4846 = vdwg.mxu0
        %4847 = vmatprep.subr.bf16.mxu0 %v3664
        %4848 = vmatpush1.bf16.msra.mxu0 %v3663
        %4849 = vmatprep.subr.bf16.mxu0 %v3660
        %4850 = vmatpush1.bf16.msra.mxu0 %v3659
        %4851 = vmatprep.subr.bf16.mxu0 %v3656
        %4852 = vmatpush1.bf16.msra.mxu0 %v3655
        %4853 = vmatprep.subr.bf16.mxu0 %v3652
        %4854 = vmatpush1.bf16.msra.mxu0 %v3651
        %4855 = vmatprep.subr.bf16.mxu0 %v3648
        %4856 = vmatpush1.bf16.msra.mxu0 %v3647
        %4857 = vmatprep.subr.bf16.mxu0 %v3644
        %4858 = vmatpush1.bf16.msra.mxu0 %v3643
        %4859 = vmatprep.subr.bf16.mxu0 %v3640
        %4860 = vmatpush1.bf16.msra.mxu0 %v3639
        %4861 = vmatprep.subr.bf16.mxu0 %v3636
        %4862 = vmatpush1.bf16.msra.mxu0 %v3635
        %4863 = vmatprep.subr.bf16.mxu0 %v3696
        %4864 = vmatpush2.bf16.msra.mxu0 %v3695
        %4865 = vmatprep.subr.bf16.mxu0 %v3692
        %4866 = vmatpush2.bf16.msra.mxu0 %v3691
        %4867 = vmatprep.subr.bf16.mxu0 %v3688
        %4868 = vmatpush2.bf16.msra.mxu0 %v3687
        %4869 = vmatprep.subr.bf16.mxu0 %v3684
        %4870 = vmatpush2.bf16.msra.mxu0 %v3683
        %4871 = vmatprep.subr.bf16.mxu0 %v3680
        %4872 = vmatpush2.bf16.msra.mxu0 %v3679
        %4873 = vmatprep.subr.bf16.mxu0 %v3676
        %4874 = vmatpush2.bf16.msra.mxu0 %v3675
        %4875 = vmatprep.subr.bf16.mxu0 %v3672
        %4876 = vmatpush2.bf16.msra.mxu0 %v3671
        %4877 = vmatprep.subr.bf16.mxu0 %v3668
        %4878 = vmatpush2.bf16.msra.mxu0 %v3667
        %4879 = vmatprep.mubr.bf16.mxu0 %v1692
        %4880 = vmatmul.mubr.bf16.gmra.mxu0 %v1678
        %v4881 = vpop.f32.mrf.mxu0
        %v4882 = vadd.f32 %v4841, %v4881
        %v4883 = vpop.f32.mrf.mxu0
        %v4884 = vadd.f32 %v4843, %v4883
        %v4885 = vpop.f32.mrf.mxu0
        %v4886 = vpop.f32.mrf.mxu0
        %4887 = vdwg.mxu0
        %4888 = vmatprep.subr.bf16.mxu0 %v3728
        %4889 = vmatpush1.bf16.msra.mxu0 %v3727
        %4890 = vmatprep.subr.bf16.mxu0 %v3724
        %4891 = vmatpush1.bf16.msra.mxu0 %v3723
        %4892 = vmatprep.subr.bf16.mxu0 %v3720
        %4893 = vmatpush1.bf16.msra.mxu0 %v3719
        %4894 = vmatprep.subr.bf16.mxu0 %v3716
        %4895 = vmatpush1.bf16.msra.mxu0 %v3715
        %4896 = vmatprep.subr.bf16.mxu0 %v3712
        %4897 = vmatpush1.bf16.msra.mxu0 %v3711
        %4898 = vmatprep.subr.bf16.mxu0 %v3708
        %4899 = vmatpush1.bf16.msra.mxu0 %v3707
        %4900 = vmatprep.subr.bf16.mxu0 %v3704
        %4901 = vmatpush1.bf16.msra.mxu0 %v3703
        %4902 = vmatprep.subr.bf16.mxu0 %v3700
        %4903 = vmatpush1.bf16.msra.mxu0 %v3699
        %4904 = vmatprep.subr.bf16.mxu0 %v3760
        %4905 = vmatpush2.bf16.msra.mxu0 %v3759
        %4906 = vmatprep.subr.bf16.mxu0 %v3756
        %4907 = vmatpush2.bf16.msra.mxu0 %v3755
        %4908 = vmatprep.subr.bf16.mxu0 %v3752
        %4909 = vmatpush2.bf16.msra.mxu0 %v3751
        %4910 = vmatprep.subr.bf16.mxu0 %v3748
        %4911 = vmatpush2.bf16.msra.mxu0 %v3747
        %4912 = vmatprep.subr.bf16.mxu0 %v3744
        %4913 = vmatpush2.bf16.msra.mxu0 %v3743
        %4914 = vmatprep.subr.bf16.mxu0 %v3740
        %4915 = vmatpush2.bf16.msra.mxu0 %v3739
        %4916 = vmatprep.subr.bf16.mxu0 %v3736
        %4917 = vmatpush2.bf16.msra.mxu0 %v3735
        %4918 = vmatprep.subr.bf16.mxu0 %v3732
        %4919 = vmatpush2.bf16.msra.mxu0 %v3731
        %4920 = vmatprep.mubr.bf16.mxu0 %v1696
        %4921 = vmatmul.mubr.bf16.gmra.mxu0 %v1694
        %v4922 = vpop.f32.mrf.mxu0
        %v4923 = vadd.f32 %v4882, %v4922
        %v4924 = vpop.f32.mrf.mxu0
        %v4925 = vadd.f32 %v4884, %v4924
        %v4926 = vpop.f32.mrf.mxu0
        %v4927 = vpop.f32.mrf.mxu0
        %4928 = vdwg.mxu0
        %v4929 = vmax.f32 %v4595, 0.0
        %v4930 = vmax.f32 %v4597, 0.0
        %v4931 = vmax.f32 %v4923, 0.0
        %v4932 = vmax.f32 %v4925, 0.0
        %v4933 = vld [vmem:[#allocation12] sm:$0x3]
        %v4934 = vpack.c.bf16 %v4929, %v4929
        %v4935 = vpack.c.bf16 %v4930, %v4930
        %v4936 = vpack.c.bf16 %v4931, %v4931
        %v4937 = vpack.c.bf16 %v4932, %v4932
        %v4938 = vld [vmem:[%s377] sm:$0xf]
        %v4939 = vld [vmem:[%s377 + $0x4] sm:$0xf]
        %v4940 = vld [vmem:[%s377 + $0x8] sm:$0xf]
        %v4941 = vld [vmem:[%s377 + $0xc] sm:$0xf]
        %v4942 = vld [vmem:[%s377 + $0x10] sm:$0xf]
        %v4943 = vld [vmem:[%s377 + $0x14] sm:$0xf]
        %v4944 = vld [vmem:[%s377 + $0x18] sm:$0xf]
        %v4945 = vld [vmem:[%s377 + $0x1c] sm:$0xf]
        %v4946 = vld [vmem:[%s377 + $0x20] sm:$0xf]
        %v4947 = vld [vmem:[%s377 + $0x24] sm:$0xf]
        %v4948 = vld [vmem:[%s377 + $0x28] sm:$0xf]
        %v4949 = vld [vmem:[%s377 + $0x2c] sm:$0xf]
        %v4950 = vld [vmem:[%s377 + $0x30] sm:$0xf]
        %v4951 = vld [vmem:[%s377 + $0x34] sm:$0xf]
        %v4952 = vld [vmem:[%s377 + $0x38] sm:$0xf]
        %v4953 = vld [vmem:[%s377 + $0x3c] sm:$0xf]
        %v4954 = vld [vmem:[%s377 + $0x40] sm:$0xf]
        %v4955 = vld [vmem:[%s377 + $0x44] sm:$0xf]
        %v4956 = vld [vmem:[%s377 + $0x48] sm:$0xf]
        %v4957 = vld [vmem:[%s377 + $0x4c] sm:$0xf]
        %v4958 = vld [vmem:[%s377 + $0x50] sm:$0xf]
        %v4959 = vld [vmem:[%s377 + $0x54] sm:$0xf]
        %v4960 = vld [vmem:[%s377 + $0x58] sm:$0xf]
        %v4961 = vld [vmem:[%s377 + $0x5c] sm:$0xf]
        %v4962 = vld [vmem:[%s377 + $0x60] sm:$0xf]
        %v4963 = vld [vmem:[%s377 + $0x64] sm:$0xf]
        %v4964 = vld [vmem:[%s377 + $0x68] sm:$0xf]
        %v4965 = vld [vmem:[%s377 + $0x6c] sm:$0xf]
        %v4966 = vld [vmem:[%s377 + $0x70] sm:$0xf]
        %v4967 = vld [vmem:[%s377 + $0x74] sm:$0xf]
        %v4968 = vld [vmem:[%s377 + $0x78] sm:$0xf]
        %v4969 = vld [vmem:[%s377 + $0x7c] sm:$0xf]
        %v4970 = vld [vmem:[%s377 + $0x80] sm:$0xf]
        %v4971 = vld [vmem:[%s377 + $0x84] sm:$0xf]
        %v4972 = vld [vmem:[%s377 + $0x88] sm:$0xf]
        %v4973 = vld [vmem:[%s377 + $0x8c] sm:$0xf]
        %v4974 = vld [vmem:[%s377 + $0x90] sm:$0xf]
        %v4975 = vld [vmem:[%s377 + $0x94] sm:$0xf]
        %v4976 = vld [vmem:[%s377 + $0x98] sm:$0xf]
        %v4977 = vld [vmem:[%s377 + $0x9c] sm:$0xf]
        %v4978 = vld [vmem:[%s377 + $0xa0] sm:$0xf]
        %v4979 = vld [vmem:[%s377 + $0xa4] sm:$0xf]
        %v4980 = vld [vmem:[%s377 + $0xa8] sm:$0xf]
        %v4981 = vld [vmem:[%s377 + $0xac] sm:$0xf]
        %v4982 = vld [vmem:[%s377 + $0xb0] sm:$0xf]
        %v4983 = vld [vmem:[%s377 + $0xb4] sm:$0xf]
        %v4984 = vld [vmem:[%s377 + $0xb8] sm:$0xf]
        %v4985 = vld [vmem:[%s377 + $0xbc] sm:$0xf]
        %v4986 = vld [vmem:[%s377 + $0xc0] sm:$0xf]
        %v4987 = vld [vmem:[%s377 + $0xc4] sm:$0xf]
        %v4988 = vld [vmem:[%s377 + $0xc8] sm:$0xf]
        %v4989 = vld [vmem:[%s377 + $0xcc] sm:$0xf]
        %v4990 = vld [vmem:[%s377 + $0xd0] sm:$0xf]
        %v4991 = vld [vmem:[%s377 + $0xd4] sm:$0xf]
        %v4992 = vld [vmem:[%s377 + $0xd8] sm:$0xf]
        %v4993 = vld [vmem:[%s377 + $0xdc] sm:$0xf]
        %v4994 = vld [vmem:[%s377 + $0xe0] sm:$0xf]
        %v4995 = vld [vmem:[%s377 + $0xe4] sm:$0xf]
        %v4996 = vld [vmem:[%s377 + $0xe8] sm:$0xf]
        %v4997 = vld [vmem:[%s377 + $0xec] sm:$0xf]
        %v4998 = vld [vmem:[%s377 + $0xf0] sm:$0xf]
        %v4999 = vld [vmem:[%s377 + $0xf4] sm:$0xf]
        %v5000 = vld [vmem:[%s377 + $0xf8] sm:$0xf]
        %v5001 = vld [vmem:[%s377 + $0xfc] sm:$0xf]
        %v5066 = vunpack.c.l.b16 %v4938
        %v5067 = vunpack.c.l.b16 %v4939
        %v5068 = vunpack.c.l.b16 %v4940
        %v5069 = vunpack.c.l.b16 %v4941
        %v5070 = vunpack.c.l.b16 %v4942
        %v5071 = vunpack.c.l.b16 %v4943
        %v5072 = vunpack.c.l.b16 %v4944
        %v5073 = vunpack.c.l.b16 %v4945
        %v5074 = vunpack.c.l.b16 %v4946
        %v5075 = vunpack.c.l.b16 %v4947
        %v5076 = vunpack.c.l.b16 %v4948
        %v5077 = vunpack.c.l.b16 %v4949
        %v5078 = vunpack.c.l.b16 %v4950
        %v5079 = vunpack.c.l.b16 %v4951
        %v5080 = vunpack.c.l.b16 %v4952
        %v5081 = vunpack.c.l.b16 %v4953
        %v5082 = vunpack.c.l.b16 %v4954
        %v5083 = vunpack.c.l.b16 %v4955
        %v5084 = vunpack.c.l.b16 %v4956
        %v5085 = vunpack.c.l.b16 %v4957
        %v5086 = vunpack.c.l.b16 %v4958
        %v5087 = vunpack.c.l.b16 %v4959
        %v5088 = vunpack.c.l.b16 %v4960
        %v5089 = vunpack.c.l.b16 %v4961
        %v5090 = vunpack.c.l.b16 %v4962
        %v5091 = vunpack.c.l.b16 %v4963
        %v5092 = vunpack.c.l.b16 %v4964
        %v5093 = vunpack.c.l.b16 %v4965
        %v5094 = vunpack.c.l.b16 %v4966
        %v5095 = vunpack.c.l.b16 %v4967
        %v5096 = vunpack.c.l.b16 %v4968
        %v5097 = vunpack.c.l.b16 %v4969
        %v5098 = vunpack.c.l.b16 %v4970
        %v5099 = vunpack.c.l.b16 %v4971
        %v5100 = vunpack.c.l.b16 %v4972
        %v5101 = vunpack.c.l.b16 %v4973
        %v5102 = vunpack.c.l.b16 %v4974
        %v5103 = vunpack.c.l.b16 %v4975
        %v5104 = vunpack.c.l.b16 %v4976
        %v5105 = vunpack.c.l.b16 %v4977
        %v5106 = vunpack.c.l.b16 %v4978
        %v5107 = vunpack.c.l.b16 %v4979
        %v5108 = vunpack.c.l.b16 %v4980
        %v5109 = vunpack.c.l.b16 %v4981
        %v5110 = vunpack.c.l.b16 %v4982
        %v5111 = vunpack.c.l.b16 %v4983
        %v5112 = vunpack.c.l.b16 %v4984
        %v5113 = vunpack.c.l.b16 %v4985
        %v5114 = vunpack.c.l.b16 %v4986
        %v5115 = vunpack.c.l.b16 %v4987
        %v5116 = vunpack.c.l.b16 %v4988
        %v5117 = vunpack.c.l.b16 %v4989
        %v5118 = vunpack.c.l.b16 %v4990
        %v5119 = vunpack.c.l.b16 %v4991
        %v5120 = vunpack.c.l.b16 %v4992
        %v5121 = vunpack.c.l.b16 %v4993
        %v5122 = vunpack.c.l.b16 %v4994
        %v5123 = vunpack.c.l.b16 %v4995
        %v5124 = vunpack.c.l.b16 %v4996
        %v5125 = vunpack.c.l.b16 %v4997
        %v5126 = vunpack.c.l.b16 %v4998
        %v5127 = vunpack.c.l.b16 %v4999
        %v5128 = vunpack.c.l.b16 %v5000
        %v5129 = vunpack.c.l.b16 %v5001
        %v5130 = vpack.c.b16 %v5067, %v5066
        %v5131 = vpack.c.b16 %v5069, %v5068
        %v5132 = vpack.c.b16 %v5071, %v5070
        %v5133 = vpack.c.b16 %v5073, %v5072
        %v5134 = vpack.c.b16 %v5075, %v5074
        %v5135 = vpack.c.b16 %v5077, %v5076
        %v5136 = vpack.c.b16 %v5079, %v5078
        %v5137 = vpack.c.b16 %v5081, %v5080
        %v5138 = vpack.c.b16 %v5083, %v5082
        %v5139 = vpack.c.b16 %v5085, %v5084
        %v5140 = vpack.c.b16 %v5087, %v5086
        %v5141 = vpack.c.b16 %v5089, %v5088
        %v5142 = vpack.c.b16 %v5091, %v5090
        %v5143 = vpack.c.b16 %v5093, %v5092
        %v5144 = vpack.c.b16 %v5095, %v5094
        %v5145 = vpack.c.b16 %v5097, %v5096
        %v5146 = vpack.c.b16 %v5099, %v5098
        %v5147 = vpack.c.b16 %v5101, %v5100
        %v5148 = vpack.c.b16 %v5103, %v5102
        %v5149 = vpack.c.b16 %v5105, %v5104
        %v5150 = vpack.c.b16 %v5107, %v5106
        %v5151 = vpack.c.b16 %v5109, %v5108
        %v5152 = vpack.c.b16 %v5111, %v5110
        %v5153 = vpack.c.b16 %v5113, %v5112
        %v5154 = vpack.c.b16 %v5115, %v5114
        %v5155 = vpack.c.b16 %v5117, %v5116
        %v5156 = vpack.c.b16 %v5119, %v5118
        %v5157 = vpack.c.b16 %v5121, %v5120
        %v5158 = vpack.c.b16 %v5123, %v5122
        %v5159 = vpack.c.b16 %v5125, %v5124
        %v5160 = vpack.c.b16 %v5127, %v5126
        %v5161 = vpack.c.b16 %v5129, %v5128
        %5194 = vmatprep.subr.bf16.mxu0 0
        %5195 = vmatpush1.bf16.msra.mxu0 %v5137
        %5196 = vmatprep.subr.bf16.mxu0 0
        %5197 = vmatpush1.bf16.msra.mxu0 %v5136
        %5198 = vmatprep.subr.bf16.mxu0 0
        %5199 = vmatpush1.bf16.msra.mxu0 %v5135
        %5200 = vmatprep.subr.bf16.mxu0 0
        %5201 = vmatpush1.bf16.msra.mxu0 %v5134
        %5202 = vmatprep.subr.bf16.mxu0 0
        %5203 = vmatpush1.bf16.msra.mxu0 %v5133
        %5204 = vmatprep.subr.bf16.mxu0 0
        %5205 = vmatpush1.bf16.msra.mxu0 %v5132
        %5206 = vmatprep.subr.bf16.mxu0 0
        %5207 = vmatpush1.bf16.msra.mxu0 %v5131
        %5208 = vmatprep.subr.bf16.mxu0 0
        %5209 = vmatpush1.bf16.msra.mxu0 %v5130
        %5210 = vmatprep.subr.bf16.mxu0 0
        %5211 = vmatpush2.bf16.msra.mxu0 %v5145
        %5212 = vmatprep.subr.bf16.mxu0 0
        %5213 = vmatpush2.bf16.msra.mxu0 %v5144
        %5214 = vmatprep.subr.bf16.mxu0 0
        %5215 = vmatpush2.bf16.msra.mxu0 %v5143
        %5216 = vmatprep.subr.bf16.mxu0 0
        %5217 = vmatpush2.bf16.msra.mxu0 %v5142
        %5218 = vmatprep.subr.bf16.mxu0 0
        %5219 = vmatpush2.bf16.msra.mxu0 %v5141
        %5220 = vmatprep.subr.bf16.mxu0 0
        %5221 = vmatpush2.bf16.msra.mxu0 %v5140
        %5222 = vmatprep.subr.bf16.mxu0 0
        %5223 = vmatpush2.bf16.msra.mxu0 %v5139
        %5224 = vmatprep.subr.bf16.mxu0 0
        %5225 = vmatpush2.bf16.msra.mxu0 %v5138
        %5226 = vmatprep.mubr.bf16.mxu0 %v4935
        %5227 = vmatmul.mubr.bf16.gmra.mxu0 %v4934
        %v5228 = vpop.f32.mrf.mxu0
        %v5229 = vadd.f32 0.0, %v5228
        %v5230 = vpop.f32.mrf.mxu0
        %v5231 = vpop.f32.mrf.mxu0
        %v5232 = vpop.f32.mrf.mxu0
        %5233 = vdwg.mxu0
        %5234 = vmatprep.subr.bf16.mxu0 0
        %5235 = vmatpush1.bf16.msra.mxu0 %v5153
        %5236 = vmatprep.subr.bf16.mxu0 0
        %5237 = vmatpush1.bf16.msra.mxu0 %v5152
        %5238 = vmatprep.subr.bf16.mxu0 0
        %5239 = vmatpush1.bf16.msra.mxu0 %v5151
        %5240 = vmatprep.subr.bf16.mxu0 0
        %5241 = vmatpush1.bf16.msra.mxu0 %v5150
        %5242 = vmatprep.subr.bf16.mxu0 0
        %5243 = vmatpush1.bf16.msra.mxu0 %v5149
        %5244 = vmatprep.subr.bf16.mxu0 0
        %5245 = vmatpush1.bf16.msra.mxu0 %v5148
        %5246 = vmatprep.subr.bf16.mxu0 0
        %5247 = vmatpush1.bf16.msra.mxu0 %v5147
        %5248 = vmatprep.subr.bf16.mxu0 0
        %5249 = vmatpush1.bf16.msra.mxu0 %v5146
        %5250 = vmatprep.subr.bf16.mxu0 0
        %5251 = vmatpush2.bf16.msra.mxu0 %v5161
        %5252 = vmatprep.subr.bf16.mxu0 0
        %5253 = vmatpush2.bf16.msra.mxu0 %v5160
        %5254 = vmatprep.subr.bf16.mxu0 0
        %5255 = vmatpush2.bf16.msra.mxu0 %v5159
        %5256 = vmatprep.subr.bf16.mxu0 0
        %5257 = vmatpush2.bf16.msra.mxu0 %v5158
        %5258 = vmatprep.subr.bf16.mxu0 0
        %5259 = vmatpush2.bf16.msra.mxu0 %v5157
        %5260 = vmatprep.subr.bf16.mxu0 0
        %5261 = vmatpush2.bf16.msra.mxu0 %v5156
        %5262 = vmatprep.subr.bf16.mxu0 0
        %5263 = vmatpush2.bf16.msra.mxu0 %v5155
        %5264 = vmatprep.subr.bf16.mxu0 0
        %5265 = vmatpush2.bf16.msra.mxu0 %v5154
        %5266 = vmatprep.mubr.bf16.mxu0 %v4937
        %5267 = vmatmul.mubr.bf16.gmra.mxu0 %v4936
        %v5268 = vpop.f32.mrf.mxu0
        %v5269 = vadd.f32 %v5229, %v5268
        %v5270 = vpop.f32.mrf.mxu0
        %v5271 = vpop.f32.mrf.mxu0
        %v5272 = vpop.f32.mrf.mxu0
        %5273 = vdwg.mxu0
        %v5274 = vadd.f32 %v4933, %v5269
        %5275 = vst [vmem:[#allocation12] sm:$0x3] %v5274
        // Predicated region
        $region81: #{inception_aux_forward.1} parent=51 // pred_check
          %p5276 = pneg %p218
        $region82: #{inception_aux_forward.1} parent=51 // pred_check_branch
          %5278 = sbr.rel (%p5276) target = $region84
        $region83: #{inception_aux_forward.1} parent=51 // pred_region
          %s5280 = ssub.s32 32, 32
          %5281 = vsyncadd [#allocation5], %s5280
          %s5283 = sshll.u32 [#allocation12], 4
          %s5284 = int_to_ptr.vmem [resolvable:$true] %s5283
          %5286 = dma.vmem_to_hbm [thread:$0]  %s5284, 32, %s8, [#allocation5]
        $region84: #{inception_aux_forward.1} parent=51 // pred_fallthru
          _
        // Predicated region
        $region85: #{inception_aux_forward.1} parent=51 // pred_check
          %p5287 = pneg %p218
        $region86: #{inception_aux_forward.1} parent=51 // pred_check_branch
          %5289 = sbr.rel (%p5287) target = $region88
        $region87: #{inception_aux_forward.1} parent=51 // pred_region
          %5290 = dma.done [#allocation5], 32
        $region88: #{inception_aux_forward.1} parent=51 // pred_fallthru
          _
      $region52: #{inception_aux_forward.1} parent=5 // pred_fallthru
        _
      %p5291 = scmp.le.s32.totalorder 2, %s17
      // Predicated region
      $region89: #{inception_aux_forward.1} parent=5 // pred_check
        %p5292 = pneg %p5291
      $region90: #{inception_aux_forward.1} parent=5 // pred_check_branch
        %5294 = sbr.rel (%p5292) target = $region92
      $region91: #{inception_aux_forward.1} parent=5 // pred_region
        %s5295 = ssub.s32 %s17, 2
      $region92: #{inception_aux_forward.1} parent=5 // pred_fallthru
        _
    $region6: #{inception_aux_forward.1} parent=1 // loop_footer
      %s21 = sadd.s32 1, %s17
    $region7: #{inception_aux_forward.1} parent=1 // loop_footer_branch
      %16 = sbr.rel target = $region3
    $region8: #{inception_aux_forward.1} parent=1 // loop_exit
      _
    %5296 = vsyncpa [#allocation4], 1
    %s5297 = scalar_lea.sflag [#allocation4], 1
    %5298 = vsyncpa %s5297, 1
    %5299 = vsyncpa [#allocation7], 1
    %5300 = vsyncpa [#allocation5], 1
    %s5301 = scalar_lea.sflag [#allocation5], 1
    %5302 = vsyncpa %s5301, 1

</llo_original>
